<compile_context>
chip_gen: v7x
topology: tpu7x:2x2x1
jax: 0.10.0
libtpu: 0.0.40
codegen_flags: <defaults>
</compile_context>

<pallas_src>
import functools

import jax
import jax.numpy as jnp
from jax.experimental import pallas as pl
from jax.experimental.pallas import tpu as pltpu


_LANES = 128  # lane width; m/l scratch is kept lane-replicated at this width


def _pick_tile(dim, target, align):
    """Largest tile <= target that divides `dim` and is a multiple of `align`.

    Falls back to the full dimension (always a legal block size)."""
    if dim <= target:
        return dim
    t = (target // align) * align
    while t >= align:
        if dim % t == 0:
            return t
        t -= align
    return dim


# ------------------------------ tiled GEMM --------------------------------- #

def _linear_kernel(x_ref, w_ref, b_ref, o_ref, acc_ref):
    # y = x @ W + b, K-tiled with an f32 accumulator held in VMEM scratch.
    @pl.when(pl.program_id(2) == 0)
    def _():
        acc_ref[...] = jnp.zeros_like(acc_ref)

    acc_ref[...] += jnp.dot(
        x_ref[...], w_ref[...], preferred_element_type=jnp.float32
    )

    @pl.when(pl.program_id(2) == pl.num_programs(2) - 1)
    def _():
        o_ref[...] = (acc_ref[...] + b_ref[...].astype(jnp.float32)).astype(o_ref.dtype)


def pallas_linear(x, w, b, *, tm=512, tn=512, tk=1024):
    """y = x @ W + b   (W stored [in, out], equivalent to torch Linear x @ W.T + b)."""
    m, kdim = x.shape
    n = w.shape[1]
    tm = _pick_tile(m, tm, 128)
    tn = _pick_tile(n, tn, 128)
    tk = _pick_tile(kdim, tk, 128)

    return pl.pallas_call(
        _linear_kernel,
        out_shape=jax.ShapeDtypeStruct((m, n), x.dtype),
        grid_spec=pltpu.PrefetchScalarGridSpec(
            num_scalar_prefetch=0,
            grid=(m // tm, n // tn, kdim // tk),
            in_specs=[
                pl.BlockSpec((tm, tk), lambda i, j, k: (i, k)),
                pl.BlockSpec((tk, tn), lambda i, j, k: (k, j)),
                pl.BlockSpec((1, tn), lambda i, j, k: (0, j)),
            ],
            out_specs=pl.BlockSpec((tm, tn), lambda i, j, k: (i, j)),
            scratch_shapes=[pltpu.VMEM((tm, tn), jnp.float32)],
        ),
        compiler_params=pltpu.CompilerParams(
            dimension_semantics=("parallel", "parallel", "arbitrary")
        ),
    )(x, w, b.reshape(1, n))


# ----------------------- flash MQA attention (prefill) --------------------- #

def _mqa_flash_kernel(q_ref, k_ref, v_ref, segq_ref, segk_ref, o_ref,
                      qs_sc, m_sc, l_sc, acc_sc,
                      *, scale, num_heads, head_size, tq, tk):
    # q_ref:    (tq, nh*hd)  all heads' queries (lane-dense slice of qkv slab)
    # k_ref:    (tk, hd)     shared MQA key tile
    # v_ref:    (tk, hd)     shared MQA value tile
    # segq_ref: (tq, 1) / segk_ref: (1, tk)  int32 sequence ids (varlen mask)
    # o_ref:    (tq, nh*hd)  lane-dense output slab
    # scratch:  qs_sc (tq, nh*hd) scaled Q; m_sc/l_sc (nh, tq, 128) f32;
    #           acc_sc (tq, nh*hd) f32
    qi = pl.program_id(0)
    ki = pl.program_id(1)
    q_start = qi * tq
    k_start = ki * tk
    hd = head_size

    @pl.when(ki == 0)
    def _():
        # Scale Q once per Q tile (f32 multiply, cast back to MXU input dtype).
        qs_sc[...] = (q_ref[...].astype(jnp.float32) * scale).astype(qs_sc.dtype)
        m_sc[...] = jnp.full_like(m_sc, -jnp.inf)
        l_sc[...] = jnp.zeros_like(l_sc)
        acc_sc[...] = jnp.zeros_like(acc_sc)

    # Skip KV tiles entirely in the causal future of this Q tile.  Their K/V DMA
    # is also elided because the K/V index_map is clamped to the last needed tile.
    @pl.when(k_start <= q_start + (tq - 1))
    def _():
        # Mask built once per grid step (shared by all heads) from narrow iotas.
        row = q_start + jax.lax.broadcasted_iota(jnp.int32, (tq, 1), 0)
        col = k_start + jax.lax.broadcasted_iota(jnp.int32, (1, tk), 1)
        mask = (segq_ref[...] == segk_ref[...]) & (row >= col)

        for h in range(num_heads):  # MQA: all heads reuse the resident K/V tile
            q_h = qs_sc[:, h * hd:(h + 1) * hd]                        # (tq, hd)
            s = jax.lax.dot_general(
                q_h, k_ref[...], (((1,), (1,)), ((), ())),
                preferred_element_type=jnp.float32)                    # (tq, tk)
            s = jnp.where(mask, s, -1e30)

            m_prev = m_sc[h]                                           # (tq, 128)
            l_prev = l_sc[h]
            m_next = jnp.maximum(m_prev, jnp.max(s, axis=-1, keepdims=True))
            alpha = jnp.exp(m_prev - m_next)                           # lane-replicated
            p = jnp.exp(s - m_next[:, :1])                             # (tq, tk)
            l_sc[h] = alpha * l_prev + jnp.sum(p, axis=-1, keepdims=True)
            m_sc[h] = m_next

            alpha_b = alpha if hd == _LANES else alpha[:, :1]
            acc_sc[:, h * hd:(h + 1) * hd] = (
                alpha_b * acc_sc[:, h * hd:(h + 1) * hd]
                + jnp.dot(p.astype(v_ref.dtype), v_ref[...],
                          preferred_element_type=jnp.float32))

    @pl.when(ki == pl.num_programs(1) - 1)
    def _():
        for h in range(num_heads):
            l = l_sc[h]
            inv = pl.reciprocal(jnp.where(l > 0.0, l, 1.0), approx=True)
            inv_b = inv if hd == _LANES else inv[:, :1]
            o_ref[:, h * hd:(h + 1) * hd] = (
                acc_sc[:, h * hd:(h + 1) * hd] * inv_b
            ).astype(o_ref.dtype)


def mqa_flash_attention(qkv, seg_row, seg_col, num_heads, head_size, scale,
                        *, tq=256, tk=256):
    """qkv: [T, nh*hd + 2*hd] fused projection; returns [T, nh*hd] attention output.

    Q lives at columns [0, nh*hd); K at block column nh; V at block column nh+1
    (block width hd).  All heads are processed inside one grid step.
    """
    t = qkv.shape[0]
    tq, tk = min(tq, t), min(tk, t)
    assert t % tq == 0 and t % tk == 0, "pad T to a multiple of the attention tile"

    nh, hd = num_heads, head_size

    def last_kv(qi):
        # Last KV tile index that this Q tile can causally attend to.
        return ((qi + 1) * tq - 1) // tk

    kernel = functools.partial(
        _mqa_flash_kernel, scale=scale, num_heads=nh, head_size=hd, tq=tq, tk=tk)

    return pl.pallas_call(
        kernel,
        out_shape=jax.ShapeDtypeStruct((t, nh * hd), qkv.dtype),
        grid_spec=pltpu.PrefetchScalarGridSpec(
            num_scalar_prefetch=0,
            grid=(t // tq, t // tk),
            in_specs=[
                # All heads' Q as one lane-dense block, resident across kv steps.
                pl.BlockSpec((tq, nh * hd), lambda qi, ki: (qi, 0)),
                # Shared MQA K/V; clamp past the causal boundary so skipped tiles
                # keep the previous block index (DMA elided).
                pl.BlockSpec((tk, hd),
                             lambda qi, ki: (jnp.minimum(ki, last_kv(qi)), nh)),
                pl.BlockSpec((tk, hd),
                             lambda qi, ki: (jnp.minimum(ki, last_kv(qi)), nh + 1)),
                pl.BlockSpec((tq, 1), lambda qi, ki: (qi, 0)),
                pl.BlockSpec((1, tk), lambda qi, ki: (0, ki)),
            ],
            out_specs=pl.BlockSpec((tq, nh * hd), lambda qi, ki: (qi, 0)),
            scratch_shapes=[
                pltpu.VMEM((tq, nh * hd), qkv.dtype),       # scaled Q (per Q tile)
                pltpu.VMEM((nh, tq, _LANES), jnp.float32),  # running max m (per head)
                pltpu.VMEM((nh, tq, _LANES), jnp.float32),  # running sum l (per head)
                pltpu.VMEM((tq, nh * hd), jnp.float32),     # output accumulator
            ],
        ),
        compiler_params=pltpu.CompilerParams(
            dimension_semantics=("parallel", "arbitrary")
        ),
    )(qkv, qkv, qkv, seg_row, seg_col)


# ----------------------------- Module wrapper ------------------------------ #

class FlashMQAttentionPallas:
    def __init__(self, num_heads, hidden_size, key, dtype=jnp.bfloat16):
        self.num_heads = num_heads
        self.hidden_size = hidden_size
        self.head_size = hidden_size // num_heads
        self.softmax_scale = self.head_size ** (-0.5)

        k1, k2, k3, k4 = jax.random.split(key, 4)
        qkv_out = hidden_size + 2 * self.head_size
        # Weights stored [in, out] (y = x @ W + b).
        self.c_attn_w = (0.02 * jax.random.normal(k1, (hidden_size, qkv_out), jnp.float32)).astype(dtype)
        self.c_attn_b = (0.02 * jax.random.normal(k2, (qkv_out,), jnp.float32)).astype(dtype)
        self.c_proj_w = (0.02 * jax.random.normal(k3, (hidden_size, hidden_size), jnp.float32)).astype(dtype)
        self.c_proj_b = (0.02 * jax.random.normal(k4, (hidden_size,), jnp.float32)).astype(dtype)

    def __call__(self, hidden_states, cu_seqlens, max_s, layer_past,
                 layer_past_present_indices, cu_seqlens_q):
        t = hidden_states.shape[0]
        nh, hd = self.num_heads, self.head_size

        # Pad the packed-token dim to a multiple of the attention tile.  Padded
        # rows get a sentinel segment id (past the last cu_seqlens boundary), so
        # no real token ever attends to them; outputs are sliced back to t.
        tile = 256
        t_pad = -(-t // tile) * tile
        if t_pad != t:
            hidden_states = jnp.pad(hidden_states, ((0, t_pad - t), (0, 0)))

        qkv = pallas_linear(hidden_states, self.c_attn_w, self.c_attn_b)

        if layer_past_present_indices is None:
            # Prefill: cache <- current KV (returned functionally), causal
            # block-diagonal (per-sequence) attention over the fused qkv slab.
            new_layer_past = qkv[:t, nh * hd:].reshape(t, 2, 1, hd)

            # Per-token sequence ids from cu_seqlens (varlen block-diagonal mask).
            seg = jnp.searchsorted(
                cu_seqlens[1:], jnp.arange(t_pad, dtype=cu_seqlens.dtype), side="right"
            ).astype(jnp.int32)
            seg_row = seg.reshape(t_pad, 1)
            seg_col = seg.reshape(1, t_pad)

            attn = mqa_flash_attention(
                qkv, seg_row, seg_col, nh, hd, self.softmax_scale, tq=tile, tk=tile
            )
        else:
            # TODO(synk): decode path (KV-cache scatter at layer_past_present_indices
            # + non-causal flash-decode over the cache with q_len=1) is not implemented.
            raise NotImplementedError("decode path not implemented")

        out = pallas_linear(attn, self.c_proj_w, self.c_proj_b)
        return out[:t], new_layer_past


# ---------------------------------- main ----------------------------------- #

if __name__ == "__main__":
    num_heads = 4
    hidden_size = 512                     # head_size = 128 (lane-aligned)
    head_size = hidden_size // num_heads

    seq_lens = [256, 256]                 # two packed varlen sequences -> T = 512
    total_tokens = sum(seq_lens)
    cu_seqlens = jnp.array([0, 256, 512], dtype=jnp.int32)
    max_s = max(seq_lens)

    key = jax.random.PRNGKey(0)
    k_params, k_x = jax.random.split(key)

    module = FlashMQAttentionPallas(num_heads, hidden_size, k_params, dtype=jnp.bfloat16)

    hidden_states = jax.random.normal(
        k_x, (total_tokens, hidden_size), dtype=jnp.float32
    ).astype(jnp.bfloat16)
    layer_past = jnp.zeros((total_tokens, 2, 1, head_size), dtype=jnp.bfloat16)

    out, new_past = module(
        hidden_states, cu_seqlens, max_s, layer_past,
        layer_past_present_indices=None, cu_seqlens_q=None,
    )
    jax.block_until_ready(out)
    jax.block_until_ready(new_past)

    assert out.shape == (total_tokens, hidden_size)
    assert new_past.shape == (total_tokens, 2, 1, head_size)
    assert bool(jnp.all(jnp.isfinite(out.astype(jnp.float32))))
    print("KERNEL_OK")
</pallas_src>

<mosaic_0001>
module attributes {stable_mosaic.version = 11 : i64} {
  func.func @_linear_kernel(%arg0: i32, %arg1: i32, %arg2: i32, %arg3: memref<512x512xbf16, #tpu.memory_space<vmem>>, %arg4: memref<512x384xbf16, #tpu.memory_space<vmem>>, %arg5: memref<1x384xbf16, #tpu.memory_space<vmem>>, %arg6: memref<512x384xbf16, #tpu.memory_space<vmem>>, %arg7: memref<512x384xf32, #tpu.memory_space<vmem>>) attributes {dimension_semantics = [#tpu.dimension_semantics<parallel>, #tpu.dimension_semantics<parallel>, #tpu.dimension_semantics<arbitrary>], iteration_bounds = array<i64: 1, 2, 1>, scalar_prefetch = 0 : i64, scratch_operands = 1 : i64, tpu.core_type = #tpu.core_type<tc>, window_params = [{transform_indices = @transform_0, window_bounds = array<i64: 512, 512>}, {transform_indices = @transform_1, window_bounds = array<i64: 512, 384>}, {transform_indices = @transform_2, window_bounds = array<i64: 1, 384>}, {transform_indices = @transform_3, window_bounds = array<i64: 512, 384>}]} {
    %c0_i32 = arith.constant 0 : i32
    %0 = arith.cmpi eq, %arg2, %c0_i32 : i32
    %1 = arith.extui %0 : i1 to i32
    %c0_i32_0 = arith.constant 0 : i32
    %2 = arith.cmpi ne, %1, %c0_i32_0 : i32
    scf.if %2 {
      %cst_10 = arith.constant 0.000000e+00 : f32
      %12 = vector.broadcast %cst_10 : f32 to vector<512x384xf32>
      %c0_11 = arith.constant 0 : index
      %c0_12 = arith.constant 0 : index
      %13 = vector.load %arg7[%c0_11, %c0_12] : memref<512x384xf32, #tpu.memory_space<vmem>>, vector<512x384xf32>
      tpu.vector_store %arg7[%c0_11, %c0_12], %12 {strides = array<i32>} : memref<512x384xf32, #tpu.memory_space<vmem>>, vector<512x384xf32>,
    } else {
    }
    %c0 = arith.constant 0 : index
    %c0_1 = arith.constant 0 : index
    %3 = vector.load %arg7[%c0, %c0_1] : memref<512x384xf32, #tpu.memory_space<vmem>>, vector<512x384xf32>
    %c0_2 = arith.constant 0 : index
    %c0_3 = arith.constant 0 : index
    %4 = vector.load %arg3[%c0_2, %c0_3] : memref<512x512xbf16, #tpu.memory_space<vmem>>, vector<512x512xbf16>
    %c0_4 = arith.constant 0 : index
    %c0_5 = arith.constant 0 : index
    %5 = vector.load %arg4[%c0_4, %c0_5] : memref<512x384xbf16, #tpu.memory_space<vmem>>, vector<512x384xbf16>
    %cst = arith.constant dense<0.000000e+00> : vector<512x384xf32>
    %6 = tpu.matmul %4, %5, %cst {dimension_numbers = #tpu.dot_dimension_numbers<[1], [0], [0], [1], [0, 0, 1, 1], [], []>} : vector<512x512xbf16>, vector<512x384xbf16>, vector<512x384xf32> -> vector<512x384xf32>
    %7 = arith.addf %3, %6 : vector<512x384xf32>
    %c0_6 = arith.constant 0 : index
    %c0_7 = arith.constant 0 : index
    %8 = vector.load %arg7[%c0_6, %c0_7] : memref<512x384xf32, #tpu.memory_space<vmem>>, vector<512x384xf32>
    tpu.vector_store %arg7[%c0_6, %c0_7], %7 {strides = array<i32>} : memref<512x384xf32, #tpu.memory_space<vmem>>, vector<512x384xf32>,
    %c0_i32_8 = arith.constant 0 : i32
    %9 = arith.cmpi eq, %arg2, %c0_i32_8 : i32
    %10 = arith.extui %9 : i1 to i32
    %c0_i32_9 = arith.constant 0 : i32
    %11 = arith.cmpi ne, %10, %c0_i32_9 : i32
    scf.if %11 {
      %c0_10 = arith.constant 0 : index
      %c0_11 = arith.constant 0 : index
      %12 = vector.load %arg7[%c0_10, %c0_11] : memref<512x384xf32, #tpu.memory_space<vmem>>, vector<512x384xf32>
      %c0_12 = arith.constant 0 : index
      %c0_13 = arith.constant 0 : index
      %13 = vector.load %arg5[%c0_12, %c0_13] : memref<1x384xbf16, #tpu.memory_space<vmem>>, vector<1x384xbf16>
      %14 = arith.extf %13 : vector<1x384xbf16> to vector<1x384xf32>
      %15 = vector.broadcast %14 : vector<1x384xf32> to vector<512x384xf32>
      %16 = arith.addf %12, %15 : vector<512x384xf32>
      %17 = arith.truncf %16 : vector<512x384xf32> to vector<512x384xbf16>
      %c0_14 = arith.constant 0 : index
      %c0_15 = arith.constant 0 : index
      %18 = vector.load %arg6[%c0_14, %c0_15] : memref<512x384xbf16, #tpu.memory_space<vmem>>, vector<512x384xbf16>
      tpu.vector_store %arg6[%c0_14, %c0_15], %17 {strides = array<i32>} : memref<512x384xbf16, #tpu.memory_space<vmem>>, vector<512x384xbf16>,
    } else {
    }
    return
  }
  func.func @transform_0(%arg0: i32, %arg1: i32, %arg2: i32) -> (i32, i32) {
    %c0_i32 = arith.constant 0 : i32
    return %arg0, %arg2 : i32, i32
  }
  func.func @transform_1(%arg0: i32, %arg1: i32, %arg2: i32) -> (i32, i32) {
    %c0_i32 = arith.constant 0 : i32
    return %arg2, %arg1 : i32, i32
  }
  func.func @transform_2(%arg0: i32, %arg1: i32, %arg2: i32) -> (i32, i32) {
    %c0_i32 = arith.constant 0 : i32
    %c0_i32_0 = arith.constant 0 : i32
    return %c0_i32, %arg1 : i32, i32
  }
  func.func @transform_3(%arg0: i32, %arg1: i32, %arg2: i32) -> (i32, i32) {
    %c0_i32 = arith.constant 0 : i32
    return %arg0, %arg1 : i32, i32
  }
}

</mosaic_0001>

<llo_original>
// kernel: tpu_custom_call.1
$region0: #{tpu_custom_call.1}
  #allocation0 [shape = 'u32[]', space=smem, size = 0x4, offset = 0x4, fixed_abs, tag = 'smem constant byte address 0x4 - core index']
  #allocation1 [shape = 'u32[144,128]{1,0:T(1,128)}', space=vmem, size = 0x12000, scoped, tag = 'internal scratch']
  #allocation2 [shape = 'f32[512,384]{1,0:T(8,128)}', space=vmem, size = 0xc0000, scoped, tag = 'scratch operand']
  %s0 = inlined_call_operand.hbm [shape: bf16[512,512], index: 0, kind: input, shape index: {}]
  %s1 = inlined_call_operand.hbm [shape: bf16[512,768], index: 1, kind: input, shape index: {}]
  %s2 = inlined_call_operand.vmem [shape: bf16[1,768], index: 2, kind: input, shape index: {}]
  %s3 = inlined_call_operand.hbm [shape: bf16[512,768], index: 3, kind: output, shape index: {}]
  %s4 = sld [smem:[#allocation0]]
  $region61: #{tpu_custom_call.1} parent=0
    _
  %s6 = ssub.s32 1, %s4
  %s7 = scalar_select 0, %s6, %s4
  $region1: #{tpu_custom_call.1} parent=0
    #allocation3 [shape = 'u8[524288]{0}', space=vmem, size = 0x80000, scoped, tag = 'input window, operand 0, single buffered']
    #allocation4 [shape = 's32[2]{0}', space=sflag, size = 0x8, scoped, tag = 'scoped memory for tpu_custom_call.1']
    #allocation5 [shape = 's32[2]{0}', space=sflag, size = 0x8, scoped, tag = 'scoped memory for tpu_custom_call.1']
    #allocation6 [shape = 'u8[786432]{0}', space=vmem, size = 0xc0000, scoped, tag = 'input window, operand 1']
    #allocation7 [shape = 's32[2]{0}', space=sflag, size = 0x8, scoped, tag = 'scoped memory for tpu_custom_call.1']
    #allocation8 [shape = 'u8[786432]{0}', space=vmem, size = 0xc0000, scoped, tag = 'output window, operand 0']
    %8 = vsyncpa [#allocation4], 0
    %9 = vsyncpa [#allocation7], 0
    %s10 = scalar_lea.sflag [#allocation7], 1
    %11 = vsyncpa %s10, 0
    %12 = vsyncpa [#allocation5], 0
    %s13 = scalar_lea.sflag [#allocation5], 1
    %14 = vsyncpa %s13, 0
    loop: start=0, step=1, limit=4
    $region2: #{tpu_custom_call.1} parent=1 // loop_pre_header
      _
    $region3: #{tpu_custom_call.1} parent=1 // loop_header
      %s16 = sphi 0, %s20
      %p17 = scmp.ge.s32.totalorder %s16, 4
      %s23 = sphi 0, %s42
      %s24 = sphi 0, %s38
      %s25 = sphi 0, %s34
      %s26 = sphi 0, %s23
      %s27 = sphi 0, %s24
      %s28 = sphi 0, %s25
      %s29 = sphi 0, %s26
      %s30 = sphi 0, %s27
      %s31 = sphi 0, %s28
      %s47 = sphi 0, %s49
      %s50 = sphi 0, %s47
      %s51 = sphi 0, %s50
      %s67 = sphi 0, %s51
      %s75 = sphi 0, %s77
      %s78 = sphi 0, %s75
      %s79 = sphi 0, %s78
      %s95 = sphi 0, %s79
      %s101 = sphi 0, %s103
      %s104 = sphi 0, %s101
      %s105 = sphi 0, %s104
      %s121 = sphi 0, %s105
      %s129 = sphi 0, %s131
      %s132 = sphi 0, %s129
      %s133 = sphi 0, %s132
      %s149 = sphi 0, %s133
    $region4: #{tpu_custom_call.1} parent=1 // loop_header_branch
      %19 = sbr.rel (%p17) target = $region8
    $region5: #{tpu_custom_call.1} parent=1 // loop_body
      %s21 = ssub.s32 %s16, 1
      %s22 = ssub.s32 %s16, 2
      %s32 = sadd.s32 1, %s25
      %p33 = scmp.ge.s32.totalorder %s32, 1
      %s34 = scalar_select %p33, 0, %s32
      %s35 = sadd.s32 1, %s24
      %s36 = scalar_select %p33, %s35, %s24
      %p37 = scmp.ge.s32.totalorder %s36, 2
      %s38 = scalar_select %p37, 0, %s36
      %s39 = sadd.s32 1, %s23
      %s40 = scalar_select %p37, %s39, %s23
      %p41 = scmp.ge.s32.totalorder %s40, 1
      %s42 = scalar_select %p41, 0, %s40
      %s43 = ssub.s32 %s23, %s42
      %s44 = ssub.s32 %s25, %s34
      %s45 = sor.u32 %s43, %s44
      %p46 = scmp.eq.s32.totalorder %s45, 0
      %s48 = sadd.s32 %s47, 1
      %s49 = scalar_select %p46, %s47, %s48
      %p52 = pneg %p46
      %p53 = scmp.eq.s32.totalorder %s16, 1
      %p54 = por %p52, %p53
      %p55 = scmp.ne.s32.totalorder %s47, %s50
      %p56 = scmp.eq.s32.totalorder %s16, 0
      %p57 = por %p55, %p56
      %p58 = scmp.ne.s32.totalorder %s47, %s50
      %p59 = scmp.eq.s32.totalorder %s21, 1
      %p60 = por %p58, %p59
      %p61 = scmp.ne.s32.totalorder %s50, %s51
      %p62 = scmp.eq.s32.totalorder %s21, 0
      %p63 = por %p61, %p62
      %p64 = scmp.ne.s32.totalorder %s50, %s51
      %p65 = scmp.eq.s32.totalorder %s22, 1
      %p66 = por %p64, %p65
      %p68 = scmp.ne.s32.totalorder %s51, %s67
      %p69 = scmp.eq.s32.totalorder %s22, 0
      %p70 = por %p68, %p69
      %s71 = ssub.s32 %s25, %s34
      %s72 = ssub.s32 %s24, %s38
      %s73 = sor.u32 %s71, %s72
      %p74 = scmp.eq.s32.totalorder %s73, 0
      %s76 = sadd.s32 %s75, 1
      %s77 = scalar_select %p74, %s75, %s76
      %p80 = pneg %p74
      %p81 = scmp.eq.s32.totalorder %s16, 1
      %p82 = por %p80, %p81
      %p83 = scmp.ne.s32.totalorder %s75, %s78
      %p84 = scmp.eq.s32.totalorder %s16, 0
      %p85 = por %p83, %p84
      %p86 = scmp.ne.s32.totalorder %s75, %s78
      %p87 = scmp.eq.s32.totalorder %s21, 1
      %p88 = por %p86, %p87
      %p89 = scmp.ne.s32.totalorder %s78, %s79
      %p90 = scmp.eq.s32.totalorder %s21, 0
      %p91 = por %p89, %p90
      %p92 = scmp.ne.s32.totalorder %s78, %s79
      %p93 = scmp.eq.s32.totalorder %s22, 1
      %p94 = por %p92, %p93
      %p96 = scmp.ne.s32.totalorder %s79, %s95
      %p97 = scmp.eq.s32.totalorder %s22, 0
      %p98 = por %p96, %p97
      %s99 = ssub.s32 %s24, %s38
      %p100 = scmp.eq.s32.totalorder %s99, 0
      %s102 = sadd.s32 %s101, 1
      %s103 = scalar_select %p100, %s101, %s102
      %p106 = pneg %p100
      %p107 = scmp.eq.s32.totalorder %s16, 1
      %p108 = por %p106, %p107
      %p109 = scmp.ne.s32.totalorder %s101, %s104
      %p110 = scmp.eq.s32.totalorder %s16, 0
      %p111 = por %p109, %p110
      %p112 = scmp.ne.s32.totalorder %s101, %s104
      %p113 = scmp.eq.s32.totalorder %s21, 1
      %p114 = por %p112, %p113
      %p115 = scmp.ne.s32.totalorder %s104, %s105
      %p116 = scmp.eq.s32.totalorder %s21, 0
      %p117 = por %p115, %p116
      %p118 = scmp.ne.s32.totalorder %s104, %s105
      %p119 = scmp.eq.s32.totalorder %s22, 1
      %p120 = por %p118, %p119
      %p122 = scmp.ne.s32.totalorder %s105, %s121
      %p123 = scmp.eq.s32.totalorder %s22, 0
      %p124 = por %p122, %p123
      %s125 = ssub.s32 %s23, %s42
      %s126 = ssub.s32 %s24, %s38
      %s127 = sor.u32 %s125, %s126
      %p128 = scmp.eq.s32.totalorder %s127, 0
      %s130 = sadd.s32 %s129, 1
      %s131 = scalar_select %p128, %s129, %s130
      %p134 = pneg %p128
      %p135 = scmp.eq.s32.totalorder %s16, 1
      %p136 = por %p134, %p135
      %p137 = scmp.ne.s32.totalorder %s129, %s132
      %p138 = scmp.eq.s32.totalorder %s16, 0
      %p139 = por %p137, %p138
      %p140 = scmp.ne.s32.totalorder %s129, %s132
      %p141 = scmp.eq.s32.totalorder %s21, 1
      %p142 = por %p140, %p141
      %p143 = scmp.ne.s32.totalorder %s132, %s133
      %p144 = scmp.eq.s32.totalorder %s21, 0
      %p145 = por %p143, %p144
      %p146 = scmp.ne.s32.totalorder %s132, %s133
      %p147 = scmp.eq.s32.totalorder %s22, 1
      %p148 = por %p146, %p147
      %p150 = scmp.ne.s32.totalorder %s133, %s149
      %p151 = scmp.eq.s32.totalorder %s22, 0
      %p152 = por %p150, %p151
      %p153 = scmp.le.s32.totalorder 1, %s16
      %p154 = scmp.lt.s32.totalorder %s16, 3
      %p155 = pnand %p153, %p154
      %p156 = pneg %p155
      // Predicated region
      $region9: #{tpu_custom_call.1} parent=5 // pred_check
        _
      $region10: #{tpu_custom_call.1} parent=5 // pred_check_branch
        %158 = sbr.rel (%p155) target = $region12
      $region11: #{tpu_custom_call.1} parent=5 // pred_region
        %s159 = ssub.s32 %s16, 1
        // Predicated region
        $region13: #{tpu_custom_call.1} parent=11 // pred_check
          %p160 = pneg %p63
        $region14: #{tpu_custom_call.1} parent=11 // pred_check_branch
          %162 = sbr.rel (%p160) target = $region16
        $region15: #{tpu_custom_call.1} parent=11 // pred_region
          %s163 = smul.u32 64, %s26
          %s164 = smul.u32 4, %s28
          %s166 = ssub.s32 16384, 16384
          %167 = vsyncadd [#allocation4], %s166
          %s168 = smul.addr %s163, 4
          %s169 = sadd.s32 %s164, %s168
          %s170 = smul.addr %s169, 64
          %s171 = scalar_lea.hbm %s0, %s170
          %s172 = sshll.u32 [#allocation3], 4
          %s173 = int_to_ptr.vmem [resolvable:$true] %s172
          %178 = dma.hbm_to_vmem [thread:$0]  %s171, 16384, %s173, [#allocation4], 256, 256, 16
        $region16: #{tpu_custom_call.1} parent=11 // pred_fallthru
          _
      $region12: #{tpu_custom_call.1} parent=5 // pred_fallthru
        _
      %p179 = scmp.lt.s32.totalorder %s16, 2
      // Predicated region
      $region17: #{tpu_custom_call.1} parent=5 // pred_check
        %p180 = pneg %p179
      $region18: #{tpu_custom_call.1} parent=5 // pred_check_branch
        %182 = sbr.rel (%p180) target = $region20
      $region19: #{tpu_custom_call.1} parent=5 // pred_region
        // Predicated region
        $region21: #{tpu_custom_call.1} parent=19 // pred_check
          %p183 = pneg %p85
        $region22: #{tpu_custom_call.1} parent=19 // pred_check_branch
          %185 = sbr.rel (%p183) target = $region24
        $region23: #{tpu_custom_call.1} parent=19 // pred_region
          %s186 = sand.u32 %s75, 1
          %s187 = scalar_lea.sflag [#allocation7], %s186
          %s188 = sand.u32 %s75, 1
          %s189 = smul.addr %s188, 768
          %s190 = scalar_lea.vmem [#allocation6], %s189
          %s191 = smul.u32 64, %s25
          %s192 = smul.u32 3, %s24
          %s194 = ssub.s32 12288, 12288
          %195 = vsyncadd %s187, %s194
          %s196 = smul.addr %s191, 6
          %s197 = sadd.s32 %s192, %s196
          %s198 = smul.addr %s197, 64
          %s199 = scalar_lea.hbm %s1, %s198
          %s200 = sshll.u32 %s190, 4
          %s201 = int_to_ptr.vmem [resolvable:$true] %s200
          %206 = dma.hbm_to_vmem [thread:$0]  %s199, 12288, %s201, %s187, 384, 192, 12
        $region24: #{tpu_custom_call.1} parent=19 // pred_fallthru
          _
        // Predicated region
        $region25: #{tpu_custom_call.1} parent=19 // pred_check
          %p207 = pneg %p111
        $region26: #{tpu_custom_call.1} parent=19 // pred_check_branch
          %209 = sbr.rel (%p207) target = $region28
        $region27: #{tpu_custom_call.1} parent=19 // pred_region
          %s210 = smul.u32 3, %s24
          %p211 = scmp.lt.s32.totalorder %s210, 5
          %s212 = scalar_select %p211, %s210, 5
          %s213 = scalar_lea.vmem %s2, %s212
          %s214 = smul.u32 3, %s24
        $region28: #{tpu_custom_call.1} parent=19 // pred_fallthru
          _
      $region20: #{tpu_custom_call.1} parent=5 // pred_fallthru
        _
      %p215 = scmp.le.s32.totalorder 1, %s16
      %p216 = scmp.lt.s32.totalorder %s16, 3
      %p217 = pnand %p215, %p216
      %p218 = pneg %p217
      // Predicated region
      $region29: #{tpu_custom_call.1} parent=5 // pred_check
        _
      $region30: #{tpu_custom_call.1} parent=5 // pred_check_branch
        %220 = sbr.rel (%p217) target = $region32
      $region31: #{tpu_custom_call.1} parent=5 // pred_region
        %s221 = ssub.s32 %s16, 1
        // Predicated region
        $region33: #{tpu_custom_call.1} parent=31 // pred_check
          %p222 = pneg %p63
        $region34: #{tpu_custom_call.1} parent=31 // pred_check_branch
          %224 = sbr.rel (%p222) target = $region36
        $region35: #{tpu_custom_call.1} parent=31 // pred_region
          %225 = dma.done [#allocation4], 16384
        $region36: #{tpu_custom_call.1} parent=31 // pred_fallthru
          _
        %s226 = sand.u32 %s78, 1
        %s227 = scalar_lea.sflag [#allocation7], %s226
        %s228 = sand.u32 %s78, 1
        %s229 = smul.addr %s228, 768
        %s230 = scalar_lea.vmem [#allocation6], %s229
        // Predicated region
        $region37: #{tpu_custom_call.1} parent=31 // pred_check
          %p231 = pneg %p91
        $region38: #{tpu_custom_call.1} parent=31 // pred_check_branch
          %233 = sbr.rel (%p231) target = $region40
        $region39: #{tpu_custom_call.1} parent=31 // pred_region
          %234 = dma.done %s227, 12288
        $region40: #{tpu_custom_call.1} parent=31 // pred_fallthru
          _
        %p235 = pneg %p63
        %p236 = pneg %p60
        %s237 = sand.u32 %s78, 1
        %s238 = scalar_lea.sflag [#allocation7], %s237
        %s239 = sand.u32 %s78, 1
        %s240 = smul.addr %s239, 768
        %s241 = scalar_lea.vmem [#allocation6], %s240
        %p242 = pneg %p91
        %p243 = pneg %p88
        %s244 = smul.u32 3, %s27
        %p245 = scmp.lt.s32.totalorder %s244, 5
        %s246 = scalar_select %p245, %s244, 5
        %s247 = scalar_lea.vmem %s2, %s246
        %p248 = pneg %p117
        %p249 = pneg %p114
        %p250 = pneg %p145
        %p251 = pneg %p142
        %s252 = sand.u32 %s132, 1
        %s253 = scalar_lea.sflag [#allocation5], %s252
        %s254 = sand.u32 %s132, 1
        %s255 = smul.addr %s254, 768
        %s256 = scalar_lea.vmem [#allocation8], %s255
        %s257 = smul.u32 64, %s26
        %s258 = smul.u32 4, %s28
        %s259 = smul.u32 64, %s28
        %s260 = smul.u32 3, %s27
        %s261 = smul.u32 3, %s27
        %p262 = scmp.lt.s32.totalorder %s261, 5
        %s263 = scalar_select %p262, %s261, 5
        %s264 = scalar_lea.vmem %s2, %s263
        %s265 = smul.u32 3, %s27
        %s266 = smul.u32 64, %s26
        %s267 = smul.u32 3, %s27
        %p269 = scmp.eq.s32.totalorder %s28, 0
        // Predicated region
        $region41: #{tpu_custom_call.1} parent=31 // pred_check
          %p270 = pneg %p269
        $region42: #{tpu_custom_call.1} parent=31 // pred_check_branch
          %272 = sbr.rel (%p270) target = $region44
        $region43: #{tpu_custom_call.1} parent=31 // pred_region
          %273 = vst [vmem:[#allocation2] sm:$0xff] 0.0
          %274 = vst [vmem:[#allocation2 + $0x8] sm:$0xff] 0.0
          %275 = vst [vmem:[#allocation2 + $0x10] sm:$0xff] 0.0
          %276 = vst [vmem:[#allocation2 + $0x18] sm:$0xff] 0.0
          %277 = vst [vmem:[#allocation2 + $0x20] sm:$0xff] 0.0
          %278 = vst [vmem:[#allocation2 + $0x28] sm:$0xff] 0.0
          %279 = vst [vmem:[#allocation2 + $0x30] sm:$0xff] 0.0
          %280 = vst [vmem:[#allocation2 + $0x38] sm:$0xff] 0.0
          %281 = vst [vmem:[#allocation2 + $0x40] sm:$0xff] 0.0
          %282 = vst [vmem:[#allocation2 + $0x48] sm:$0xff] 0.0
          %283 = vst [vmem:[#allocation2 + $0x50] sm:$0xff] 0.0
          %284 = vst [vmem:[#allocation2 + $0x58] sm:$0xff] 0.0
          %285 = vst [vmem:[#allocation2 + $0x60] sm:$0xff] 0.0
          %286 = vst [vmem:[#allocation2 + $0x68] sm:$0xff] 0.0
          %287 = vst [vmem:[#allocation2 + $0x70] sm:$0xff] 0.0
          %288 = vst [vmem:[#allocation2 + $0x78] sm:$0xff] 0.0
          %289 = vst [vmem:[#allocation2 + $0x80] sm:$0xff] 0.0
          %290 = vst [vmem:[#allocation2 + $0x88] sm:$0xff] 0.0
          %291 = vst [vmem:[#allocation2 + $0x90] sm:$0xff] 0.0
          %292 = vst [vmem:[#allocation2 + $0x98] sm:$0xff] 0.0
          %293 = vst [vmem:[#allocation2 + $0xa0] sm:$0xff] 0.0
          %294 = vst [vmem:[#allocation2 + $0xa8] sm:$0xff] 0.0
          %295 = vst [vmem:[#allocation2 + $0xb0] sm:$0xff] 0.0
          %296 = vst [vmem:[#allocation2 + $0xb8] sm:$0xff] 0.0
          %297 = vst [vmem:[#allocation2 + $0xc0] sm:$0xff] 0.0
          %298 = vst [vmem:[#allocation2 + $0xc8] sm:$0xff] 0.0
          %299 = vst [vmem:[#allocation2 + $0xd0] sm:$0xff] 0.0
          %300 = vst [vmem:[#allocation2 + $0xd8] sm:$0xff] 0.0
          %301 = vst [vmem:[#allocation2 + $0xe0] sm:$0xff] 0.0
          %302 = vst [vmem:[#allocation2 + $0xe8] sm:$0xff] 0.0
          %303 = vst [vmem:[#allocation2 + $0xf0] sm:$0xff] 0.0
          %304 = vst [vmem:[#allocation2 + $0xf8] sm:$0xff] 0.0
          %305 = vst [vmem:[#allocation2 + $0x100] sm:$0xff] 0.0
          %306 = vst [vmem:[#allocation2 + $0x108] sm:$0xff] 0.0
          %307 = vst [vmem:[#allocation2 + $0x110] sm:$0xff] 0.0
          %308 = vst [vmem:[#allocation2 + $0x118] sm:$0xff] 0.0
          %309 = vst [vmem:[#allocation2 + $0x120] sm:$0xff] 0.0
          %310 = vst [vmem:[#allocation2 + $0x128] sm:$0xff] 0.0
          %311 = vst [vmem:[#allocation2 + $0x130] sm:$0xff] 0.0
          %312 = vst [vmem:[#allocation2 + $0x138] sm:$0xff] 0.0
          %313 = vst [vmem:[#allocation2 + $0x140] sm:$0xff] 0.0
          %314 = vst [vmem:[#allocation2 + $0x148] sm:$0xff] 0.0
          %315 = vst [vmem:[#allocation2 + $0x150] sm:$0xff] 0.0
          %316 = vst [vmem:[#allocation2 + $0x158] sm:$0xff] 0.0
          %317 = vst [vmem:[#allocation2 + $0x160] sm:$0xff] 0.0
          %318 = vst [vmem:[#allocation2 + $0x168] sm:$0xff] 0.0
          %319 = vst [vmem:[#allocation2 + $0x170] sm:$0xff] 0.0
          %320 = vst [vmem:[#allocation2 + $0x178] sm:$0xff] 0.0
          %321 = vst [vmem:[#allocation2 + $0x180] sm:$0xff] 0.0
          %322 = vst [vmem:[#allocation2 + $0x188] sm:$0xff] 0.0
          %323 = vst [vmem:[#allocation2 + $0x190] sm:$0xff] 0.0
          %324 = vst [vmem:[#allocation2 + $0x198] sm:$0xff] 0.0
          %325 = vst [vmem:[#allocation2 + $0x1a0] sm:$0xff] 0.0
          %326 = vst [vmem:[#allocation2 + $0x1a8] sm:$0xff] 0.0
          %327 = vst [vmem:[#allocation2 + $0x1b0] sm:$0xff] 0.0
          %328 = vst [vmem:[#allocation2 + $0x1b8] sm:$0xff] 0.0
          %329 = vst [vmem:[#allocation2 + $0x1c0] sm:$0xff] 0.0
          %330 = vst [vmem:[#allocation2 + $0x1c8] sm:$0xff] 0.0
          %331 = vst [vmem:[#allocation2 + $0x1d0] sm:$0xff] 0.0
          %332 = vst [vmem:[#allocation2 + $0x1d8] sm:$0xff] 0.0
          %333 = vst [vmem:[#allocation2 + $0x1e0] sm:$0xff] 0.0
          %334 = vst [vmem:[#allocation2 + $0x1e8] sm:$0xff] 0.0
          %335 = vst [vmem:[#allocation2 + $0x1f0] sm:$0xff] 0.0
          %336 = vst [vmem:[#allocation2 + $0x1f8] sm:$0xff] 0.0
          %337 = vst [vmem:[#allocation2 + $0x200] sm:$0xff] 0.0
          %338 = vst [vmem:[#allocation2 + $0x208] sm:$0xff] 0.0
          %339 = vst [vmem:[#allocation2 + $0x210] sm:$0xff] 0.0
          %340 = vst [vmem:[#allocation2 + $0x218] sm:$0xff] 0.0
          %341 = vst [vmem:[#allocation2 + $0x220] sm:$0xff] 0.0
          %342 = vst [vmem:[#allocation2 + $0x228] sm:$0xff] 0.0
          %343 = vst [vmem:[#allocation2 + $0x230] sm:$0xff] 0.0
          %344 = vst [vmem:[#allocation2 + $0x238] sm:$0xff] 0.0
          %345 = vst [vmem:[#allocation2 + $0x240] sm:$0xff] 0.0
          %346 = vst [vmem:[#allocation2 + $0x248] sm:$0xff] 0.0
          %347 = vst [vmem:[#allocation2 + $0x250] sm:$0xff] 0.0
          %348 = vst [vmem:[#allocation2 + $0x258] sm:$0xff] 0.0
          %349 = vst [vmem:[#allocation2 + $0x260] sm:$0xff] 0.0
          %350 = vst [vmem:[#allocation2 + $0x268] sm:$0xff] 0.0
          %351 = vst [vmem:[#allocation2 + $0x270] sm:$0xff] 0.0
          %352 = vst [vmem:[#allocation2 + $0x278] sm:$0xff] 0.0
          %353 = vst [vmem:[#allocation2 + $0x280] sm:$0xff] 0.0
          %354 = vst [vmem:[#allocation2 + $0x288] sm:$0xff] 0.0
          %355 = vst [vmem:[#allocation2 + $0x290] sm:$0xff] 0.0
          %356 = vst [vmem:[#allocation2 + $0x298] sm:$0xff] 0.0
          %357 = vst [vmem:[#allocation2 + $0x2a0] sm:$0xff] 0.0
          %358 = vst [vmem:[#allocation2 + $0x2a8] sm:$0xff] 0.0
          %359 = vst [vmem:[#allocation2 + $0x2b0] sm:$0xff] 0.0
          %360 = vst [vmem:[#allocation2 + $0x2b8] sm:$0xff] 0.0
          %361 = vst [vmem:[#allocation2 + $0x2c0] sm:$0xff] 0.0
          %362 = vst [vmem:[#allocation2 + $0x2c8] sm:$0xff] 0.0
          %363 = vst [vmem:[#allocation2 + $0x2d0] sm:$0xff] 0.0
          %364 = vst [vmem:[#allocation2 + $0x2d8] sm:$0xff] 0.0
          %365 = vst [vmem:[#allocation2 + $0x2e0] sm:$0xff] 0.0
          %366 = vst [vmem:[#allocation2 + $0x2e8] sm:$0xff] 0.0
          %367 = vst [vmem:[#allocation2 + $0x2f0] sm:$0xff] 0.0
          %368 = vst [vmem:[#allocation2 + $0x2f8] sm:$0xff] 0.0
          %369 = vst [vmem:[#allocation2 + $0x300] sm:$0xff] 0.0
          %370 = vst [vmem:[#allocation2 + $0x308] sm:$0xff] 0.0
          %371 = vst [vmem:[#allocation2 + $0x310] sm:$0xff] 0.0
          %372 = vst [vmem:[#allocation2 + $0x318] sm:$0xff] 0.0
          %373 = vst [vmem:[#allocation2 + $0x320] sm:$0xff] 0.0
          %374 = vst [vmem:[#allocation2 + $0x328] sm:$0xff] 0.0
          %375 = vst [vmem:[#allocation2 + $0x330] sm:$0xff] 0.0
          %376 = vst [vmem:[#allocation2 + $0x338] sm:$0xff] 0.0
          %377 = vst [vmem:[#allocation2 + $0x340] sm:$0xff] 0.0
          %378 = vst [vmem:[#allocation2 + $0x348] sm:$0xff] 0.0
          %379 = vst [vmem:[#allocation2 + $0x350] sm:$0xff] 0.0
          %380 = vst [vmem:[#allocation2 + $0x358] sm:$0xff] 0.0
          %381 = vst [vmem:[#allocation2 + $0x360] sm:$0xff] 0.0
          %382 = vst [vmem:[#allocation2 + $0x368] sm:$0xff] 0.0
          %383 = vst [vmem:[#allocation2 + $0x370] sm:$0xff] 0.0
          %384 = vst [vmem:[#allocation2 + $0x378] sm:$0xff] 0.0
          %385 = vst [vmem:[#allocation2 + $0x380] sm:$0xff] 0.0
          %386 = vst [vmem:[#allocation2 + $0x388] sm:$0xff] 0.0
          %387 = vst [vmem:[#allocation2 + $0x390] sm:$0xff] 0.0
          %388 = vst [vmem:[#allocation2 + $0x398] sm:$0xff] 0.0
          %389 = vst [vmem:[#allocation2 + $0x3a0] sm:$0xff] 0.0
          %390 = vst [vmem:[#allocation2 + $0x3a8] sm:$0xff] 0.0
          %391 = vst [vmem:[#allocation2 + $0x3b0] sm:$0xff] 0.0
          %392 = vst [vmem:[#allocation2 + $0x3b8] sm:$0xff] 0.0
          %393 = vst [vmem:[#allocation2 + $0x3c0] sm:$0xff] 0.0
          %394 = vst [vmem:[#allocation2 + $0x3c8] sm:$0xff] 0.0
          %395 = vst [vmem:[#allocation2 + $0x3d0] sm:$0xff] 0.0
          %396 = vst [vmem:[#allocation2 + $0x3d8] sm:$0xff] 0.0
          %397 = vst [vmem:[#allocation2 + $0x3e0] sm:$0xff] 0.0
          %398 = vst [vmem:[#allocation2 + $0x3e8] sm:$0xff] 0.0
          %399 = vst [vmem:[#allocation2 + $0x3f0] sm:$0xff] 0.0
          %400 = vst [vmem:[#allocation2 + $0x3f8] sm:$0xff] 0.0
          %401 = vst [vmem:[#allocation2 + $0x400] sm:$0xff] 0.0
          %402 = vst [vmem:[#allocation2 + $0x408] sm:$0xff] 0.0
          %403 = vst [vmem:[#allocation2 + $0x410] sm:$0xff] 0.0
          %404 = vst [vmem:[#allocation2 + $0x418] sm:$0xff] 0.0
          %405 = vst [vmem:[#allocation2 + $0x420] sm:$0xff] 0.0
          %406 = vst [vmem:[#allocation2 + $0x428] sm:$0xff] 0.0
          %407 = vst [vmem:[#allocation2 + $0x430] sm:$0xff] 0.0
          %408 = vst [vmem:[#allocation2 + $0x438] sm:$0xff] 0.0
          %409 = vst [vmem:[#allocation2 + $0x440] sm:$0xff] 0.0
          %410 = vst [vmem:[#allocation2 + $0x448] sm:$0xff] 0.0
          %411 = vst [vmem:[#allocation2 + $0x450] sm:$0xff] 0.0
          %412 = vst [vmem:[#allocation2 + $0x458] sm:$0xff] 0.0
          %413 = vst [vmem:[#allocation2 + $0x460] sm:$0xff] 0.0
          %414 = vst [vmem:[#allocation2 + $0x468] sm:$0xff] 0.0
          %415 = vst [vmem:[#allocation2 + $0x470] sm:$0xff] 0.0
          %416 = vst [vmem:[#allocation2 + $0x478] sm:$0xff] 0.0
          %417 = vst [vmem:[#allocation2 + $0x480] sm:$0xff] 0.0
          %418 = vst [vmem:[#allocation2 + $0x488] sm:$0xff] 0.0
          %419 = vst [vmem:[#allocation2 + $0x490] sm:$0xff] 0.0
          %420 = vst [vmem:[#allocation2 + $0x498] sm:$0xff] 0.0
          %421 = vst [vmem:[#allocation2 + $0x4a0] sm:$0xff] 0.0
          %422 = vst [vmem:[#allocation2 + $0x4a8] sm:$0xff] 0.0
          %423 = vst [vmem:[#allocation2 + $0x4b0] sm:$0xff] 0.0
          %424 = vst [vmem:[#allocation2 + $0x4b8] sm:$0xff] 0.0
          %425 = vst [vmem:[#allocation2 + $0x4c0] sm:$0xff] 0.0
          %426 = vst [vmem:[#allocation2 + $0x4c8] sm:$0xff] 0.0
          %427 = vst [vmem:[#allocation2 + $0x4d0] sm:$0xff] 0.0
          %428 = vst [vmem:[#allocation2 + $0x4d8] sm:$0xff] 0.0
          %429 = vst [vmem:[#allocation2 + $0x4e0] sm:$0xff] 0.0
          %430 = vst [vmem:[#allocation2 + $0x4e8] sm:$0xff] 0.0
          %431 = vst [vmem:[#allocation2 + $0x4f0] sm:$0xff] 0.0
          %432 = vst [vmem:[#allocation2 + $0x4f8] sm:$0xff] 0.0
          %433 = vst [vmem:[#allocation2 + $0x500] sm:$0xff] 0.0
          %434 = vst [vmem:[#allocation2 + $0x508] sm:$0xff] 0.0
          %435 = vst [vmem:[#allocation2 + $0x510] sm:$0xff] 0.0
          %436 = vst [vmem:[#allocation2 + $0x518] sm:$0xff] 0.0
          %437 = vst [vmem:[#allocation2 + $0x520] sm:$0xff] 0.0
          %438 = vst [vmem:[#allocation2 + $0x528] sm:$0xff] 0.0
          %439 = vst [vmem:[#allocation2 + $0x530] sm:$0xff] 0.0
          %440 = vst [vmem:[#allocation2 + $0x538] sm:$0xff] 0.0
          %441 = vst [vmem:[#allocation2 + $0x540] sm:$0xff] 0.0
          %442 = vst [vmem:[#allocation2 + $0x548] sm:$0xff] 0.0
          %443 = vst [vmem:[#allocation2 + $0x550] sm:$0xff] 0.0
          %444 = vst [vmem:[#allocation2 + $0x558] sm:$0xff] 0.0
          %445 = vst [vmem:[#allocation2 + $0x560] sm:$0xff] 0.0
          %446 = vst [vmem:[#allocation2 + $0x568] sm:$0xff] 0.0
          %447 = vst [vmem:[#allocation2 + $0x570] sm:$0xff] 0.0
          %448 = vst [vmem:[#allocation2 + $0x578] sm:$0xff] 0.0
          %449 = vst [vmem:[#allocation2 + $0x580] sm:$0xff] 0.0
          %450 = vst [vmem:[#allocation2 + $0x588] sm:$0xff] 0.0
          %451 = vst [vmem:[#allocation2 + $0x590] sm:$0xff] 0.0
          %452 = vst [vmem:[#allocation2 + $0x598] sm:$0xff] 0.0
          %453 = vst [vmem:[#allocation2 + $0x5a0] sm:$0xff] 0.0
          %454 = vst [vmem:[#allocation2 + $0x5a8] sm:$0xff] 0.0
          %455 = vst [vmem:[#allocation2 + $0x5b0] sm:$0xff] 0.0
          %456 = vst [vmem:[#allocation2 + $0x5b8] sm:$0xff] 0.0
          %457 = vst [vmem:[#allocation2 + $0x5c0] sm:$0xff] 0.0
          %458 = vst [vmem:[#allocation2 + $0x5c8] sm:$0xff] 0.0
          %459 = vst [vmem:[#allocation2 + $0x5d0] sm:$0xff] 0.0
          %460 = vst [vmem:[#allocation2 + $0x5d8] sm:$0xff] 0.0
          %461 = vst [vmem:[#allocation2 + $0x5e0] sm:$0xff] 0.0
          %462 = vst [vmem:[#allocation2 + $0x5e8] sm:$0xff] 0.0
          %463 = vst [vmem:[#allocation2 + $0x5f0] sm:$0xff] 0.0
          %464 = vst [vmem:[#allocation2 + $0x5f8] sm:$0xff] 0.0
        $region44: #{tpu_custom_call.1} parent=31 // pred_fallthru
          _
        %v465 = vld [vmem:[#allocation2] sm:$0xff]
        %v466 = vld [vmem:[#allocation2 + $0x8] sm:$0xff]
        %v467 = vld [vmem:[#allocation2 + $0x10] sm:$0xff]
        %v468 = vld [vmem:[#allocation2 + $0x18] sm:$0xff]
        %v469 = vld [vmem:[#allocation2 + $0x20] sm:$0xff]
        %v470 = vld [vmem:[#allocation2 + $0x28] sm:$0xff]
        %v471 = vld [vmem:[#allocation2 + $0x30] sm:$0xff]
        %v472 = vld [vmem:[#allocation2 + $0x38] sm:$0xff]
        %v473 = vld [vmem:[#allocation2 + $0x40] sm:$0xff]
        %v474 = vld [vmem:[#allocation2 + $0x48] sm:$0xff]
        %v475 = vld [vmem:[#allocation2 + $0x50] sm:$0xff]
        %v476 = vld [vmem:[#allocation2 + $0x58] sm:$0xff]
        %v477 = vld [vmem:[#allocation2 + $0x60] sm:$0xff]
        %v478 = vld [vmem:[#allocation2 + $0x68] sm:$0xff]
        %v479 = vld [vmem:[#allocation2 + $0x70] sm:$0xff]
        %v480 = vld [vmem:[#allocation2 + $0x78] sm:$0xff]
        %v481 = vld [vmem:[#allocation2 + $0x80] sm:$0xff]
        %v482 = vld [vmem:[#allocation2 + $0x88] sm:$0xff]
        %v483 = vld [vmem:[#allocation2 + $0x90] sm:$0xff]
        %v484 = vld [vmem:[#allocation2 + $0x98] sm:$0xff]
        %v485 = vld [vmem:[#allocation2 + $0xa0] sm:$0xff]
        %v486 = vld [vmem:[#allocation2 + $0xa8] sm:$0xff]
        %v487 = vld [vmem:[#allocation2 + $0xb0] sm:$0xff]
        %v488 = vld [vmem:[#allocation2 + $0xb8] sm:$0xff]
        %v489 = vld [vmem:[#allocation2 + $0xc0] sm:$0xff]
        %v490 = vld [vmem:[#allocation2 + $0xc8] sm:$0xff]
        %v491 = vld [vmem:[#allocation2 + $0xd0] sm:$0xff]
        %v492 = vld [vmem:[#allocation2 + $0xd8] sm:$0xff]
        %v493 = vld [vmem:[#allocation2 + $0xe0] sm:$0xff]
        %v494 = vld [vmem:[#allocation2 + $0xe8] sm:$0xff]
        %v495 = vld [vmem:[#allocation2 + $0xf0] sm:$0xff]
        %v496 = vld [vmem:[#allocation2 + $0xf8] sm:$0xff]
        %v497 = vld [vmem:[#allocation2 + $0x100] sm:$0xff]
        %v498 = vld [vmem:[#allocation2 + $0x108] sm:$0xff]
        %v499 = vld [vmem:[#allocation2 + $0x110] sm:$0xff]
        %v500 = vld [vmem:[#allocation2 + $0x118] sm:$0xff]
        %v501 = vld [vmem:[#allocation2 + $0x120] sm:$0xff]
        %v502 = vld [vmem:[#allocation2 + $0x128] sm:$0xff]
        %v503 = vld [vmem:[#allocation2 + $0x130] sm:$0xff]
        %v504 = vld [vmem:[#allocation2 + $0x138] sm:$0xff]
        %v505 = vld [vmem:[#allocation2 + $0x140] sm:$0xff]
        %v506 = vld [vmem:[#allocation2 + $0x148] sm:$0xff]
        %v507 = vld [vmem:[#allocation2 + $0x150] sm:$0xff]
        %v508 = vld [vmem:[#allocation2 + $0x158] sm:$0xff]
        %v509 = vld [vmem:[#allocation2 + $0x160] sm:$0xff]
        %v510 = vld [vmem:[#allocation2 + $0x168] sm:$0xff]
        %v511 = vld [vmem:[#allocation2 + $0x170] sm:$0xff]
        %v512 = vld [vmem:[#allocation2 + $0x178] sm:$0xff]
        %v513 = vld [vmem:[#allocation2 + $0x180] sm:$0xff]
        %v514 = vld [vmem:[#allocation2 + $0x188] sm:$0xff]
        %v515 = vld [vmem:[#allocation2 + $0x190] sm:$0xff]
        %v516 = vld [vmem:[#allocation2 + $0x198] sm:$0xff]
        %v517 = vld [vmem:[#allocation2 + $0x1a0] sm:$0xff]
        %v518 = vld [vmem:[#allocation2 + $0x1a8] sm:$0xff]
        %v519 = vld [vmem:[#allocation2 + $0x1b0] sm:$0xff]
        %v520 = vld [vmem:[#allocation2 + $0x1b8] sm:$0xff]
        %v521 = vld [vmem:[#allocation2 + $0x1c0] sm:$0xff]
        %v522 = vld [vmem:[#allocation2 + $0x1c8] sm:$0xff]
        %v523 = vld [vmem:[#allocation2 + $0x1d0] sm:$0xff]
        %v524 = vld [vmem:[#allocation2 + $0x1d8] sm:$0xff]
        %v525 = vld [vmem:[#allocation2 + $0x1e0] sm:$0xff]
        %v526 = vld [vmem:[#allocation2 + $0x1e8] sm:$0xff]
        %v527 = vld [vmem:[#allocation2 + $0x1f0] sm:$0xff]
        %v528 = vld [vmem:[#allocation2 + $0x1f8] sm:$0xff]
        %v529 = vld [vmem:[#allocation2 + $0x200] sm:$0xff]
        %v530 = vld [vmem:[#allocation2 + $0x208] sm:$0xff]
        %v531 = vld [vmem:[#allocation2 + $0x210] sm:$0xff]
        %v532 = vld [vmem:[#allocation2 + $0x218] sm:$0xff]
        %v533 = vld [vmem:[#allocation2 + $0x220] sm:$0xff]
        %v534 = vld [vmem:[#allocation2 + $0x228] sm:$0xff]
        %v535 = vld [vmem:[#allocation2 + $0x230] sm:$0xff]
        %v536 = vld [vmem:[#allocation2 + $0x238] sm:$0xff]
        %v537 = vld [vmem:[#allocation2 + $0x240] sm:$0xff]
        %v538 = vld [vmem:[#allocation2 + $0x248] sm:$0xff]
        %v539 = vld [vmem:[#allocation2 + $0x250] sm:$0xff]
        %v540 = vld [vmem:[#allocation2 + $0x258] sm:$0xff]
        %v541 = vld [vmem:[#allocation2 + $0x260] sm:$0xff]
        %v542 = vld [vmem:[#allocation2 + $0x268] sm:$0xff]
        %v543 = vld [vmem:[#allocation2 + $0x270] sm:$0xff]
        %v544 = vld [vmem:[#allocation2 + $0x278] sm:$0xff]
        %v545 = vld [vmem:[#allocation2 + $0x280] sm:$0xff]
        %v546 = vld [vmem:[#allocation2 + $0x288] sm:$0xff]
        %v547 = vld [vmem:[#allocation2 + $0x290] sm:$0xff]
        %v548 = vld [vmem:[#allocation2 + $0x298] sm:$0xff]
        %v549 = vld [vmem:[#allocation2 + $0x2a0] sm:$0xff]
        %v550 = vld [vmem:[#allocation2 + $0x2a8] sm:$0xff]
        %v551 = vld [vmem:[#allocation2 + $0x2b0] sm:$0xff]
        %v552 = vld [vmem:[#allocation2 + $0x2b8] sm:$0xff]
        %v553 = vld [vmem:[#allocation2 + $0x2c0] sm:$0xff]
        %v554 = vld [vmem:[#allocation2 + $0x2c8] sm:$0xff]
        %v555 = vld [vmem:[#allocation2 + $0x2d0] sm:$0xff]
        %v556 = vld [vmem:[#allocation2 + $0x2d8] sm:$0xff]
        %v557 = vld [vmem:[#allocation2 + $0x2e0] sm:$0xff]
        %v558 = vld [vmem:[#allocation2 + $0x2e8] sm:$0xff]
        %v559 = vld [vmem:[#allocation2 + $0x2f0] sm:$0xff]
        %v560 = vld [vmem:[#allocation2 + $0x2f8] sm:$0xff]
        %v561 = vld [vmem:[#allocation2 + $0x300] sm:$0xff]
        %v562 = vld [vmem:[#allocation2 + $0x308] sm:$0xff]
        %v563 = vld [vmem:[#allocation2 + $0x310] sm:$0xff]
        %v564 = vld [vmem:[#allocation2 + $0x318] sm:$0xff]
        %v565 = vld [vmem:[#allocation2 + $0x320] sm:$0xff]
        %v566 = vld [vmem:[#allocation2 + $0x328] sm:$0xff]
        %v567 = vld [vmem:[#allocation2 + $0x330] sm:$0xff]
        %v568 = vld [vmem:[#allocation2 + $0x338] sm:$0xff]
        %v569 = vld [vmem:[#allocation2 + $0x340] sm:$0xff]
        %v570 = vld [vmem:[#allocation2 + $0x348] sm:$0xff]
        %v571 = vld [vmem:[#allocation2 + $0x350] sm:$0xff]
        %v572 = vld [vmem:[#allocation2 + $0x358] sm:$0xff]
        %v573 = vld [vmem:[#allocation2 + $0x360] sm:$0xff]
        %v574 = vld [vmem:[#allocation2 + $0x368] sm:$0xff]
        %v575 = vld [vmem:[#allocation2 + $0x370] sm:$0xff]
        %v576 = vld [vmem:[#allocation2 + $0x378] sm:$0xff]
        %v577 = vld [vmem:[#allocation2 + $0x380] sm:$0xff]
        %v578 = vld [vmem:[#allocation2 + $0x388] sm:$0xff]
        %v579 = vld [vmem:[#allocation2 + $0x390] sm:$0xff]
        %v580 = vld [vmem:[#allocation2 + $0x398] sm:$0xff]
        %v581 = vld [vmem:[#allocation2 + $0x3a0] sm:$0xff]
        %v582 = vld [vmem:[#allocation2 + $0x3a8] sm:$0xff]
        %v583 = vld [vmem:[#allocation2 + $0x3b0] sm:$0xff]
        %v584 = vld [vmem:[#allocation2 + $0x3b8] sm:$0xff]
        %v585 = vld [vmem:[#allocation2 + $0x3c0] sm:$0xff]
        %v586 = vld [vmem:[#allocation2 + $0x3c8] sm:$0xff]
        %v587 = vld [vmem:[#allocation2 + $0x3d0] sm:$0xff]
        %v588 = vld [vmem:[#allocation2 + $0x3d8] sm:$0xff]
        %v589 = vld [vmem:[#allocation2 + $0x3e0] sm:$0xff]
        %v590 = vld [vmem:[#allocation2 + $0x3e8] sm:$0xff]
        %v591 = vld [vmem:[#allocation2 + $0x3f0] sm:$0xff]
        %v592 = vld [vmem:[#allocation2 + $0x3f8] sm:$0xff]
        %v593 = vld [vmem:[#allocation2 + $0x400] sm:$0xff]
        %v594 = vld [vmem:[#allocation2 + $0x408] sm:$0xff]
        %v595 = vld [vmem:[#allocation2 + $0x410] sm:$0xff]
        %v596 = vld [vmem:[#allocation2 + $0x418] sm:$0xff]
        %v597 = vld [vmem:[#allocation2 + $0x420] sm:$0xff]
        %v598 = vld [vmem:[#allocation2 + $0x428] sm:$0xff]
        %v599 = vld [vmem:[#allocation2 + $0x430] sm:$0xff]
        %v600 = vld [vmem:[#allocation2 + $0x438] sm:$0xff]
        %v601 = vld [vmem:[#allocation2 + $0x440] sm:$0xff]
        %v602 = vld [vmem:[#allocation2 + $0x448] sm:$0xff]
        %v603 = vld [vmem:[#allocation2 + $0x450] sm:$0xff]
        %v604 = vld [vmem:[#allocation2 + $0x458] sm:$0xff]
        %v605 = vld [vmem:[#allocation2 + $0x460] sm:$0xff]
        %v606 = vld [vmem:[#allocation2 + $0x468] sm:$0xff]
        %v607 = vld [vmem:[#allocation2 + $0x470] sm:$0xff]
        %v608 = vld [vmem:[#allocation2 + $0x478] sm:$0xff]
        %v609 = vld [vmem:[#allocation2 + $0x480] sm:$0xff]
        %v610 = vld [vmem:[#allocation2 + $0x488] sm:$0xff]
        %v611 = vld [vmem:[#allocation2 + $0x490] sm:$0xff]
        %v612 = vld [vmem:[#allocation2 + $0x498] sm:$0xff]
        %v613 = vld [vmem:[#allocation2 + $0x4a0] sm:$0xff]
        %v614 = vld [vmem:[#allocation2 + $0x4a8] sm:$0xff]
        %v615 = vld [vmem:[#allocation2 + $0x4b0] sm:$0xff]
        %v616 = vld [vmem:[#allocation2 + $0x4b8] sm:$0xff]
        %v617 = vld [vmem:[#allocation2 + $0x4c0] sm:$0xff]
        %v618 = vld [vmem:[#allocation2 + $0x4c8] sm:$0xff]
        %v619 = vld [vmem:[#allocation2 + $0x4d0] sm:$0xff]
        %v620 = vld [vmem:[#allocation2 + $0x4d8] sm:$0xff]
        %v621 = vld [vmem:[#allocation2 + $0x4e0] sm:$0xff]
        %v622 = vld [vmem:[#allocation2 + $0x4e8] sm:$0xff]
        %v623 = vld [vmem:[#allocation2 + $0x4f0] sm:$0xff]
        %v624 = vld [vmem:[#allocation2 + $0x4f8] sm:$0xff]
        %v625 = vld [vmem:[#allocation2 + $0x500] sm:$0xff]
        %v626 = vld [vmem:[#allocation2 + $0x508] sm:$0xff]
        %v627 = vld [vmem:[#allocation2 + $0x510] sm:$0xff]
        %v628 = vld [vmem:[#allocation2 + $0x518] sm:$0xff]
        %v629 = vld [vmem:[#allocation2 + $0x520] sm:$0xff]
        %v630 = vld [vmem:[#allocation2 + $0x528] sm:$0xff]
        %v631 = vld [vmem:[#allocation2 + $0x530] sm:$0xff]
        %v632 = vld [vmem:[#allocation2 + $0x538] sm:$0xff]
        %v633 = vld [vmem:[#allocation2 + $0x540] sm:$0xff]
        %v634 = vld [vmem:[#allocation2 + $0x548] sm:$0xff]
        %v635 = vld [vmem:[#allocation2 + $0x550] sm:$0xff]
        %v636 = vld [vmem:[#allocation2 + $0x558] sm:$0xff]
        %v637 = vld [vmem:[#allocation2 + $0x560] sm:$0xff]
        %v638 = vld [vmem:[#allocation2 + $0x568] sm:$0xff]
        %v639 = vld [vmem:[#allocation2 + $0x570] sm:$0xff]
        %v640 = vld [vmem:[#allocation2 + $0x578] sm:$0xff]
        %v641 = vld [vmem:[#allocation2 + $0x580] sm:$0xff]
        %v642 = vld [vmem:[#allocation2 + $0x588] sm:$0xff]
        %v643 = vld [vmem:[#allocation2 + $0x590] sm:$0xff]
        %v644 = vld [vmem:[#allocation2 + $0x598] sm:$0xff]
        %v645 = vld [vmem:[#allocation2 + $0x5a0] sm:$0xff]
        %v646 = vld [vmem:[#allocation2 + $0x5a8] sm:$0xff]
        %v647 = vld [vmem:[#allocation2 + $0x5b0] sm:$0xff]
        %v648 = vld [vmem:[#allocation2 + $0x5b8] sm:$0xff]
        %v649 = vld [vmem:[#allocation2 + $0x5c0] sm:$0xff]
        %v650 = vld [vmem:[#allocation2 + $0x5c8] sm:$0xff]
        %v651 = vld [vmem:[#allocation2 + $0x5d0] sm:$0xff]
        %v652 = vld [vmem:[#allocation2 + $0x5d8] sm:$0xff]
        %v653 = vld [vmem:[#allocation2 + $0x5e0] sm:$0xff]
        %v654 = vld [vmem:[#allocation2 + $0x5e8] sm:$0xff]
        %v655 = vld [vmem:[#allocation2 + $0x5f0] sm:$0xff]
        %v656 = vld [vmem:[#allocation2 + $0x5f8] sm:$0xff]
        %v657 = vld [vmem:[#allocation3] sm:$0xff]
        %v658 = vld [vmem:[#allocation3 + $0x8] sm:$0xff]
        %v659 = vld [vmem:[#allocation3 + $0x10] sm:$0xff]
        %v660 = vld [vmem:[#allocation3 + $0x18] sm:$0xff]
        %v661 = vld [vmem:[#allocation3 + $0x20] sm:$0xff]
        %v662 = vld [vmem:[#allocation3 + $0x28] sm:$0xff]
        %v663 = vld [vmem:[#allocation3 + $0x30] sm:$0xff]
        %v664 = vld [vmem:[#allocation3 + $0x38] sm:$0xff]
        %v665 = vld [vmem:[#allocation3 + $0x40] sm:$0xff]
        %v666 = vld [vmem:[#allocation3 + $0x48] sm:$0xff]
        %v667 = vld [vmem:[#allocation3 + $0x50] sm:$0xff]
        %v668 = vld [vmem:[#allocation3 + $0x58] sm:$0xff]
        %v669 = vld [vmem:[#allocation3 + $0x60] sm:$0xff]
        %v670 = vld [vmem:[#allocation3 + $0x68] sm:$0xff]
        %v671 = vld [vmem:[#allocation3 + $0x70] sm:$0xff]
        %v672 = vld [vmem:[#allocation3 + $0x78] sm:$0xff]
        %v673 = vld [vmem:[#allocation3 + $0x80] sm:$0xff]
        %v674 = vld [vmem:[#allocation3 + $0x88] sm:$0xff]
        %v675 = vld [vmem:[#allocation3 + $0x90] sm:$0xff]
        %v676 = vld [vmem:[#allocation3 + $0x98] sm:$0xff]
        %v677 = vld [vmem:[#allocation3 + $0xa0] sm:$0xff]
        %v678 = vld [vmem:[#allocation3 + $0xa8] sm:$0xff]
        %v679 = vld [vmem:[#allocation3 + $0xb0] sm:$0xff]
        %v680 = vld [vmem:[#allocation3 + $0xb8] sm:$0xff]
        %v681 = vld [vmem:[#allocation3 + $0xc0] sm:$0xff]
        %v682 = vld [vmem:[#allocation3 + $0xc8] sm:$0xff]
        %v683 = vld [vmem:[#allocation3 + $0xd0] sm:$0xff]
        %v684 = vld [vmem:[#allocation3 + $0xd8] sm:$0xff]
        %v685 = vld [vmem:[#allocation3 + $0xe0] sm:$0xff]
        %v686 = vld [vmem:[#allocation3 + $0xe8] sm:$0xff]
        %v687 = vld [vmem:[#allocation3 + $0xf0] sm:$0xff]
        %v688 = vld [vmem:[#allocation3 + $0xf8] sm:$0xff]
        %v689 = vld [vmem:[#allocation3 + $0x100] sm:$0xff]
        %v690 = vld [vmem:[#allocation3 + $0x108] sm:$0xff]
        %v691 = vld [vmem:[#allocation3 + $0x110] sm:$0xff]
        %v692 = vld [vmem:[#allocation3 + $0x118] sm:$0xff]
        %v693 = vld [vmem:[#allocation3 + $0x120] sm:$0xff]
        %v694 = vld [vmem:[#allocation3 + $0x128] sm:$0xff]
        %v695 = vld [vmem:[#allocation3 + $0x130] sm:$0xff]
        %v696 = vld [vmem:[#allocation3 + $0x138] sm:$0xff]
        %v697 = vld [vmem:[#allocation3 + $0x140] sm:$0xff]
        %v698 = vld [vmem:[#allocation3 + $0x148] sm:$0xff]
        %v699 = vld [vmem:[#allocation3 + $0x150] sm:$0xff]
        %v700 = vld [vmem:[#allocation3 + $0x158] sm:$0xff]
        %v701 = vld [vmem:[#allocation3 + $0x160] sm:$0xff]
        %v702 = vld [vmem:[#allocation3 + $0x168] sm:$0xff]
        %v703 = vld [vmem:[#allocation3 + $0x170] sm:$0xff]
        %v704 = vld [vmem:[#allocation3 + $0x178] sm:$0xff]
        %v705 = vld [vmem:[#allocation3 + $0x180] sm:$0xff]
        %v706 = vld [vmem:[#allocation3 + $0x188] sm:$0xff]
        %v707 = vld [vmem:[#allocation3 + $0x190] sm:$0xff]
        %v708 = vld [vmem:[#allocation3 + $0x198] sm:$0xff]
        %v709 = vld [vmem:[#allocation3 + $0x1a0] sm:$0xff]
        %v710 = vld [vmem:[#allocation3 + $0x1a8] sm:$0xff]
        %v711 = vld [vmem:[#allocation3 + $0x1b0] sm:$0xff]
        %v712 = vld [vmem:[#allocation3 + $0x1b8] sm:$0xff]
        %v713 = vld [vmem:[#allocation3 + $0x1c0] sm:$0xff]
        %v714 = vld [vmem:[#allocation3 + $0x1c8] sm:$0xff]
        %v715 = vld [vmem:[#allocation3 + $0x1d0] sm:$0xff]
        %v716 = vld [vmem:[#allocation3 + $0x1d8] sm:$0xff]
        %v717 = vld [vmem:[#allocation3 + $0x1e0] sm:$0xff]
        %v718 = vld [vmem:[#allocation3 + $0x1e8] sm:$0xff]
        %v719 = vld [vmem:[#allocation3 + $0x1f0] sm:$0xff]
        %v720 = vld [vmem:[#allocation3 + $0x1f8] sm:$0xff]
        %v721 = vld [vmem:[#allocation3 + $0x200] sm:$0xff]
        %v722 = vld [vmem:[#allocation3 + $0x208] sm:$0xff]
        %v723 = vld [vmem:[#allocation3 + $0x210] sm:$0xff]
        %v724 = vld [vmem:[#allocation3 + $0x218] sm:$0xff]
        %v725 = vld [vmem:[#allocation3 + $0x220] sm:$0xff]
        %v726 = vld [vmem:[#allocation3 + $0x228] sm:$0xff]
        %v727 = vld [vmem:[#allocation3 + $0x230] sm:$0xff]
        %v728 = vld [vmem:[#allocation3 + $0x238] sm:$0xff]
        %v729 = vld [vmem:[#allocation3 + $0x240] sm:$0xff]
        %v730 = vld [vmem:[#allocation3 + $0x248] sm:$0xff]
        %v731 = vld [vmem:[#allocation3 + $0x250] sm:$0xff]
        %v732 = vld [vmem:[#allocation3 + $0x258] sm:$0xff]
        %v733 = vld [vmem:[#allocation3 + $0x260] sm:$0xff]
        %v734 = vld [vmem:[#allocation3 + $0x268] sm:$0xff]
        %v735 = vld [vmem:[#allocation3 + $0x270] sm:$0xff]
        %v736 = vld [vmem:[#allocation3 + $0x278] sm:$0xff]
        %v737 = vld [vmem:[#allocation3 + $0x280] sm:$0xff]
        %v738 = vld [vmem:[#allocation3 + $0x288] sm:$0xff]
        %v739 = vld [vmem:[#allocation3 + $0x290] sm:$0xff]
        %v740 = vld [vmem:[#allocation3 + $0x298] sm:$0xff]
        %v741 = vld [vmem:[#allocation3 + $0x2a0] sm:$0xff]
        %v742 = vld [vmem:[#allocation3 + $0x2a8] sm:$0xff]
        %v743 = vld [vmem:[#allocation3 + $0x2b0] sm:$0xff]
        %v744 = vld [vmem:[#allocation3 + $0x2b8] sm:$0xff]
        %v745 = vld [vmem:[#allocation3 + $0x2c0] sm:$0xff]
        %v746 = vld [vmem:[#allocation3 + $0x2c8] sm:$0xff]
        %v747 = vld [vmem:[#allocation3 + $0x2d0] sm:$0xff]
        %v748 = vld [vmem:[#allocation3 + $0x2d8] sm:$0xff]
        %v749 = vld [vmem:[#allocation3 + $0x2e0] sm:$0xff]
        %v750 = vld [vmem:[#allocation3 + $0x2e8] sm:$0xff]
        %v751 = vld [vmem:[#allocation3 + $0x2f0] sm:$0xff]
        %v752 = vld [vmem:[#allocation3 + $0x2f8] sm:$0xff]
        %v753 = vld [vmem:[#allocation3 + $0x300] sm:$0xff]
        %v754 = vld [vmem:[#allocation3 + $0x308] sm:$0xff]
        %v755 = vld [vmem:[#allocation3 + $0x310] sm:$0xff]
        %v756 = vld [vmem:[#allocation3 + $0x318] sm:$0xff]
        %v757 = vld [vmem:[#allocation3 + $0x320] sm:$0xff]
        %v758 = vld [vmem:[#allocation3 + $0x328] sm:$0xff]
        %v759 = vld [vmem:[#allocation3 + $0x330] sm:$0xff]
        %v760 = vld [vmem:[#allocation3 + $0x338] sm:$0xff]
        %v761 = vld [vmem:[#allocation3 + $0x340] sm:$0xff]
        %v762 = vld [vmem:[#allocation3 + $0x348] sm:$0xff]
        %v763 = vld [vmem:[#allocation3 + $0x350] sm:$0xff]
        %v764 = vld [vmem:[#allocation3 + $0x358] sm:$0xff]
        %v765 = vld [vmem:[#allocation3 + $0x360] sm:$0xff]
        %v766 = vld [vmem:[#allocation3 + $0x368] sm:$0xff]
        %v767 = vld [vmem:[#allocation3 + $0x370] sm:$0xff]
        %v768 = vld [vmem:[#allocation3 + $0x378] sm:$0xff]
        %v769 = vld [vmem:[#allocation3 + $0x380] sm:$0xff]
        %v770 = vld [vmem:[#allocation3 + $0x388] sm:$0xff]
        %v771 = vld [vmem:[#allocation3 + $0x390] sm:$0xff]
        %v772 = vld [vmem:[#allocation3 + $0x398] sm:$0xff]
        %v773 = vld [vmem:[#allocation3 + $0x3a0] sm:$0xff]
        %v774 = vld [vmem:[#allocation3 + $0x3a8] sm:$0xff]
        %v775 = vld [vmem:[#allocation3 + $0x3b0] sm:$0xff]
        %v776 = vld [vmem:[#allocation3 + $0x3b8] sm:$0xff]
        %v777 = vld [vmem:[#allocation3 + $0x3c0] sm:$0xff]
        %v778 = vld [vmem:[#allocation3 + $0x3c8] sm:$0xff]
        %v779 = vld [vmem:[#allocation3 + $0x3d0] sm:$0xff]
        %v780 = vld [vmem:[#allocation3 + $0x3d8] sm:$0xff]
        %v781 = vld [vmem:[#allocation3 + $0x3e0] sm:$0xff]
        %v782 = vld [vmem:[#allocation3 + $0x3e8] sm:$0xff]
        %v783 = vld [vmem:[#allocation3 + $0x3f0] sm:$0xff]
        %v784 = vld [vmem:[#allocation3 + $0x3f8] sm:$0xff]
        %v785 = vld [vmem:[%s230] sm:$0xff]
        %v786 = vld [vmem:[%s230 + $0x8] sm:$0xf]
        %v787 = vld [vmem:[%s230 + $0xc] sm:$0xff]
        %v788 = vld [vmem:[%s230 + $0x14] sm:$0xf]
        %v789 = vld [vmem:[%s230 + $0x18] sm:$0xff]
        %v790 = vld [vmem:[%s230 + $0x20] sm:$0xf]
        %v791 = vld [vmem:[%s230 + $0x24] sm:$0xff]
        %v792 = vld [vmem:[%s230 + $0x2c] sm:$0xf]
        %v793 = vld [vmem:[%s230 + $0x30] sm:$0xff]
        %v794 = vld [vmem:[%s230 + $0x38] sm:$0xf]
        %v795 = vld [vmem:[%s230 + $0x3c] sm:$0xff]
        %v796 = vld [vmem:[%s230 + $0x44] sm:$0xf]
        %v797 = vld [vmem:[%s230 + $0x48] sm:$0xff]
        %v798 = vld [vmem:[%s230 + $0x50] sm:$0xf]
        %v799 = vld [vmem:[%s230 + $0x54] sm:$0xff]
        %v800 = vld [vmem:[%s230 + $0x5c] sm:$0xf]
        %v801 = vld [vmem:[%s230 + $0x60] sm:$0xff]
        %v802 = vld [vmem:[%s230 + $0x68] sm:$0xf]
        %v803 = vld [vmem:[%s230 + $0x6c] sm:$0xff]
        %v804 = vld [vmem:[%s230 + $0x74] sm:$0xf]
        %v805 = vld [vmem:[%s230 + $0x78] sm:$0xff]
        %v806 = vld [vmem:[%s230 + $0x80] sm:$0xf]
        %v807 = vld [vmem:[%s230 + $0x84] sm:$0xff]
        %v808 = vld [vmem:[%s230 + $0x8c] sm:$0xf]
        %v809 = vld [vmem:[%s230 + $0x90] sm:$0xff]
        %v810 = vld [vmem:[%s230 + $0x98] sm:$0xf]
        %v811 = vld [vmem:[%s230 + $0x9c] sm:$0xff]
        %v812 = vld [vmem:[%s230 + $0xa4] sm:$0xf]
        %v813 = vld [vmem:[%s230 + $0xa8] sm:$0xff]
        %v814 = vld [vmem:[%s230 + $0xb0] sm:$0xf]
        %v815 = vld [vmem:[%s230 + $0xb4] sm:$0xff]
        %v816 = vld [vmem:[%s230 + $0xbc] sm:$0xf]
        %v817 = vld [vmem:[%s230 + $0xc0] sm:$0xff]
        %v818 = vld [vmem:[%s230 + $0xc8] sm:$0xf]
        %v819 = vld [vmem:[%s230 + $0xcc] sm:$0xff]
        %v820 = vld [vmem:[%s230 + $0xd4] sm:$0xf]
        %v821 = vld [vmem:[%s230 + $0xd8] sm:$0xff]
        %v822 = vld [vmem:[%s230 + $0xe0] sm:$0xf]
        %v823 = vld [vmem:[%s230 + $0xe4] sm:$0xff]
        %v824 = vld [vmem:[%s230 + $0xec] sm:$0xf]
        %v825 = vld [vmem:[%s230 + $0xf0] sm:$0xff]
        %v826 = vld [vmem:[%s230 + $0xf8] sm:$0xf]
        %v827 = vld [vmem:[%s230 + $0xfc] sm:$0xff]
        %v828 = vld [vmem:[%s230 + $0x104] sm:$0xf]
        %v829 = vld [vmem:[%s230 + $0x108] sm:$0xff]
        %v830 = vld [vmem:[%s230 + $0x110] sm:$0xf]
        %v831 = vld [vmem:[%s230 + $0x114] sm:$0xff]
        %v832 = vld [vmem:[%s230 + $0x11c] sm:$0xf]
        %v833 = vld [vmem:[%s230 + $0x120] sm:$0xff]
        %v834 = vld [vmem:[%s230 + $0x128] sm:$0xf]
        %v835 = vld [vmem:[%s230 + $0x12c] sm:$0xff]
        %v836 = vld [vmem:[%s230 + $0x134] sm:$0xf]
        %v837 = vld [vmem:[%s230 + $0x138] sm:$0xff]
        %v838 = vld [vmem:[%s230 + $0x140] sm:$0xf]
        %v839 = vld [vmem:[%s230 + $0x144] sm:$0xff]
        %v840 = vld [vmem:[%s230 + $0x14c] sm:$0xf]
        %v841 = vld [vmem:[%s230 + $0x150] sm:$0xff]
        %v842 = vld [vmem:[%s230 + $0x158] sm:$0xf]
        %v843 = vld [vmem:[%s230 + $0x15c] sm:$0xff]
        %v844 = vld [vmem:[%s230 + $0x164] sm:$0xf]
        %v845 = vld [vmem:[%s230 + $0x168] sm:$0xff]
        %v846 = vld [vmem:[%s230 + $0x170] sm:$0xf]
        %v847 = vld [vmem:[%s230 + $0x174] sm:$0xff]
        %v848 = vld [vmem:[%s230 + $0x17c] sm:$0xf]
        %v849 = vld [vmem:[%s230 + $0x180] sm:$0xff]
        %v850 = vld [vmem:[%s230 + $0x188] sm:$0xf]
        %v851 = vld [vmem:[%s230 + $0x18c] sm:$0xff]
        %v852 = vld [vmem:[%s230 + $0x194] sm:$0xf]
        %v853 = vld [vmem:[%s230 + $0x198] sm:$0xff]
        %v854 = vld [vmem:[%s230 + $0x1a0] sm:$0xf]
        %v855 = vld [vmem:[%s230 + $0x1a4] sm:$0xff]
        %v856 = vld [vmem:[%s230 + $0x1ac] sm:$0xf]
        %v857 = vld [vmem:[%s230 + $0x1b0] sm:$0xff]
        %v858 = vld [vmem:[%s230 + $0x1b8] sm:$0xf]
        %v859 = vld [vmem:[%s230 + $0x1bc] sm:$0xff]
        %v860 = vld [vmem:[%s230 + $0x1c4] sm:$0xf]
        %v861 = vld [vmem:[%s230 + $0x1c8] sm:$0xff]
        %v862 = vld [vmem:[%s230 + $0x1d0] sm:$0xf]
        %v863 = vld [vmem:[%s230 + $0x1d4] sm:$0xff]
        %v864 = vld [vmem:[%s230 + $0x1dc] sm:$0xf]
        %v865 = vld [vmem:[%s230 + $0x1e0] sm:$0xff]
        %v866 = vld [vmem:[%s230 + $0x1e8] sm:$0xf]
        %v867 = vld [vmem:[%s230 + $0x1ec] sm:$0xff]
        %v868 = vld [vmem:[%s230 + $0x1f4] sm:$0xf]
        %v869 = vld [vmem:[%s230 + $0x1f8] sm:$0xff]
        %v870 = vld [vmem:[%s230 + $0x200] sm:$0xf]
        %v871 = vld [vmem:[%s230 + $0x204] sm:$0xff]
        %v872 = vld [vmem:[%s230 + $0x20c] sm:$0xf]
        %v873 = vld [vmem:[%s230 + $0x210] sm:$0xff]
        %v874 = vld [vmem:[%s230 + $0x218] sm:$0xf]
        %v875 = vld [vmem:[%s230 + $0x21c] sm:$0xff]
        %v876 = vld [vmem:[%s230 + $0x224] sm:$0xf]
        %v877 = vld [vmem:[%s230 + $0x228] sm:$0xff]
        %v878 = vld [vmem:[%s230 + $0x230] sm:$0xf]
        %v879 = vld [vmem:[%s230 + $0x234] sm:$0xff]
        %v880 = vld [vmem:[%s230 + $0x23c] sm:$0xf]
        %v881 = vld [vmem:[%s230 + $0x240] sm:$0xff]
        %v882 = vld [vmem:[%s230 + $0x248] sm:$0xf]
        %v883 = vld [vmem:[%s230 + $0x24c] sm:$0xff]
        %v884 = vld [vmem:[%s230 + $0x254] sm:$0xf]
        %v885 = vld [vmem:[%s230 + $0x258] sm:$0xff]
        %v886 = vld [vmem:[%s230 + $0x260] sm:$0xf]
        %v887 = vld [vmem:[%s230 + $0x264] sm:$0xff]
        %v888 = vld [vmem:[%s230 + $0x26c] sm:$0xf]
        %v889 = vld [vmem:[%s230 + $0x270] sm:$0xff]
        %v890 = vld [vmem:[%s230 + $0x278] sm:$0xf]
        %v891 = vld [vmem:[%s230 + $0x27c] sm:$0xff]
        %v892 = vld [vmem:[%s230 + $0x284] sm:$0xf]
        %v893 = vld [vmem:[%s230 + $0x288] sm:$0xff]
        %v894 = vld [vmem:[%s230 + $0x290] sm:$0xf]
        %v895 = vld [vmem:[%s230 + $0x294] sm:$0xff]
        %v896 = vld [vmem:[%s230 + $0x29c] sm:$0xf]
        %v897 = vld [vmem:[%s230 + $0x2a0] sm:$0xff]
        %v898 = vld [vmem:[%s230 + $0x2a8] sm:$0xf]
        %v899 = vld [vmem:[%s230 + $0x2ac] sm:$0xff]
        %v900 = vld [vmem:[%s230 + $0x2b4] sm:$0xf]
        %v901 = vld [vmem:[%s230 + $0x2b8] sm:$0xff]
        %v902 = vld [vmem:[%s230 + $0x2c0] sm:$0xf]
        %v903 = vld [vmem:[%s230 + $0x2c4] sm:$0xff]
        %v904 = vld [vmem:[%s230 + $0x2cc] sm:$0xf]
        %v905 = vld [vmem:[%s230 + $0x2d0] sm:$0xff]
        %v906 = vld [vmem:[%s230 + $0x2d8] sm:$0xf]
        %v907 = vld [vmem:[%s230 + $0x2dc] sm:$0xff]
        %v908 = vld [vmem:[%s230 + $0x2e4] sm:$0xf]
        %v909 = vld [vmem:[%s230 + $0x2e8] sm:$0xff]
        %v910 = vld [vmem:[%s230 + $0x2f0] sm:$0xf]
        %v911 = vld [vmem:[%s230 + $0x2f4] sm:$0xff]
        %v912 = vld [vmem:[%s230 + $0x2fc] sm:$0xf]
        %v1041 = vunpack.c.l.b16 %v657
        %v1042 = vunpack.c.h.b16 %v657
        %v1043 = vunpack.c.l.b16 %v658
        %v1044 = vunpack.c.h.b16 %v658
        %v1045 = vunpack.c.l.b16 %v659
        %v1046 = vunpack.c.h.b16 %v659
        %v1047 = vunpack.c.l.b16 %v660
        %v1048 = vunpack.c.h.b16 %v660
        %v1049 = vunpack.c.l.b16 %v661
        %v1050 = vunpack.c.h.b16 %v661
        %v1051 = vunpack.c.l.b16 %v662
        %v1052 = vunpack.c.h.b16 %v662
        %v1053 = vunpack.c.l.b16 %v663
        %v1054 = vunpack.c.h.b16 %v663
        %v1055 = vunpack.c.l.b16 %v664
        %v1056 = vunpack.c.h.b16 %v664
        %v1057 = vunpack.c.l.b16 %v665
        %v1058 = vunpack.c.h.b16 %v665
        %v1059 = vunpack.c.l.b16 %v666
        %v1060 = vunpack.c.h.b16 %v666
        %v1061 = vunpack.c.l.b16 %v667
        %v1062 = vunpack.c.h.b16 %v667
        %v1063 = vunpack.c.l.b16 %v668
        %v1064 = vunpack.c.h.b16 %v668
        %v1065 = vunpack.c.l.b16 %v669
        %v1066 = vunpack.c.h.b16 %v669
        %v1067 = vunpack.c.l.b16 %v670
        %v1068 = vunpack.c.h.b16 %v670
        %v1069 = vunpack.c.l.b16 %v671
        %v1070 = vunpack.c.h.b16 %v671
        %v1071 = vunpack.c.l.b16 %v672
        %v1072 = vunpack.c.h.b16 %v672
        %v1073 = vunpack.c.l.b16 %v673
        %v1074 = vunpack.c.h.b16 %v673
        %v1075 = vunpack.c.l.b16 %v674
        %v1076 = vunpack.c.h.b16 %v674
        %v1077 = vunpack.c.l.b16 %v675
        %v1078 = vunpack.c.h.b16 %v675
        %v1079 = vunpack.c.l.b16 %v676
        %v1080 = vunpack.c.h.b16 %v676
        %v1081 = vunpack.c.l.b16 %v677
        %v1082 = vunpack.c.h.b16 %v677
        %v1083 = vunpack.c.l.b16 %v678
        %v1084 = vunpack.c.h.b16 %v678
        %v1085 = vunpack.c.l.b16 %v679
        %v1086 = vunpack.c.h.b16 %v679
        %v1087 = vunpack.c.l.b16 %v680
        %v1088 = vunpack.c.h.b16 %v680
        %v1089 = vunpack.c.l.b16 %v681
        %v1090 = vunpack.c.h.b16 %v681
        %v1091 = vunpack.c.l.b16 %v682
        %v1092 = vunpack.c.h.b16 %v682
        %v1093 = vunpack.c.l.b16 %v683
        %v1094 = vunpack.c.h.b16 %v683
        %v1095 = vunpack.c.l.b16 %v684
        %v1096 = vunpack.c.h.b16 %v684
        %v1097 = vunpack.c.l.b16 %v685
        %v1098 = vunpack.c.h.b16 %v685
        %v1099 = vunpack.c.l.b16 %v686
        %v1100 = vunpack.c.h.b16 %v686
        %v1101 = vunpack.c.l.b16 %v687
        %v1102 = vunpack.c.h.b16 %v687
        %v1103 = vunpack.c.l.b16 %v688
        %v1104 = vunpack.c.h.b16 %v688
        %v1105 = vunpack.c.l.b16 %v689
        %v1106 = vunpack.c.h.b16 %v689
        %v1107 = vunpack.c.l.b16 %v690
        %v1108 = vunpack.c.h.b16 %v690
        %v1109 = vunpack.c.l.b16 %v691
        %v1110 = vunpack.c.h.b16 %v691
        %v1111 = vunpack.c.l.b16 %v692
        %v1112 = vunpack.c.h.b16 %v692
        %v1113 = vunpack.c.l.b16 %v693
        %v1114 = vunpack.c.h.b16 %v693
        %v1115 = vunpack.c.l.b16 %v694
        %v1116 = vunpack.c.h.b16 %v694
        %v1117 = vunpack.c.l.b16 %v695
        %v1118 = vunpack.c.h.b16 %v695
        %v1119 = vunpack.c.l.b16 %v696
        %v1120 = vunpack.c.h.b16 %v696
        %v1121 = vunpack.c.l.b16 %v697
        %v1122 = vunpack.c.h.b16 %v697
        %v1123 = vunpack.c.l.b16 %v698
        %v1124 = vunpack.c.h.b16 %v698
        %v1125 = vunpack.c.l.b16 %v699
        %v1126 = vunpack.c.h.b16 %v699
        %v1127 = vunpack.c.l.b16 %v700
        %v1128 = vunpack.c.h.b16 %v700
        %v1129 = vunpack.c.l.b16 %v701
        %v1130 = vunpack.c.h.b16 %v701
        %v1131 = vunpack.c.l.b16 %v702
        %v1132 = vunpack.c.h.b16 %v702
        %v1133 = vunpack.c.l.b16 %v703
        %v1134 = vunpack.c.h.b16 %v703
        %v1135 = vunpack.c.l.b16 %v704
        %v1136 = vunpack.c.h.b16 %v704
        %v1137 = vunpack.c.l.b16 %v705
        %v1138 = vunpack.c.h.b16 %v705
        %v1139 = vunpack.c.l.b16 %v706
        %v1140 = vunpack.c.h.b16 %v706
        %v1141 = vunpack.c.l.b16 %v707
        %v1142 = vunpack.c.h.b16 %v707
        %v1143 = vunpack.c.l.b16 %v708
        %v1144 = vunpack.c.h.b16 %v708
        %v1145 = vunpack.c.l.b16 %v709
        %v1146 = vunpack.c.h.b16 %v709
        %v1147 = vunpack.c.l.b16 %v710
        %v1148 = vunpack.c.h.b16 %v710
        %v1149 = vunpack.c.l.b16 %v711
        %v1150 = vunpack.c.h.b16 %v711
        %v1151 = vunpack.c.l.b16 %v712
        %v1152 = vunpack.c.h.b16 %v712
        %v1153 = vunpack.c.l.b16 %v713
        %v1154 = vunpack.c.h.b16 %v713
        %v1155 = vunpack.c.l.b16 %v714
        %v1156 = vunpack.c.h.b16 %v714
        %v1157 = vunpack.c.l.b16 %v715
        %v1158 = vunpack.c.h.b16 %v715
        %v1159 = vunpack.c.l.b16 %v716
        %v1160 = vunpack.c.h.b16 %v716
        %v1161 = vunpack.c.l.b16 %v717
        %v1162 = vunpack.c.h.b16 %v717
        %v1163 = vunpack.c.l.b16 %v718
        %v1164 = vunpack.c.h.b16 %v718
        %v1165 = vunpack.c.l.b16 %v719
        %v1166 = vunpack.c.h.b16 %v719
        %v1167 = vunpack.c.l.b16 %v720
        %v1168 = vunpack.c.h.b16 %v720
        %v1169 = vunpack.c.l.b16 %v721
        %v1170 = vunpack.c.h.b16 %v721
        %v1171 = vunpack.c.l.b16 %v722
        %v1172 = vunpack.c.h.b16 %v722
        %v1173 = vunpack.c.l.b16 %v723
        %v1174 = vunpack.c.h.b16 %v723
        %v1175 = vunpack.c.l.b16 %v724
        %v1176 = vunpack.c.h.b16 %v724
        %v1177 = vunpack.c.l.b16 %v725
        %v1178 = vunpack.c.h.b16 %v725
        %v1179 = vunpack.c.l.b16 %v726
        %v1180 = vunpack.c.h.b16 %v726
        %v1181 = vunpack.c.l.b16 %v727
        %v1182 = vunpack.c.h.b16 %v727
        %v1183 = vunpack.c.l.b16 %v728
        %v1184 = vunpack.c.h.b16 %v728
        %v1185 = vunpack.c.l.b16 %v729
        %v1186 = vunpack.c.h.b16 %v729
        %v1187 = vunpack.c.l.b16 %v730
        %v1188 = vunpack.c.h.b16 %v730
        %v1189 = vunpack.c.l.b16 %v731
        %v1190 = vunpack.c.h.b16 %v731
        %v1191 = vunpack.c.l.b16 %v732
        %v1192 = vunpack.c.h.b16 %v732
        %v1193 = vunpack.c.l.b16 %v733
        %v1194 = vunpack.c.h.b16 %v733
        %v1195 = vunpack.c.l.b16 %v734
        %v1196 = vunpack.c.h.b16 %v734
        %v1197 = vunpack.c.l.b16 %v735
        %v1198 = vunpack.c.h.b16 %v735
        %v1199 = vunpack.c.l.b16 %v736
        %v1200 = vunpack.c.h.b16 %v736
        %v1201 = vunpack.c.l.b16 %v737
        %v1202 = vunpack.c.h.b16 %v737
        %v1203 = vunpack.c.l.b16 %v738
        %v1204 = vunpack.c.h.b16 %v738
        %v1205 = vunpack.c.l.b16 %v739
        %v1206 = vunpack.c.h.b16 %v739
        %v1207 = vunpack.c.l.b16 %v740
        %v1208 = vunpack.c.h.b16 %v740
        %v1209 = vunpack.c.l.b16 %v741
        %v1210 = vunpack.c.h.b16 %v741
        %v1211 = vunpack.c.l.b16 %v742
        %v1212 = vunpack.c.h.b16 %v742
        %v1213 = vunpack.c.l.b16 %v743
        %v1214 = vunpack.c.h.b16 %v743
        %v1215 = vunpack.c.l.b16 %v744
        %v1216 = vunpack.c.h.b16 %v744
        %v1217 = vunpack.c.l.b16 %v745
        %v1218 = vunpack.c.h.b16 %v745
        %v1219 = vunpack.c.l.b16 %v746
        %v1220 = vunpack.c.h.b16 %v746
        %v1221 = vunpack.c.l.b16 %v747
        %v1222 = vunpack.c.h.b16 %v747
        %v1223 = vunpack.c.l.b16 %v748
        %v1224 = vunpack.c.h.b16 %v748
        %v1225 = vunpack.c.l.b16 %v749
        %v1226 = vunpack.c.h.b16 %v749
        %v1227 = vunpack.c.l.b16 %v750
        %v1228 = vunpack.c.h.b16 %v750
        %v1229 = vunpack.c.l.b16 %v751
        %v1230 = vunpack.c.h.b16 %v751
        %v1231 = vunpack.c.l.b16 %v752
        %v1232 = vunpack.c.h.b16 %v752
        %v1233 = vunpack.c.l.b16 %v753
        %v1234 = vunpack.c.h.b16 %v753
        %v1235 = vunpack.c.l.b16 %v754
        %v1236 = vunpack.c.h.b16 %v754
        %v1237 = vunpack.c.l.b16 %v755
        %v1238 = vunpack.c.h.b16 %v755
        %v1239 = vunpack.c.l.b16 %v756
        %v1240 = vunpack.c.h.b16 %v756
        %v1241 = vunpack.c.l.b16 %v757
        %v1242 = vunpack.c.h.b16 %v757
        %v1243 = vunpack.c.l.b16 %v758
        %v1244 = vunpack.c.h.b16 %v758
        %v1245 = vunpack.c.l.b16 %v759
        %v1246 = vunpack.c.h.b16 %v759
        %v1247 = vunpack.c.l.b16 %v760
        %v1248 = vunpack.c.h.b16 %v760
        %v1249 = vunpack.c.l.b16 %v761
        %v1250 = vunpack.c.h.b16 %v761
        %v1251 = vunpack.c.l.b16 %v762
        %v1252 = vunpack.c.h.b16 %v762
        %v1253 = vunpack.c.l.b16 %v763
        %v1254 = vunpack.c.h.b16 %v763
        %v1255 = vunpack.c.l.b16 %v764
        %v1256 = vunpack.c.h.b16 %v764
        %v1257 = vunpack.c.l.b16 %v765
        %v1258 = vunpack.c.h.b16 %v765
        %v1259 = vunpack.c.l.b16 %v766
        %v1260 = vunpack.c.h.b16 %v766
        %v1261 = vunpack.c.l.b16 %v767
        %v1262 = vunpack.c.h.b16 %v767
        %v1263 = vunpack.c.l.b16 %v768
        %v1264 = vunpack.c.h.b16 %v768
        %v1265 = vunpack.c.l.b16 %v769
        %v1266 = vunpack.c.h.b16 %v769
        %v1267 = vunpack.c.l.b16 %v770
        %v1268 = vunpack.c.h.b16 %v770
        %v1269 = vunpack.c.l.b16 %v771
        %v1270 = vunpack.c.h.b16 %v771
        %v1271 = vunpack.c.l.b16 %v772
        %v1272 = vunpack.c.h.b16 %v772
        %v1273 = vunpack.c.l.b16 %v773
        %v1274 = vunpack.c.h.b16 %v773
        %v1275 = vunpack.c.l.b16 %v774
        %v1276 = vunpack.c.h.b16 %v774
        %v1277 = vunpack.c.l.b16 %v775
        %v1278 = vunpack.c.h.b16 %v775
        %v1279 = vunpack.c.l.b16 %v776
        %v1280 = vunpack.c.h.b16 %v776
        %v1281 = vunpack.c.l.b16 %v777
        %v1282 = vunpack.c.h.b16 %v777
        %v1283 = vunpack.c.l.b16 %v778
        %v1284 = vunpack.c.h.b16 %v778
        %v1285 = vunpack.c.l.b16 %v779
        %v1286 = vunpack.c.h.b16 %v779
        %v1287 = vunpack.c.l.b16 %v780
        %v1288 = vunpack.c.h.b16 %v780
        %v1289 = vunpack.c.l.b16 %v781
        %v1290 = vunpack.c.h.b16 %v781
        %v1291 = vunpack.c.l.b16 %v782
        %v1292 = vunpack.c.h.b16 %v782
        %v1293 = vunpack.c.l.b16 %v783
        %v1294 = vunpack.c.h.b16 %v783
        %v1295 = vunpack.c.l.b16 %v784
        %v1296 = vunpack.c.h.b16 %v784
        %v1297 = vpack.c.b16 %v1045, %v1041
        %v1298 = vpack.c.b16 %v1046, %v1042
        %v1299 = vpack.c.b16 %v1047, %v1043
        %v1300 = vpack.c.b16 %v1048, %v1044
        %v1301 = vpack.c.b16 %v1053, %v1049
        %v1302 = vpack.c.b16 %v1054, %v1050
        %v1303 = vpack.c.b16 %v1055, %v1051
        %v1304 = vpack.c.b16 %v1056, %v1052
        %v1305 = vpack.c.b16 %v1061, %v1057
        %v1306 = vpack.c.b16 %v1062, %v1058
        %v1307 = vpack.c.b16 %v1063, %v1059
        %v1308 = vpack.c.b16 %v1064, %v1060
        %v1309 = vpack.c.b16 %v1069, %v1065
        %v1310 = vpack.c.b16 %v1070, %v1066
        %v1311 = vpack.c.b16 %v1071, %v1067
        %v1312 = vpack.c.b16 %v1072, %v1068
        %v1313 = vpack.c.b16 %v1077, %v1073
        %v1314 = vpack.c.b16 %v1078, %v1074
        %v1315 = vpack.c.b16 %v1079, %v1075
        %v1316 = vpack.c.b16 %v1080, %v1076
        %v1317 = vpack.c.b16 %v1085, %v1081
        %v1318 = vpack.c.b16 %v1086, %v1082
        %v1319 = vpack.c.b16 %v1087, %v1083
        %v1320 = vpack.c.b16 %v1088, %v1084
        %v1321 = vpack.c.b16 %v1093, %v1089
        %v1322 = vpack.c.b16 %v1094, %v1090
        %v1323 = vpack.c.b16 %v1095, %v1091
        %v1324 = vpack.c.b16 %v1096, %v1092
        %v1325 = vpack.c.b16 %v1101, %v1097
        %v1326 = vpack.c.b16 %v1102, %v1098
        %v1327 = vpack.c.b16 %v1103, %v1099
        %v1328 = vpack.c.b16 %v1104, %v1100
        %v1329 = vpack.c.b16 %v1109, %v1105
        %v1330 = vpack.c.b16 %v1110, %v1106
        %v1331 = vpack.c.b16 %v1111, %v1107
        %v1332 = vpack.c.b16 %v1112, %v1108
        %v1333 = vpack.c.b16 %v1117, %v1113
        %v1334 = vpack.c.b16 %v1118, %v1114
        %v1335 = vpack.c.b16 %v1119, %v1115
        %v1336 = vpack.c.b16 %v1120, %v1116
        %v1337 = vpack.c.b16 %v1125, %v1121
        %v1338 = vpack.c.b16 %v1126, %v1122
        %v1339 = vpack.c.b16 %v1127, %v1123
        %v1340 = vpack.c.b16 %v1128, %v1124
        %v1341 = vpack.c.b16 %v1133, %v1129
        %v1342 = vpack.c.b16 %v1134, %v1130
        %v1343 = vpack.c.b16 %v1135, %v1131
        %v1344 = vpack.c.b16 %v1136, %v1132
        %v1345 = vpack.c.b16 %v1141, %v1137
        %v1346 = vpack.c.b16 %v1142, %v1138
        %v1347 = vpack.c.b16 %v1143, %v1139
        %v1348 = vpack.c.b16 %v1144, %v1140
        %v1349 = vpack.c.b16 %v1149, %v1145
        %v1350 = vpack.c.b16 %v1150, %v1146
        %v1351 = vpack.c.b16 %v1151, %v1147
        %v1352 = vpack.c.b16 %v1152, %v1148
        %v1353 = vpack.c.b16 %v1157, %v1153
        %v1354 = vpack.c.b16 %v1158, %v1154
        %v1355 = vpack.c.b16 %v1159, %v1155
        %v1356 = vpack.c.b16 %v1160, %v1156
        %v1357 = vpack.c.b16 %v1165, %v1161
        %v1358 = vpack.c.b16 %v1166, %v1162
        %v1359 = vpack.c.b16 %v1167, %v1163
        %v1360 = vpack.c.b16 %v1168, %v1164
        %v1361 = vpack.c.b16 %v1173, %v1169
        %v1362 = vpack.c.b16 %v1174, %v1170
        %v1363 = vpack.c.b16 %v1175, %v1171
        %v1364 = vpack.c.b16 %v1176, %v1172
        %v1365 = vpack.c.b16 %v1181, %v1177
        %v1366 = vpack.c.b16 %v1182, %v1178
        %v1367 = vpack.c.b16 %v1183, %v1179
        %v1368 = vpack.c.b16 %v1184, %v1180
        %v1369 = vpack.c.b16 %v1189, %v1185
        %v1370 = vpack.c.b16 %v1190, %v1186
        %v1371 = vpack.c.b16 %v1191, %v1187
        %v1372 = vpack.c.b16 %v1192, %v1188
        %v1373 = vpack.c.b16 %v1197, %v1193
        %v1374 = vpack.c.b16 %v1198, %v1194
        %v1375 = vpack.c.b16 %v1199, %v1195
        %v1376 = vpack.c.b16 %v1200, %v1196
        %v1377 = vpack.c.b16 %v1205, %v1201
        %v1378 = vpack.c.b16 %v1206, %v1202
        %v1379 = vpack.c.b16 %v1207, %v1203
        %v1380 = vpack.c.b16 %v1208, %v1204
        %v1381 = vpack.c.b16 %v1213, %v1209
        %v1382 = vpack.c.b16 %v1214, %v1210
        %v1383 = vpack.c.b16 %v1215, %v1211
        %v1384 = vpack.c.b16 %v1216, %v1212
        %v1385 = vpack.c.b16 %v1221, %v1217
        %v1386 = vpack.c.b16 %v1222, %v1218
        %v1387 = vpack.c.b16 %v1223, %v1219
        %v1388 = vpack.c.b16 %v1224, %v1220
        %v1389 = vpack.c.b16 %v1229, %v1225
        %v1390 = vpack.c.b16 %v1230, %v1226
        %v1391 = vpack.c.b16 %v1231, %v1227
        %v1392 = vpack.c.b16 %v1232, %v1228
        %v1393 = vpack.c.b16 %v1237, %v1233
        %v1394 = vpack.c.b16 %v1238, %v1234
        %v1395 = vpack.c.b16 %v1239, %v1235
        %v1396 = vpack.c.b16 %v1240, %v1236
        %v1397 = vpack.c.b16 %v1245, %v1241
        %v1398 = vpack.c.b16 %v1246, %v1242
        %v1399 = vpack.c.b16 %v1247, %v1243
        %v1400 = vpack.c.b16 %v1248, %v1244
        %v1401 = vpack.c.b16 %v1253, %v1249
        %v1402 = vpack.c.b16 %v1254, %v1250
        %v1403 = vpack.c.b16 %v1255, %v1251
        %v1404 = vpack.c.b16 %v1256, %v1252
        %v1405 = vpack.c.b16 %v1261, %v1257
        %v1406 = vpack.c.b16 %v1262, %v1258
        %v1407 = vpack.c.b16 %v1263, %v1259
        %v1408 = vpack.c.b16 %v1264, %v1260
        %v1409 = vpack.c.b16 %v1269, %v1265
        %v1410 = vpack.c.b16 %v1270, %v1266
        %v1411 = vpack.c.b16 %v1271, %v1267
        %v1412 = vpack.c.b16 %v1272, %v1268
        %v1413 = vpack.c.b16 %v1277, %v1273
        %v1414 = vpack.c.b16 %v1278, %v1274
        %v1415 = vpack.c.b16 %v1279, %v1275
        %v1416 = vpack.c.b16 %v1280, %v1276
        %v1417 = vpack.c.b16 %v1285, %v1281
        %v1418 = vpack.c.b16 %v1286, %v1282
        %v1419 = vpack.c.b16 %v1287, %v1283
        %v1420 = vpack.c.b16 %v1288, %v1284
        %v1421 = vpack.c.b16 %v1293, %v1289
        %v1422 = vpack.c.b16 %v1294, %v1290
        %v1423 = vpack.c.b16 %v1295, %v1291
        %v1424 = vpack.c.b16 %v1296, %v1292
        %v1681 = vunpack.c.l.b16 %v785
        %v1682 = vunpack.c.h.b16 %v785
        %v1683 = vunpack.c.l.b16 %v786
        %v1684 = vunpack.c.l.b16 %v787
        %v1685 = vunpack.c.h.b16 %v787
        %v1686 = vunpack.c.l.b16 %v788
        %v1687 = vunpack.c.l.b16 %v789
        %v1688 = vunpack.c.h.b16 %v789
        %v1689 = vunpack.c.l.b16 %v790
        %v1690 = vunpack.c.l.b16 %v791
        %v1691 = vunpack.c.h.b16 %v791
        %v1692 = vunpack.c.l.b16 %v792
        %v1693 = vunpack.c.l.b16 %v793
        %v1694 = vunpack.c.h.b16 %v793
        %v1695 = vunpack.c.l.b16 %v794
        %v1696 = vunpack.c.l.b16 %v795
        %v1697 = vunpack.c.h.b16 %v795
        %v1698 = vunpack.c.l.b16 %v796
        %v1699 = vunpack.c.l.b16 %v797
        %v1700 = vunpack.c.h.b16 %v797
        %v1701 = vunpack.c.l.b16 %v798
        %v1702 = vunpack.c.l.b16 %v799
        %v1703 = vunpack.c.h.b16 %v799
        %v1704 = vunpack.c.l.b16 %v800
        %v1705 = vunpack.c.l.b16 %v801
        %v1706 = vunpack.c.h.b16 %v801
        %v1707 = vunpack.c.l.b16 %v802
        %v1708 = vunpack.c.l.b16 %v803
        %v1709 = vunpack.c.h.b16 %v803
        %v1710 = vunpack.c.l.b16 %v804
        %v1711 = vunpack.c.l.b16 %v805
        %v1712 = vunpack.c.h.b16 %v805
        %v1713 = vunpack.c.l.b16 %v806
        %v1714 = vunpack.c.l.b16 %v807
        %v1715 = vunpack.c.h.b16 %v807
        %v1716 = vunpack.c.l.b16 %v808
        %v1717 = vunpack.c.l.b16 %v809
        %v1718 = vunpack.c.h.b16 %v809
        %v1719 = vunpack.c.l.b16 %v810
        %v1720 = vunpack.c.l.b16 %v811
        %v1721 = vunpack.c.h.b16 %v811
        %v1722 = vunpack.c.l.b16 %v812
        %v1723 = vunpack.c.l.b16 %v813
        %v1724 = vunpack.c.h.b16 %v813
        %v1725 = vunpack.c.l.b16 %v814
        %v1726 = vunpack.c.l.b16 %v815
        %v1727 = vunpack.c.h.b16 %v815
        %v1728 = vunpack.c.l.b16 %v816
        %v1729 = vunpack.c.l.b16 %v817
        %v1730 = vunpack.c.h.b16 %v817
        %v1731 = vunpack.c.l.b16 %v818
        %v1732 = vunpack.c.l.b16 %v819
        %v1733 = vunpack.c.h.b16 %v819
        %v1734 = vunpack.c.l.b16 %v820
        %v1735 = vunpack.c.l.b16 %v821
        %v1736 = vunpack.c.h.b16 %v821
        %v1737 = vunpack.c.l.b16 %v822
        %v1738 = vunpack.c.l.b16 %v823
        %v1739 = vunpack.c.h.b16 %v823
        %v1740 = vunpack.c.l.b16 %v824
        %v1741 = vunpack.c.l.b16 %v825
        %v1742 = vunpack.c.h.b16 %v825
        %v1743 = vunpack.c.l.b16 %v826
        %v1744 = vunpack.c.l.b16 %v827
        %v1745 = vunpack.c.h.b16 %v827
        %v1746 = vunpack.c.l.b16 %v828
        %v1747 = vunpack.c.l.b16 %v829
        %v1748 = vunpack.c.h.b16 %v829
        %v1749 = vunpack.c.l.b16 %v830
        %v1750 = vunpack.c.l.b16 %v831
        %v1751 = vunpack.c.h.b16 %v831
        %v1752 = vunpack.c.l.b16 %v832
        %v1753 = vunpack.c.l.b16 %v833
        %v1754 = vunpack.c.h.b16 %v833
        %v1755 = vunpack.c.l.b16 %v834
        %v1756 = vunpack.c.l.b16 %v835
        %v1757 = vunpack.c.h.b16 %v835
        %v1758 = vunpack.c.l.b16 %v836
        %v1759 = vunpack.c.l.b16 %v837
        %v1760 = vunpack.c.h.b16 %v837
        %v1761 = vunpack.c.l.b16 %v838
        %v1762 = vunpack.c.l.b16 %v839
        %v1763 = vunpack.c.h.b16 %v839
        %v1764 = vunpack.c.l.b16 %v840
        %v1765 = vunpack.c.l.b16 %v841
        %v1766 = vunpack.c.h.b16 %v841
        %v1767 = vunpack.c.l.b16 %v842
        %v1768 = vunpack.c.l.b16 %v843
        %v1769 = vunpack.c.h.b16 %v843
        %v1770 = vunpack.c.l.b16 %v844
        %v1771 = vunpack.c.l.b16 %v845
        %v1772 = vunpack.c.h.b16 %v845
        %v1773 = vunpack.c.l.b16 %v846
        %v1774 = vunpack.c.l.b16 %v847
        %v1775 = vunpack.c.h.b16 %v847
        %v1776 = vunpack.c.l.b16 %v848
        %v1777 = vunpack.c.l.b16 %v849
        %v1778 = vunpack.c.h.b16 %v849
        %v1779 = vunpack.c.l.b16 %v850
        %v1780 = vunpack.c.l.b16 %v851
        %v1781 = vunpack.c.h.b16 %v851
        %v1782 = vunpack.c.l.b16 %v852
        %v1783 = vunpack.c.l.b16 %v853
        %v1784 = vunpack.c.h.b16 %v853
        %v1785 = vunpack.c.l.b16 %v854
        %v1786 = vunpack.c.l.b16 %v855
        %v1787 = vunpack.c.h.b16 %v855
        %v1788 = vunpack.c.l.b16 %v856
        %v1789 = vunpack.c.l.b16 %v857
        %v1790 = vunpack.c.h.b16 %v857
        %v1791 = vunpack.c.l.b16 %v858
        %v1792 = vunpack.c.l.b16 %v859
        %v1793 = vunpack.c.h.b16 %v859
        %v1794 = vunpack.c.l.b16 %v860
        %v1795 = vunpack.c.l.b16 %v861
        %v1796 = vunpack.c.h.b16 %v861
        %v1797 = vunpack.c.l.b16 %v862
        %v1798 = vunpack.c.l.b16 %v863
        %v1799 = vunpack.c.h.b16 %v863
        %v1800 = vunpack.c.l.b16 %v864
        %v1801 = vunpack.c.l.b16 %v865
        %v1802 = vunpack.c.h.b16 %v865
        %v1803 = vunpack.c.l.b16 %v866
        %v1804 = vunpack.c.l.b16 %v867
        %v1805 = vunpack.c.h.b16 %v867
        %v1806 = vunpack.c.l.b16 %v868
        %v1807 = vunpack.c.l.b16 %v869
        %v1808 = vunpack.c.h.b16 %v869
        %v1809 = vunpack.c.l.b16 %v870
        %v1810 = vunpack.c.l.b16 %v871
        %v1811 = vunpack.c.h.b16 %v871
        %v1812 = vunpack.c.l.b16 %v872
        %v1813 = vunpack.c.l.b16 %v873
        %v1814 = vunpack.c.h.b16 %v873
        %v1815 = vunpack.c.l.b16 %v874
        %v1816 = vunpack.c.l.b16 %v875
        %v1817 = vunpack.c.h.b16 %v875
        %v1818 = vunpack.c.l.b16 %v876
        %v1819 = vunpack.c.l.b16 %v877
        %v1820 = vunpack.c.h.b16 %v877
        %v1821 = vunpack.c.l.b16 %v878
        %v1822 = vunpack.c.l.b16 %v879
        %v1823 = vunpack.c.h.b16 %v879
        %v1824 = vunpack.c.l.b16 %v880
        %v1825 = vunpack.c.l.b16 %v881
        %v1826 = vunpack.c.h.b16 %v881
        %v1827 = vunpack.c.l.b16 %v882
        %v1828 = vunpack.c.l.b16 %v883
        %v1829 = vunpack.c.h.b16 %v883
        %v1830 = vunpack.c.l.b16 %v884
        %v1831 = vunpack.c.l.b16 %v885
        %v1832 = vunpack.c.h.b16 %v885
        %v1833 = vunpack.c.l.b16 %v886
        %v1834 = vunpack.c.l.b16 %v887
        %v1835 = vunpack.c.h.b16 %v887
        %v1836 = vunpack.c.l.b16 %v888
        %v1837 = vunpack.c.l.b16 %v889
        %v1838 = vunpack.c.h.b16 %v889
        %v1839 = vunpack.c.l.b16 %v890
        %v1840 = vunpack.c.l.b16 %v891
        %v1841 = vunpack.c.h.b16 %v891
        %v1842 = vunpack.c.l.b16 %v892
        %v1843 = vunpack.c.l.b16 %v893
        %v1844 = vunpack.c.h.b16 %v893
        %v1845 = vunpack.c.l.b16 %v894
        %v1846 = vunpack.c.l.b16 %v895
        %v1847 = vunpack.c.h.b16 %v895
        %v1848 = vunpack.c.l.b16 %v896
        %v1849 = vunpack.c.l.b16 %v897
        %v1850 = vunpack.c.h.b16 %v897
        %v1851 = vunpack.c.l.b16 %v898
        %v1852 = vunpack.c.l.b16 %v899
        %v1853 = vunpack.c.h.b16 %v899
        %v1854 = vunpack.c.l.b16 %v900
        %v1855 = vunpack.c.l.b16 %v901
        %v1856 = vunpack.c.h.b16 %v901
        %v1857 = vunpack.c.l.b16 %v902
        %v1858 = vunpack.c.l.b16 %v903
        %v1859 = vunpack.c.h.b16 %v903
        %v1860 = vunpack.c.l.b16 %v904
        %v1861 = vunpack.c.l.b16 %v905
        %v1862 = vunpack.c.h.b16 %v905
        %v1863 = vunpack.c.l.b16 %v906
        %v1864 = vunpack.c.l.b16 %v907
        %v1865 = vunpack.c.h.b16 %v907
        %v1866 = vunpack.c.l.b16 %v908
        %v1867 = vunpack.c.l.b16 %v909
        %v1868 = vunpack.c.h.b16 %v909
        %v1869 = vunpack.c.l.b16 %v910
        %v1870 = vunpack.c.l.b16 %v911
        %v1871 = vunpack.c.h.b16 %v911
        %v1872 = vunpack.c.l.b16 %v912
        %v1873 = vpack.c.b16 %v1684, %v1681
        %v1874 = vpack.c.b16 %v1685, %v1682
        %v1875 = vpack.c.b16 %v1686, %v1683
        %v1876 = vpack.c.b16 %v1690, %v1687
        %v1877 = vpack.c.b16 %v1691, %v1688
        %v1878 = vpack.c.b16 %v1692, %v1689
        %v1879 = vpack.c.b16 %v1696, %v1693
        %v1880 = vpack.c.b16 %v1697, %v1694
        %v1881 = vpack.c.b16 %v1698, %v1695
        %v1882 = vpack.c.b16 %v1702, %v1699
        %v1883 = vpack.c.b16 %v1703, %v1700
        %v1884 = vpack.c.b16 %v1704, %v1701
        %v1885 = vpack.c.b16 %v1708, %v1705
        %v1886 = vpack.c.b16 %v1709, %v1706
        %v1887 = vpack.c.b16 %v1710, %v1707
        %v1888 = vpack.c.b16 %v1714, %v1711
        %v1889 = vpack.c.b16 %v1715, %v1712
        %v1890 = vpack.c.b16 %v1716, %v1713
        %v1891 = vpack.c.b16 %v1720, %v1717
        %v1892 = vpack.c.b16 %v1721, %v1718
        %v1893 = vpack.c.b16 %v1722, %v1719
        %v1894 = vpack.c.b16 %v1726, %v1723
        %v1895 = vpack.c.b16 %v1727, %v1724
        %v1896 = vpack.c.b16 %v1728, %v1725
        %v1897 = vpack.c.b16 %v1732, %v1729
        %v1898 = vpack.c.b16 %v1733, %v1730
        %v1899 = vpack.c.b16 %v1734, %v1731
        %v1900 = vpack.c.b16 %v1738, %v1735
        %v1901 = vpack.c.b16 %v1739, %v1736
        %v1902 = vpack.c.b16 %v1740, %v1737
        %v1903 = vpack.c.b16 %v1744, %v1741
        %v1904 = vpack.c.b16 %v1745, %v1742
        %v1905 = vpack.c.b16 %v1746, %v1743
        %v1906 = vpack.c.b16 %v1750, %v1747
        %v1907 = vpack.c.b16 %v1751, %v1748
        %v1908 = vpack.c.b16 %v1752, %v1749
        %v1909 = vpack.c.b16 %v1756, %v1753
        %v1910 = vpack.c.b16 %v1757, %v1754
        %v1911 = vpack.c.b16 %v1758, %v1755
        %v1912 = vpack.c.b16 %v1762, %v1759
        %v1913 = vpack.c.b16 %v1763, %v1760
        %v1914 = vpack.c.b16 %v1764, %v1761
        %v1915 = vpack.c.b16 %v1768, %v1765
        %v1916 = vpack.c.b16 %v1769, %v1766
        %v1917 = vpack.c.b16 %v1770, %v1767
        %v1918 = vpack.c.b16 %v1774, %v1771
        %v1919 = vpack.c.b16 %v1775, %v1772
        %v1920 = vpack.c.b16 %v1776, %v1773
        %v1921 = vpack.c.b16 %v1780, %v1777
        %v1922 = vpack.c.b16 %v1781, %v1778
        %v1923 = vpack.c.b16 %v1782, %v1779
        %v1924 = vpack.c.b16 %v1786, %v1783
        %v1925 = vpack.c.b16 %v1787, %v1784
        %v1926 = vpack.c.b16 %v1788, %v1785
        %v1927 = vpack.c.b16 %v1792, %v1789
        %v1928 = vpack.c.b16 %v1793, %v1790
        %v1929 = vpack.c.b16 %v1794, %v1791
        %v1930 = vpack.c.b16 %v1798, %v1795
        %v1931 = vpack.c.b16 %v1799, %v1796
        %v1932 = vpack.c.b16 %v1800, %v1797
        %v1933 = vpack.c.b16 %v1804, %v1801
        %v1934 = vpack.c.b16 %v1805, %v1802
        %v1935 = vpack.c.b16 %v1806, %v1803
        %v1936 = vpack.c.b16 %v1810, %v1807
        %v1937 = vpack.c.b16 %v1811, %v1808
        %v1938 = vpack.c.b16 %v1812, %v1809
        %v1939 = vpack.c.b16 %v1816, %v1813
        %v1940 = vpack.c.b16 %v1817, %v1814
        %v1941 = vpack.c.b16 %v1818, %v1815
        %v1942 = vpack.c.b16 %v1822, %v1819
        %v1943 = vpack.c.b16 %v1823, %v1820
        %v1944 = vpack.c.b16 %v1824, %v1821
        %v1945 = vpack.c.b16 %v1828, %v1825
        %v1946 = vpack.c.b16 %v1829, %v1826
        %v1947 = vpack.c.b16 %v1830, %v1827
        %v1948 = vpack.c.b16 %v1834, %v1831
        %v1949 = vpack.c.b16 %v1835, %v1832
        %v1950 = vpack.c.b16 %v1836, %v1833
        %v1951 = vpack.c.b16 %v1840, %v1837
        %v1952 = vpack.c.b16 %v1841, %v1838
        %v1953 = vpack.c.b16 %v1842, %v1839
        %v1954 = vpack.c.b16 %v1846, %v1843
        %v1955 = vpack.c.b16 %v1847, %v1844
        %v1956 = vpack.c.b16 %v1848, %v1845
        %v1957 = vpack.c.b16 %v1852, %v1849
        %v1958 = vpack.c.b16 %v1853, %v1850
        %v1959 = vpack.c.b16 %v1854, %v1851
        %v1960 = vpack.c.b16 %v1858, %v1855
        %v1961 = vpack.c.b16 %v1859, %v1856
        %v1962 = vpack.c.b16 %v1860, %v1857
        %v1963 = vpack.c.b16 %v1864, %v1861
        %v1964 = vpack.c.b16 %v1865, %v1862
        %v1965 = vpack.c.b16 %v1866, %v1863
        %v1966 = vpack.c.b16 %v1870, %v1867
        %v1967 = vpack.c.b16 %v1871, %v1868
        %v1968 = vpack.c.b16 %v1872, %v1869
        %2065 = vmatprep.subr.bf16.mxu0 %v1874
        %2066 = vmatpush1.bf16.msra.mxu0 %v1873
        %2067 = vmatprep.subr.bf16.mxu0 %v1877
        %2068 = vmatpush1.bf16.msra.mxu0 %v1876
        %2069 = vmatprep.subr.bf16.mxu0 %v1880
        %2070 = vmatpush1.bf16.msra.mxu0 %v1879
        %2071 = vmatprep.subr.bf16.mxu0 %v1883
        %2072 = vmatpush1.bf16.msra.mxu0 %v1882
        %2073 = vmatprep.subr.bf16.mxu0 %v1886
        %2074 = vmatpush1.bf16.msra.mxu0 %v1885
        %2075 = vmatprep.subr.bf16.mxu0 %v1889
        %2076 = vmatpush1.bf16.msra.mxu0 %v1888
        %2077 = vmatprep.subr.bf16.mxu0 %v1892
        %2078 = vmatpush1.bf16.msra.mxu0 %v1891
        %2079 = vmatprep.subr.bf16.mxu0 %v1895
        %2080 = vmatpush1.bf16.msra.mxu0 %v1894
        %2081 = vmatprep.subr.bf16.mxu0 %v1898
        %2082 = vmatpush1.bf16.msra.mxu0 %v1897
        %2083 = vmatprep.subr.bf16.mxu0 %v1901
        %2084 = vmatpush1.bf16.msra.mxu0 %v1900
        %2085 = vmatprep.subr.bf16.mxu0 %v1904
        %2086 = vmatpush1.bf16.msra.mxu0 %v1903
        %2087 = vmatprep.subr.bf16.mxu0 %v1907
        %2088 = vmatpush1.bf16.msra.mxu0 %v1906
        %2089 = vmatprep.subr.bf16.mxu0 %v1910
        %2090 = vmatpush1.bf16.msra.mxu0 %v1909
        %2091 = vmatprep.subr.bf16.mxu0 %v1913
        %2092 = vmatpush1.bf16.msra.mxu0 %v1912
        %2093 = vmatprep.subr.bf16.mxu0 %v1916
        %2094 = vmatpush1.bf16.msra.mxu0 %v1915
        %2095 = vmatprep.subr.bf16.mxu0 %v1919
        %2096 = vmatpush1.bf16.msra.mxu0 %v1918
        %2097 = vmatprep.mubr.bf16.mxu0 %v1298
        %2098 = vmatmul.mubr.bf16.gmra.mrb[0].mxu0 %v1297
        %v2099 = vpop.f32.mrb[0].mxu0
        %v2100 = vadd.f32 0.0, %v2099
        %v2101 = vpop.f32.mrb[0].mxu0
        %v2102 = vadd.f32 0.0, %v2101
        %v2103 = vpop.f32.mrb[0].mxu0
        %v2104 = vadd.f32 0.0, %v2103
        %v2105 = vpop.f32.mrb[0].mxu0
        %v2106 = vadd.f32 0.0, %v2105
        %2107 = vmatprep.mubr.bf16.mxu0 %v1302
        %2108 = vmatmul.mubr.bf16.gmra.mrb[0].mxu0 %v1301
        %v2109 = vpop.f32.mrb[0].mxu0
        %v2110 = vadd.f32 0.0, %v2109
        %v2111 = vpop.f32.mrb[0].mxu0
        %v2112 = vadd.f32 0.0, %v2111
        %v2113 = vpop.f32.mrb[0].mxu0
        %v2114 = vadd.f32 0.0, %v2113
        %v2115 = vpop.f32.mrb[0].mxu0
        %v2116 = vadd.f32 0.0, %v2115
        %2117 = vmatprep.mubr.bf16.mxu0 %v1306
        %2118 = vmatmul.mubr.bf16.gmra.mrb[0].mxu0 %v1305
        %v2119 = vpop.f32.mrb[0].mxu0
        %v2120 = vadd.f32 0.0, %v2119
        %v2121 = vpop.f32.mrb[0].mxu0
        %v2122 = vadd.f32 0.0, %v2121
        %v2123 = vpop.f32.mrb[0].mxu0
        %v2124 = vadd.f32 0.0, %v2123
        %v2125 = vpop.f32.mrb[0].mxu0
        %v2126 = vadd.f32 0.0, %v2125
        %2127 = vmatprep.mubr.bf16.mxu0 %v1310
        %2128 = vmatmul.mubr.bf16.gmra.mrb[0].mxu0 %v1309
        %v2129 = vpop.f32.mrb[0].mxu0
        %v2130 = vadd.f32 0.0, %v2129
        %v2131 = vpop.f32.mrb[0].mxu0
        %v2132 = vadd.f32 0.0, %v2131
        %v2133 = vpop.f32.mrb[0].mxu0
        %v2134 = vadd.f32 0.0, %v2133
        %v2135 = vpop.f32.mrb[0].mxu0
        %v2136 = vadd.f32 0.0, %v2135
        %2137 = vmatprep.mubr.bf16.mxu0 %v1314
        %2138 = vmatmul.mubr.bf16.gmra.mrb[0].mxu0 %v1313
        %v2139 = vpop.f32.mrb[0].mxu0
        %v2140 = vadd.f32 0.0, %v2139
        %v2141 = vpop.f32.mrb[0].mxu0
        %v2142 = vadd.f32 0.0, %v2141
        %v2143 = vpop.f32.mrb[0].mxu0
        %v2144 = vadd.f32 0.0, %v2143
        %v2145 = vpop.f32.mrb[0].mxu0
        %v2146 = vadd.f32 0.0, %v2145
        %2147 = vmatprep.mubr.bf16.mxu0 %v1318
        %2148 = vmatmul.mubr.bf16.gmra.mrb[0].mxu0 %v1317
        %v2149 = vpop.f32.mrb[0].mxu0
        %v2150 = vadd.f32 0.0, %v2149
        %v2151 = vpop.f32.mrb[0].mxu0
        %v2152 = vadd.f32 0.0, %v2151
        %v2153 = vpop.f32.mrb[0].mxu0
        %v2154 = vadd.f32 0.0, %v2153
        %v2155 = vpop.f32.mrb[0].mxu0
        %v2156 = vadd.f32 0.0, %v2155
        %2157 = vmatprep.mubr.bf16.mxu0 %v1322
        %2158 = vmatmul.mubr.bf16.gmra.mrb[0].mxu0 %v1321
        %v2159 = vpop.f32.mrb[0].mxu0
        %v2160 = vadd.f32 0.0, %v2159
        %v2161 = vpop.f32.mrb[0].mxu0
        %v2162 = vadd.f32 0.0, %v2161
        %v2163 = vpop.f32.mrb[0].mxu0
        %v2164 = vadd.f32 0.0, %v2163
        %v2165 = vpop.f32.mrb[0].mxu0
        %v2166 = vadd.f32 0.0, %v2165
        %2167 = vmatprep.mubr.bf16.mxu0 %v1326
        %2168 = vmatmul.mubr.bf16.gmra.mrb[0].mxu0 %v1325
        %v2169 = vpop.f32.mrb[0].mxu0
        %v2170 = vadd.f32 0.0, %v2169
        %v2171 = vpop.f32.mrb[0].mxu0
        %v2172 = vadd.f32 0.0, %v2171
        %v2173 = vpop.f32.mrb[0].mxu0
        %v2174 = vadd.f32 0.0, %v2173
        %v2175 = vpop.f32.mrb[0].mxu0
        %v2176 = vadd.f32 0.0, %v2175
        %2177 = vmatprep.mubr.bf16.mxu0 %v1330
        %2178 = vmatmul.mubr.bf16.gmra.mrb[0].mxu0 %v1329
        %v2179 = vpop.f32.mrb[0].mxu0
        %v2180 = vadd.f32 0.0, %v2179
        %v2181 = vpop.f32.mrb[0].mxu0
        %v2182 = vadd.f32 0.0, %v2181
        %v2183 = vpop.f32.mrb[0].mxu0
        %v2184 = vadd.f32 0.0, %v2183
        %v2185 = vpop.f32.mrb[0].mxu0
        %v2186 = vadd.f32 0.0, %v2185
        %2187 = vmatprep.mubr.bf16.mxu0 %v1334
        %2188 = vmatmul.mubr.bf16.gmra.mrb[0].mxu0 %v1333
        %v2189 = vpop.f32.mrb[0].mxu0
        %v2190 = vadd.f32 0.0, %v2189
        %v2191 = vpop.f32.mrb[0].mxu0
        %v2192 = vadd.f32 0.0, %v2191
        %v2193 = vpop.f32.mrb[0].mxu0
        %v2194 = vadd.f32 0.0, %v2193
        %v2195 = vpop.f32.mrb[0].mxu0
        %v2196 = vadd.f32 0.0, %v2195
        %2197 = vmatprep.mubr.bf16.mxu0 %v1338
        %2198 = vmatmul.mubr.bf16.gmra.mrb[0].mxu0 %v1337
        %v2199 = vpop.f32.mrb[0].mxu0
        %v2200 = vadd.f32 0.0, %v2199
        %v2201 = vpop.f32.mrb[0].mxu0
        %v2202 = vadd.f32 0.0, %v2201
        %v2203 = vpop.f32.mrb[0].mxu0
        %v2204 = vadd.f32 0.0, %v2203
        %v2205 = vpop.f32.mrb[0].mxu0
        %v2206 = vadd.f32 0.0, %v2205
        %2207 = vmatprep.mubr.bf16.mxu0 %v1342
        %2208 = vmatmul.mubr.bf16.gmra.mrb[0].mxu0 %v1341
        %v2209 = vpop.f32.mrb[0].mxu0
        %v2210 = vadd.f32 0.0, %v2209
        %v2211 = vpop.f32.mrb[0].mxu0
        %v2212 = vadd.f32 0.0, %v2211
        %v2213 = vpop.f32.mrb[0].mxu0
        %v2214 = vadd.f32 0.0, %v2213
        %v2215 = vpop.f32.mrb[0].mxu0
        %v2216 = vadd.f32 0.0, %v2215
        %2217 = vmatprep.mubr.bf16.mxu0 %v1346
        %2218 = vmatmul.mubr.bf16.gmra.mrb[0].mxu0 %v1345
        %v2219 = vpop.f32.mrb[0].mxu0
        %v2220 = vadd.f32 0.0, %v2219
        %v2221 = vpop.f32.mrb[0].mxu0
        %v2222 = vadd.f32 0.0, %v2221
        %v2223 = vpop.f32.mrb[0].mxu0
        %v2224 = vadd.f32 0.0, %v2223
        %v2225 = vpop.f32.mrb[0].mxu0
        %v2226 = vadd.f32 0.0, %v2225
        %2227 = vmatprep.mubr.bf16.mxu0 %v1350
        %2228 = vmatmul.mubr.bf16.gmra.mrb[0].mxu0 %v1349
        %v2229 = vpop.f32.mrb[0].mxu0
        %v2230 = vadd.f32 0.0, %v2229
        %v2231 = vpop.f32.mrb[0].mxu0
        %v2232 = vadd.f32 0.0, %v2231
        %v2233 = vpop.f32.mrb[0].mxu0
        %v2234 = vadd.f32 0.0, %v2233
        %v2235 = vpop.f32.mrb[0].mxu0
        %v2236 = vadd.f32 0.0, %v2235
        %2237 = vmatprep.mubr.bf16.mxu0 %v1354
        %2238 = vmatmul.mubr.bf16.gmra.mrb[0].mxu0 %v1353
        %v2239 = vpop.f32.mrb[0].mxu0
        %v2240 = vadd.f32 0.0, %v2239
        %v2241 = vpop.f32.mrb[0].mxu0
        %v2242 = vadd.f32 0.0, %v2241
        %v2243 = vpop.f32.mrb[0].mxu0
        %v2244 = vadd.f32 0.0, %v2243
        %v2245 = vpop.f32.mrb[0].mxu0
        %v2246 = vadd.f32 0.0, %v2245
        %2247 = vmatprep.mubr.bf16.mxu0 %v1358
        %2248 = vmatmul.mubr.bf16.gmra.mrb[0].mxu0 %v1357
        %v2249 = vpop.f32.mrb[0].mxu0
        %v2250 = vadd.f32 0.0, %v2249
        %v2251 = vpop.f32.mrb[0].mxu0
        %v2252 = vadd.f32 0.0, %v2251
        %v2253 = vpop.f32.mrb[0].mxu0
        %v2254 = vadd.f32 0.0, %v2253
        %v2255 = vpop.f32.mrb[0].mxu0
        %v2256 = vadd.f32 0.0, %v2255
        %2257 = vmatprep.mubr.bf16.mxu0 %v1362
        %2258 = vmatmul.mubr.bf16.gmra.mrb[0].mxu0 %v1361
        %v2259 = vpop.f32.mrb[0].mxu0
        %v2260 = vadd.f32 0.0, %v2259
        %v2261 = vpop.f32.mrb[0].mxu0
        %v2262 = vadd.f32 0.0, %v2261
        %v2263 = vpop.f32.mrb[0].mxu0
        %v2264 = vadd.f32 0.0, %v2263
        %v2265 = vpop.f32.mrb[0].mxu0
        %v2266 = vadd.f32 0.0, %v2265
        %2267 = vmatprep.mubr.bf16.mxu0 %v1366
        %2268 = vmatmul.mubr.bf16.gmra.mrb[0].mxu0 %v1365
        %v2269 = vpop.f32.mrb[0].mxu0
        %v2270 = vadd.f32 0.0, %v2269
        %v2271 = vpop.f32.mrb[0].mxu0
        %v2272 = vadd.f32 0.0, %v2271
        %v2273 = vpop.f32.mrb[0].mxu0
        %v2274 = vadd.f32 0.0, %v2273
        %v2275 = vpop.f32.mrb[0].mxu0
        %v2276 = vadd.f32 0.0, %v2275
        %2277 = vmatprep.mubr.bf16.mxu0 %v1370
        %2278 = vmatmul.mubr.bf16.gmra.mrb[0].mxu0 %v1369
        %v2279 = vpop.f32.mrb[0].mxu0
        %v2280 = vadd.f32 0.0, %v2279
        %v2281 = vpop.f32.mrb[0].mxu0
        %v2282 = vadd.f32 0.0, %v2281
        %v2283 = vpop.f32.mrb[0].mxu0
        %v2284 = vadd.f32 0.0, %v2283
        %v2285 = vpop.f32.mrb[0].mxu0
        %v2286 = vadd.f32 0.0, %v2285
        %2287 = vmatprep.mubr.bf16.mxu0 %v1374
        %2288 = vmatmul.mubr.bf16.gmra.mrb[0].mxu0 %v1373
        %v2289 = vpop.f32.mrb[0].mxu0
        %v2290 = vadd.f32 0.0, %v2289
        %v2291 = vpop.f32.mrb[0].mxu0
        %v2292 = vadd.f32 0.0, %v2291
        %v2293 = vpop.f32.mrb[0].mxu0
        %v2294 = vadd.f32 0.0, %v2293
        %v2295 = vpop.f32.mrb[0].mxu0
        %v2296 = vadd.f32 0.0, %v2295
        %2297 = vmatprep.mubr.bf16.mxu0 %v1378
        %2298 = vmatmul.mubr.bf16.gmra.mrb[0].mxu0 %v1377
        %v2299 = vpop.f32.mrb[0].mxu0
        %v2300 = vadd.f32 0.0, %v2299
        %v2301 = vpop.f32.mrb[0].mxu0
        %v2302 = vadd.f32 0.0, %v2301
        %v2303 = vpop.f32.mrb[0].mxu0
        %v2304 = vadd.f32 0.0, %v2303
        %v2305 = vpop.f32.mrb[0].mxu0
        %v2306 = vadd.f32 0.0, %v2305
        %2307 = vmatprep.mubr.bf16.mxu0 %v1382
        %2308 = vmatmul.mubr.bf16.gmra.mrb[0].mxu0 %v1381
        %v2309 = vpop.f32.mrb[0].mxu0
        %v2310 = vadd.f32 0.0, %v2309
        %v2311 = vpop.f32.mrb[0].mxu0
        %v2312 = vadd.f32 0.0, %v2311
        %v2313 = vpop.f32.mrb[0].mxu0
        %v2314 = vadd.f32 0.0, %v2313
        %v2315 = vpop.f32.mrb[0].mxu0
        %v2316 = vadd.f32 0.0, %v2315
        %2317 = vmatprep.mubr.bf16.mxu0 %v1386
        %2318 = vmatmul.mubr.bf16.gmra.mrb[0].mxu0 %v1385
        %v2319 = vpop.f32.mrb[0].mxu0
        %v2320 = vadd.f32 0.0, %v2319
        %v2321 = vpop.f32.mrb[0].mxu0
        %v2322 = vadd.f32 0.0, %v2321
        %v2323 = vpop.f32.mrb[0].mxu0
        %v2324 = vadd.f32 0.0, %v2323
        %v2325 = vpop.f32.mrb[0].mxu0
        %v2326 = vadd.f32 0.0, %v2325
        %2327 = vmatprep.mubr.bf16.mxu0 %v1390
        %2328 = vmatmul.mubr.bf16.gmra.mrb[0].mxu0 %v1389
        %v2329 = vpop.f32.mrb[0].mxu0
        %v2330 = vadd.f32 0.0, %v2329
        %v2331 = vpop.f32.mrb[0].mxu0
        %v2332 = vadd.f32 0.0, %v2331
        %v2333 = vpop.f32.mrb[0].mxu0
        %v2334 = vadd.f32 0.0, %v2333
        %v2335 = vpop.f32.mrb[0].mxu0
        %v2336 = vadd.f32 0.0, %v2335
        %2337 = vmatprep.mubr.bf16.mxu0 %v1394
        %2338 = vmatmul.mubr.bf16.gmra.mrb[0].mxu0 %v1393
        %v2339 = vpop.f32.mrb[0].mxu0
        %v2340 = vadd.f32 0.0, %v2339
        %v2341 = vpop.f32.mrb[0].mxu0
        %v2342 = vadd.f32 0.0, %v2341
        %v2343 = vpop.f32.mrb[0].mxu0
        %v2344 = vadd.f32 0.0, %v2343
        %v2345 = vpop.f32.mrb[0].mxu0
        %v2346 = vadd.f32 0.0, %v2345
        %2347 = vmatprep.mubr.bf16.mxu0 %v1398
        %2348 = vmatmul.mubr.bf16.gmra.mrb[0].mxu0 %v1397
        %v2349 = vpop.f32.mrb[0].mxu0
        %v2350 = vadd.f32 0.0, %v2349
        %v2351 = vpop.f32.mrb[0].mxu0
        %v2352 = vadd.f32 0.0, %v2351
        %v2353 = vpop.f32.mrb[0].mxu0
        %v2354 = vadd.f32 0.0, %v2353
        %v2355 = vpop.f32.mrb[0].mxu0
        %v2356 = vadd.f32 0.0, %v2355
        %2357 = vmatprep.mubr.bf16.mxu0 %v1402
        %2358 = vmatmul.mubr.bf16.gmra.mrb[0].mxu0 %v1401
        %v2359 = vpop.f32.mrb[0].mxu0
        %v2360 = vadd.f32 0.0, %v2359
        %v2361 = vpop.f32.mrb[0].mxu0
        %v2362 = vadd.f32 0.0, %v2361
        %v2363 = vpop.f32.mrb[0].mxu0
        %v2364 = vadd.f32 0.0, %v2363
        %v2365 = vpop.f32.mrb[0].mxu0
        %v2366 = vadd.f32 0.0, %v2365
        %2367 = vmatprep.mubr.bf16.mxu0 %v1406
        %2368 = vmatmul.mubr.bf16.gmra.mrb[0].mxu0 %v1405
        %v2369 = vpop.f32.mrb[0].mxu0
        %v2370 = vadd.f32 0.0, %v2369
        %v2371 = vpop.f32.mrb[0].mxu0
        %v2372 = vadd.f32 0.0, %v2371
        %v2373 = vpop.f32.mrb[0].mxu0
        %v2374 = vadd.f32 0.0, %v2373
        %v2375 = vpop.f32.mrb[0].mxu0
        %v2376 = vadd.f32 0.0, %v2375
        %2377 = vmatprep.mubr.bf16.mxu0 %v1410
        %2378 = vmatmul.mubr.bf16.gmra.mrb[0].mxu0 %v1409
        %v2379 = vpop.f32.mrb[0].mxu0
        %v2380 = vadd.f32 0.0, %v2379
        %v2381 = vpop.f32.mrb[0].mxu0
        %v2382 = vadd.f32 0.0, %v2381
        %v2383 = vpop.f32.mrb[0].mxu0
        %v2384 = vadd.f32 0.0, %v2383
        %v2385 = vpop.f32.mrb[0].mxu0
        %v2386 = vadd.f32 0.0, %v2385
        %2387 = vmatprep.mubr.bf16.mxu0 %v1414
        %2388 = vmatmul.mubr.bf16.gmra.mrb[0].mxu0 %v1413
        %v2389 = vpop.f32.mrb[0].mxu0
        %v2390 = vadd.f32 0.0, %v2389
        %v2391 = vpop.f32.mrb[0].mxu0
        %v2392 = vadd.f32 0.0, %v2391
        %v2393 = vpop.f32.mrb[0].mxu0
        %v2394 = vadd.f32 0.0, %v2393
        %v2395 = vpop.f32.mrb[0].mxu0
        %v2396 = vadd.f32 0.0, %v2395
        %2397 = vmatprep.mubr.bf16.mxu0 %v1418
        %2398 = vmatmul.mubr.bf16.gmra.mrb[0].mxu0 %v1417
        %v2399 = vpop.f32.mrb[0].mxu0
        %v2400 = vadd.f32 0.0, %v2399
        %v2401 = vpop.f32.mrb[0].mxu0
        %v2402 = vadd.f32 0.0, %v2401
        %v2403 = vpop.f32.mrb[0].mxu0
        %v2404 = vadd.f32 0.0, %v2403
        %v2405 = vpop.f32.mrb[0].mxu0
        %v2406 = vadd.f32 0.0, %v2405
        %2407 = vmatprep.mubr.bf16.mxu0 %v1422
        %2408 = vmatmul.mubr.bf16.gmra.mrb[0].mxu0 %v1421
        %v2409 = vpop.f32.mrb[0].mxu0
        %v2410 = vadd.f32 0.0, %v2409
        %v2411 = vpop.f32.mrb[0].mxu0
        %v2412 = vadd.f32 0.0, %v2411
        %v2413 = vpop.f32.mrb[0].mxu0
        %v2414 = vadd.f32 0.0, %v2413
        %v2415 = vpop.f32.mrb[0].mxu0
        %v2416 = vadd.f32 0.0, %v2415
        %2417 = vdwg.mxu0
        %2418 = vmatprep.subr.bf16.mxu0 %v1922
        %2419 = vmatpush1.bf16.msra.mxu0 %v1921
        %2420 = vmatprep.subr.bf16.mxu0 %v1925
        %2421 = vmatpush1.bf16.msra.mxu0 %v1924
        %2422 = vmatprep.subr.bf16.mxu0 %v1928
        %2423 = vmatpush1.bf16.msra.mxu0 %v1927
        %2424 = vmatprep.subr.bf16.mxu0 %v1931
        %2425 = vmatpush1.bf16.msra.mxu0 %v1930
        %2426 = vmatprep.subr.bf16.mxu0 %v1934
        %2427 = vmatpush1.bf16.msra.mxu0 %v1933
        %2428 = vmatprep.subr.bf16.mxu0 %v1937
        %2429 = vmatpush1.bf16.msra.mxu0 %v1936
        %2430 = vmatprep.subr.bf16.mxu0 %v1940
        %2431 = vmatpush1.bf16.msra.mxu0 %v1939
        %2432 = vmatprep.subr.bf16.mxu0 %v1943
        %2433 = vmatpush1.bf16.msra.mxu0 %v1942
        %2434 = vmatprep.subr.bf16.mxu0 %v1946
        %2435 = vmatpush1.bf16.msra.mxu0 %v1945
        %2436 = vmatprep.subr.bf16.mxu0 %v1949
        %2437 = vmatpush1.bf16.msra.mxu0 %v1948
        %2438 = vmatprep.subr.bf16.mxu0 %v1952
        %2439 = vmatpush1.bf16.msra.mxu0 %v1951
        %2440 = vmatprep.subr.bf16.mxu0 %v1955
        %2441 = vmatpush1.bf16.msra.mxu0 %v1954
        %2442 = vmatprep.subr.bf16.mxu0 %v1958
        %2443 = vmatpush1.bf16.msra.mxu0 %v1957
        %2444 = vmatprep.subr.bf16.mxu0 %v1961
        %2445 = vmatpush1.bf16.msra.mxu0 %v1960
        %2446 = vmatprep.subr.bf16.mxu0 %v1964
        %2447 = vmatpush1.bf16.msra.mxu0 %v1963
        %2448 = vmatprep.subr.bf16.mxu0 %v1967
        %2449 = vmatpush1.bf16.msra.mxu0 %v1966
        %2450 = vmatprep.mubr.bf16.mxu0 %v1300
        %2451 = vmatmul.mubr.bf16.gmra.mrb[0].mxu0 %v1299
        %v2452 = vpop.f32.mrb[0].mxu0
        %v2453 = vadd.f32 %v2100, %v2452
        %v2454 = vpop.f32.mrb[0].mxu0
        %v2455 = vadd.f32 %v2102, %v2454
        %v2456 = vpop.f32.mrb[0].mxu0
        %v2457 = vadd.f32 %v2104, %v2456
        %v2458 = vpop.f32.mrb[0].mxu0
        %v2459 = vadd.f32 %v2106, %v2458
        %2460 = vmatprep.mubr.bf16.mxu0 %v1304
        %2461 = vmatmul.mubr.bf16.gmra.mrb[0].mxu0 %v1303
        %v2462 = vpop.f32.mrb[0].mxu0
        %v2463 = vadd.f32 %v2110, %v2462
        %v2464 = vpop.f32.mrb[0].mxu0
        %v2465 = vadd.f32 %v2112, %v2464
        %v2466 = vpop.f32.mrb[0].mxu0
        %v2467 = vadd.f32 %v2114, %v2466
        %v2468 = vpop.f32.mrb[0].mxu0
        %v2469 = vadd.f32 %v2116, %v2468
        %2470 = vmatprep.mubr.bf16.mxu0 %v1308
        %2471 = vmatmul.mubr.bf16.gmra.mrb[0].mxu0 %v1307
        %v2472 = vpop.f32.mrb[0].mxu0
        %v2473 = vadd.f32 %v2120, %v2472
        %v2474 = vpop.f32.mrb[0].mxu0
        %v2475 = vadd.f32 %v2122, %v2474
        %v2476 = vpop.f32.mrb[0].mxu0
        %v2477 = vadd.f32 %v2124, %v2476
        %v2478 = vpop.f32.mrb[0].mxu0
        %v2479 = vadd.f32 %v2126, %v2478
        %2480 = vmatprep.mubr.bf16.mxu0 %v1312
        %2481 = vmatmul.mubr.bf16.gmra.mrb[0].mxu0 %v1311
        %v2482 = vpop.f32.mrb[0].mxu0
        %v2483 = vadd.f32 %v2130, %v2482
        %v2484 = vpop.f32.mrb[0].mxu0
        %v2485 = vadd.f32 %v2132, %v2484
        %v2486 = vpop.f32.mrb[0].mxu0
        %v2487 = vadd.f32 %v2134, %v2486
        %v2488 = vpop.f32.mrb[0].mxu0
        %v2489 = vadd.f32 %v2136, %v2488
        %2490 = vmatprep.mubr.bf16.mxu0 %v1316
        %2491 = vmatmul.mubr.bf16.gmra.mrb[0].mxu0 %v1315
        %v2492 = vpop.f32.mrb[0].mxu0
        %v2493 = vadd.f32 %v2140, %v2492
        %v2494 = vpop.f32.mrb[0].mxu0
        %v2495 = vadd.f32 %v2142, %v2494
        %v2496 = vpop.f32.mrb[0].mxu0
        %v2497 = vadd.f32 %v2144, %v2496
        %v2498 = vpop.f32.mrb[0].mxu0
        %v2499 = vadd.f32 %v2146, %v2498
        %2500 = vmatprep.mubr.bf16.mxu0 %v1320
        %2501 = vmatmul.mubr.bf16.gmra.mrb[0].mxu0 %v1319
        %v2502 = vpop.f32.mrb[0].mxu0
        %v2503 = vadd.f32 %v2150, %v2502
        %v2504 = vpop.f32.mrb[0].mxu0
        %v2505 = vadd.f32 %v2152, %v2504
        %v2506 = vpop.f32.mrb[0].mxu0
        %v2507 = vadd.f32 %v2154, %v2506
        %v2508 = vpop.f32.mrb[0].mxu0
        %v2509 = vadd.f32 %v2156, %v2508
        %2510 = vmatprep.mubr.bf16.mxu0 %v1324
        %2511 = vmatmul.mubr.bf16.gmra.mrb[0].mxu0 %v1323
        %v2512 = vpop.f32.mrb[0].mxu0
        %v2513 = vadd.f32 %v2160, %v2512
        %v2514 = vpop.f32.mrb[0].mxu0
        %v2515 = vadd.f32 %v2162, %v2514
        %v2516 = vpop.f32.mrb[0].mxu0
        %v2517 = vadd.f32 %v2164, %v2516
        %v2518 = vpop.f32.mrb[0].mxu0
        %v2519 = vadd.f32 %v2166, %v2518
        %2520 = vmatprep.mubr.bf16.mxu0 %v1328
        %2521 = vmatmul.mubr.bf16.gmra.mrb[0].mxu0 %v1327
        %v2522 = vpop.f32.mrb[0].mxu0
        %v2523 = vadd.f32 %v2170, %v2522
        %v2524 = vpop.f32.mrb[0].mxu0
        %v2525 = vadd.f32 %v2172, %v2524
        %v2526 = vpop.f32.mrb[0].mxu0
        %v2527 = vadd.f32 %v2174, %v2526
        %v2528 = vpop.f32.mrb[0].mxu0
        %v2529 = vadd.f32 %v2176, %v2528
        %2530 = vmatprep.mubr.bf16.mxu0 %v1332
        %2531 = vmatmul.mubr.bf16.gmra.mrb[0].mxu0 %v1331
        %v2532 = vpop.f32.mrb[0].mxu0
        %v2533 = vadd.f32 %v2180, %v2532
        %v2534 = vpop.f32.mrb[0].mxu0
        %v2535 = vadd.f32 %v2182, %v2534
        %v2536 = vpop.f32.mrb[0].mxu0
        %v2537 = vadd.f32 %v2184, %v2536
        %v2538 = vpop.f32.mrb[0].mxu0
        %v2539 = vadd.f32 %v2186, %v2538
        %2540 = vmatprep.mubr.bf16.mxu0 %v1336
        %2541 = vmatmul.mubr.bf16.gmra.mrb[0].mxu0 %v1335
        %v2542 = vpop.f32.mrb[0].mxu0
        %v2543 = vadd.f32 %v2190, %v2542
        %v2544 = vpop.f32.mrb[0].mxu0
        %v2545 = vadd.f32 %v2192, %v2544
        %v2546 = vpop.f32.mrb[0].mxu0
        %v2547 = vadd.f32 %v2194, %v2546
        %v2548 = vpop.f32.mrb[0].mxu0
        %v2549 = vadd.f32 %v2196, %v2548
        %2550 = vmatprep.mubr.bf16.mxu0 %v1340
        %2551 = vmatmul.mubr.bf16.gmra.mrb[0].mxu0 %v1339
        %v2552 = vpop.f32.mrb[0].mxu0
        %v2553 = vadd.f32 %v2200, %v2552
        %v2554 = vpop.f32.mrb[0].mxu0
        %v2555 = vadd.f32 %v2202, %v2554
        %v2556 = vpop.f32.mrb[0].mxu0
        %v2557 = vadd.f32 %v2204, %v2556
        %v2558 = vpop.f32.mrb[0].mxu0
        %v2559 = vadd.f32 %v2206, %v2558
        %2560 = vmatprep.mubr.bf16.mxu0 %v1344
        %2561 = vmatmul.mubr.bf16.gmra.mrb[0].mxu0 %v1343
        %v2562 = vpop.f32.mrb[0].mxu0
        %v2563 = vadd.f32 %v2210, %v2562
        %v2564 = vpop.f32.mrb[0].mxu0
        %v2565 = vadd.f32 %v2212, %v2564
        %v2566 = vpop.f32.mrb[0].mxu0
        %v2567 = vadd.f32 %v2214, %v2566
        %v2568 = vpop.f32.mrb[0].mxu0
        %v2569 = vadd.f32 %v2216, %v2568
        %2570 = vmatprep.mubr.bf16.mxu0 %v1348
        %2571 = vmatmul.mubr.bf16.gmra.mrb[0].mxu0 %v1347
        %v2572 = vpop.f32.mrb[0].mxu0
        %v2573 = vadd.f32 %v2220, %v2572
        %v2574 = vpop.f32.mrb[0].mxu0
        %v2575 = vadd.f32 %v2222, %v2574
        %v2576 = vpop.f32.mrb[0].mxu0
        %v2577 = vadd.f32 %v2224, %v2576
        %v2578 = vpop.f32.mrb[0].mxu0
        %v2579 = vadd.f32 %v2226, %v2578
        %2580 = vmatprep.mubr.bf16.mxu0 %v1352
        %2581 = vmatmul.mubr.bf16.gmra.mrb[0].mxu0 %v1351
        %v2582 = vpop.f32.mrb[0].mxu0
        %v2583 = vadd.f32 %v2230, %v2582
        %v2584 = vpop.f32.mrb[0].mxu0
        %v2585 = vadd.f32 %v2232, %v2584
        %v2586 = vpop.f32.mrb[0].mxu0
        %v2587 = vadd.f32 %v2234, %v2586
        %v2588 = vpop.f32.mrb[0].mxu0
        %v2589 = vadd.f32 %v2236, %v2588
        %2590 = vmatprep.mubr.bf16.mxu0 %v1356
        %2591 = vmatmul.mubr.bf16.gmra.mrb[0].mxu0 %v1355
        %v2592 = vpop.f32.mrb[0].mxu0
        %v2593 = vadd.f32 %v2240, %v2592
        %v2594 = vpop.f32.mrb[0].mxu0
        %v2595 = vadd.f32 %v2242, %v2594
        %v2596 = vpop.f32.mrb[0].mxu0
        %v2597 = vadd.f32 %v2244, %v2596
        %v2598 = vpop.f32.mrb[0].mxu0
        %v2599 = vadd.f32 %v2246, %v2598
        %2600 = vmatprep.mubr.bf16.mxu0 %v1360
        %2601 = vmatmul.mubr.bf16.gmra.mrb[0].mxu0 %v1359
        %v2602 = vpop.f32.mrb[0].mxu0
        %v2603 = vadd.f32 %v2250, %v2602
        %v2604 = vpop.f32.mrb[0].mxu0
        %v2605 = vadd.f32 %v2252, %v2604
        %v2606 = vpop.f32.mrb[0].mxu0
        %v2607 = vadd.f32 %v2254, %v2606
        %v2608 = vpop.f32.mrb[0].mxu0
        %v2609 = vadd.f32 %v2256, %v2608
        %2610 = vmatprep.mubr.bf16.mxu0 %v1364
        %2611 = vmatmul.mubr.bf16.gmra.mrb[0].mxu0 %v1363
        %v2612 = vpop.f32.mrb[0].mxu0
        %v2613 = vadd.f32 %v2260, %v2612
        %v2614 = vpop.f32.mrb[0].mxu0
        %v2615 = vadd.f32 %v2262, %v2614
        %v2616 = vpop.f32.mrb[0].mxu0
        %v2617 = vadd.f32 %v2264, %v2616
        %v2618 = vpop.f32.mrb[0].mxu0
        %v2619 = vadd.f32 %v2266, %v2618
        %2620 = vmatprep.mubr.bf16.mxu0 %v1368
        %2621 = vmatmul.mubr.bf16.gmra.mrb[0].mxu0 %v1367
        %v2622 = vpop.f32.mrb[0].mxu0
        %v2623 = vadd.f32 %v2270, %v2622
        %v2624 = vpop.f32.mrb[0].mxu0
        %v2625 = vadd.f32 %v2272, %v2624
        %v2626 = vpop.f32.mrb[0].mxu0
        %v2627 = vadd.f32 %v2274, %v2626
        %v2628 = vpop.f32.mrb[0].mxu0
        %v2629 = vadd.f32 %v2276, %v2628
        %2630 = vmatprep.mubr.bf16.mxu0 %v1372
        %2631 = vmatmul.mubr.bf16.gmra.mrb[0].mxu0 %v1371
        %v2632 = vpop.f32.mrb[0].mxu0
        %v2633 = vadd.f32 %v2280, %v2632
        %v2634 = vpop.f32.mrb[0].mxu0
        %v2635 = vadd.f32 %v2282, %v2634
        %v2636 = vpop.f32.mrb[0].mxu0
        %v2637 = vadd.f32 %v2284, %v2636
        %v2638 = vpop.f32.mrb[0].mxu0
        %v2639 = vadd.f32 %v2286, %v2638
        %2640 = vmatprep.mubr.bf16.mxu0 %v1376
        %2641 = vmatmul.mubr.bf16.gmra.mrb[0].mxu0 %v1375
        %v2642 = vpop.f32.mrb[0].mxu0
        %v2643 = vadd.f32 %v2290, %v2642
        %v2644 = vpop.f32.mrb[0].mxu0
        %v2645 = vadd.f32 %v2292, %v2644
        %v2646 = vpop.f32.mrb[0].mxu0
        %v2647 = vadd.f32 %v2294, %v2646
        %v2648 = vpop.f32.mrb[0].mxu0
        %v2649 = vadd.f32 %v2296, %v2648
        %2650 = vmatprep.mubr.bf16.mxu0 %v1380
        %2651 = vmatmul.mubr.bf16.gmra.mrb[0].mxu0 %v1379
        %v2652 = vpop.f32.mrb[0].mxu0
        %v2653 = vadd.f32 %v2300, %v2652
        %v2654 = vpop.f32.mrb[0].mxu0
        %v2655 = vadd.f32 %v2302, %v2654
        %v2656 = vpop.f32.mrb[0].mxu0
        %v2657 = vadd.f32 %v2304, %v2656
        %v2658 = vpop.f32.mrb[0].mxu0
        %v2659 = vadd.f32 %v2306, %v2658
        %2660 = vmatprep.mubr.bf16.mxu0 %v1384
        %2661 = vmatmul.mubr.bf16.gmra.mrb[0].mxu0 %v1383
        %v2662 = vpop.f32.mrb[0].mxu0
        %v2663 = vadd.f32 %v2310, %v2662
        %v2664 = vpop.f32.mrb[0].mxu0
        %v2665 = vadd.f32 %v2312, %v2664
        %v2666 = vpop.f32.mrb[0].mxu0
        %v2667 = vadd.f32 %v2314, %v2666
        %v2668 = vpop.f32.mrb[0].mxu0
        %v2669 = vadd.f32 %v2316, %v2668
        %2670 = vmatprep.mubr.bf16.mxu0 %v1388
        %2671 = vmatmul.mubr.bf16.gmra.mrb[0].mxu0 %v1387
        %v2672 = vpop.f32.mrb[0].mxu0
        %v2673 = vadd.f32 %v2320, %v2672
        %v2674 = vpop.f32.mrb[0].mxu0
        %v2675 = vadd.f32 %v2322, %v2674
        %v2676 = vpop.f32.mrb[0].mxu0
        %v2677 = vadd.f32 %v2324, %v2676
        %v2678 = vpop.f32.mrb[0].mxu0
        %v2679 = vadd.f32 %v2326, %v2678
        %2680 = vmatprep.mubr.bf16.mxu0 %v1392
        %2681 = vmatmul.mubr.bf16.gmra.mrb[0].mxu0 %v1391
        %v2682 = vpop.f32.mrb[0].mxu0
        %v2683 = vadd.f32 %v2330, %v2682
        %v2684 = vpop.f32.mrb[0].mxu0
        %v2685 = vadd.f32 %v2332, %v2684
        %v2686 = vpop.f32.mrb[0].mxu0
        %v2687 = vadd.f32 %v2334, %v2686
        %v2688 = vpop.f32.mrb[0].mxu0
        %v2689 = vadd.f32 %v2336, %v2688
        %2690 = vmatprep.mubr.bf16.mxu0 %v1396
        %2691 = vmatmul.mubr.bf16.gmra.mrb[0].mxu0 %v1395
        %v2692 = vpop.f32.mrb[0].mxu0
        %v2693 = vadd.f32 %v2340, %v2692
        %v2694 = vpop.f32.mrb[0].mxu0
        %v2695 = vadd.f32 %v2342, %v2694
        %v2696 = vpop.f32.mrb[0].mxu0
        %v2697 = vadd.f32 %v2344, %v2696
        %v2698 = vpop.f32.mrb[0].mxu0
        %v2699 = vadd.f32 %v2346, %v2698
        %2700 = vmatprep.mubr.bf16.mxu0 %v1400
        %2701 = vmatmul.mubr.bf16.gmra.mrb[0].mxu0 %v1399
        %v2702 = vpop.f32.mrb[0].mxu0
        %v2703 = vadd.f32 %v2350, %v2702
        %v2704 = vpop.f32.mrb[0].mxu0
        %v2705 = vadd.f32 %v2352, %v2704
        %v2706 = vpop.f32.mrb[0].mxu0
        %v2707 = vadd.f32 %v2354, %v2706
        %v2708 = vpop.f32.mrb[0].mxu0
        %v2709 = vadd.f32 %v2356, %v2708
        %2710 = vmatprep.mubr.bf16.mxu0 %v1404
        %2711 = vmatmul.mubr.bf16.gmra.mrb[0].mxu0 %v1403
        %v2712 = vpop.f32.mrb[0].mxu0
        %v2713 = vadd.f32 %v2360, %v2712
        %v2714 = vpop.f32.mrb[0].mxu0
        %v2715 = vadd.f32 %v2362, %v2714
        %v2716 = vpop.f32.mrb[0].mxu0
        %v2717 = vadd.f32 %v2364, %v2716
        %v2718 = vpop.f32.mrb[0].mxu0
        %v2719 = vadd.f32 %v2366, %v2718
        %2720 = vmatprep.mubr.bf16.mxu0 %v1408
        %2721 = vmatmul.mubr.bf16.gmra.mrb[0].mxu0 %v1407
        %v2722 = vpop.f32.mrb[0].mxu0
        %v2723 = vadd.f32 %v2370, %v2722
        %v2724 = vpop.f32.mrb[0].mxu0
        %v2725 = vadd.f32 %v2372, %v2724
        %v2726 = vpop.f32.mrb[0].mxu0
        %v2727 = vadd.f32 %v2374, %v2726
        %v2728 = vpop.f32.mrb[0].mxu0
        %v2729 = vadd.f32 %v2376, %v2728
        %2730 = vmatprep.mubr.bf16.mxu0 %v1412
        %2731 = vmatmul.mubr.bf16.gmra.mrb[0].mxu0 %v1411
        %v2732 = vpop.f32.mrb[0].mxu0
        %v2733 = vadd.f32 %v2380, %v2732
        %v2734 = vpop.f32.mrb[0].mxu0
        %v2735 = vadd.f32 %v2382, %v2734
        %v2736 = vpop.f32.mrb[0].mxu0
        %v2737 = vadd.f32 %v2384, %v2736
        %v2738 = vpop.f32.mrb[0].mxu0
        %v2739 = vadd.f32 %v2386, %v2738
        %2740 = vmatprep.mubr.bf16.mxu0 %v1416
        %2741 = vmatmul.mubr.bf16.gmra.mrb[0].mxu0 %v1415
        %v2742 = vpop.f32.mrb[0].mxu0
        %v2743 = vadd.f32 %v2390, %v2742
        %v2744 = vpop.f32.mrb[0].mxu0
        %v2745 = vadd.f32 %v2392, %v2744
        %v2746 = vpop.f32.mrb[0].mxu0
        %v2747 = vadd.f32 %v2394, %v2746
        %v2748 = vpop.f32.mrb[0].mxu0
        %v2749 = vadd.f32 %v2396, %v2748
        %2750 = vmatprep.mubr.bf16.mxu0 %v1420
        %2751 = vmatmul.mubr.bf16.gmra.mrb[0].mxu0 %v1419
        %v2752 = vpop.f32.mrb[0].mxu0
        %v2753 = vadd.f32 %v2400, %v2752
        %v2754 = vpop.f32.mrb[0].mxu0
        %v2755 = vadd.f32 %v2402, %v2754
        %v2756 = vpop.f32.mrb[0].mxu0
        %v2757 = vadd.f32 %v2404, %v2756
        %v2758 = vpop.f32.mrb[0].mxu0
        %v2759 = vadd.f32 %v2406, %v2758
        %2760 = vmatprep.mubr.bf16.mxu0 %v1424
        %2761 = vmatmul.mubr.bf16.gmra.mrb[0].mxu0 %v1423
        %v2762 = vpop.f32.mrb[0].mxu0
        %v2763 = vadd.f32 %v2410, %v2762
        %v2764 = vpop.f32.mrb[0].mxu0
        %v2765 = vadd.f32 %v2412, %v2764
        %v2766 = vpop.f32.mrb[0].mxu0
        %v2767 = vadd.f32 %v2414, %v2766
        %v2768 = vpop.f32.mrb[0].mxu0
        %v2769 = vadd.f32 %v2416, %v2768
        %2770 = vdwg.mxu0
        %2771 = vmatprep.subr.bf16.mxu0 0
        %2772 = vmatpush1.bf16.msra.mxu0 %v1875
        %2773 = vmatprep.subr.bf16.mxu0 0
        %2774 = vmatpush1.bf16.msra.mxu0 %v1878
        %2775 = vmatprep.subr.bf16.mxu0 0
        %2776 = vmatpush1.bf16.msra.mxu0 %v1881
        %2777 = vmatprep.subr.bf16.mxu0 0
        %2778 = vmatpush1.bf16.msra.mxu0 %v1884
        %2779 = vmatprep.subr.bf16.mxu0 0
        %2780 = vmatpush1.bf16.msra.mxu0 %v1887
        %2781 = vmatprep.subr.bf16.mxu0 0
        %2782 = vmatpush1.bf16.msra.mxu0 %v1890
        %2783 = vmatprep.subr.bf16.mxu0 0
        %2784 = vmatpush1.bf16.msra.mxu0 %v1893
        %2785 = vmatprep.subr.bf16.mxu0 0
        %2786 = vmatpush1.bf16.msra.mxu0 %v1896
        %2787 = vmatprep.subr.bf16.mxu0 0
        %2788 = vmatpush1.bf16.msra.mxu0 %v1899
        %2789 = vmatprep.subr.bf16.mxu0 0
        %2790 = vmatpush1.bf16.msra.mxu0 %v1902
        %2791 = vmatprep.subr.bf16.mxu0 0
        %2792 = vmatpush1.bf16.msra.mxu0 %v1905
        %2793 = vmatprep.subr.bf16.mxu0 0
        %2794 = vmatpush1.bf16.msra.mxu0 %v1908
        %2795 = vmatprep.subr.bf16.mxu0 0
        %2796 = vmatpush1.bf16.msra.mxu0 %v1911
        %2797 = vmatprep.subr.bf16.mxu0 0
        %2798 = vmatpush1.bf16.msra.mxu0 %v1914
        %2799 = vmatprep.subr.bf16.mxu0 0
        %2800 = vmatpush1.bf16.msra.mxu0 %v1917
        %2801 = vmatprep.subr.bf16.mxu0 0
        %2802 = vmatpush1.bf16.msra.mxu0 %v1920
        %2803 = vmatprep.mubr.bf16.mxu0 %v1298
        %2804 = vmatmul.mubr.bf16.gmra.mrb[0].mxu0 %v1297
        %v2805 = vpop.f32.mrb[0].mxu0
        %v2806 = vadd.f32 0.0, %v2805
        %v2807 = vpop.f32.mrb[0].mxu0
        %v2808 = vpop.f32.mrb[0].mxu0
        %v2809 = vadd.f32 0.0, %v2808
        %v2810 = vpop.f32.mrb[0].mxu0
        %2811 = vmatprep.mubr.bf16.mxu0 %v1302
        %2812 = vmatmul.mubr.bf16.gmra.mrb[0].mxu0 %v1301
        %v2813 = vpop.f32.mrb[0].mxu0
        %v2814 = vadd.f32 0.0, %v2813
        %v2815 = vpop.f32.mrb[0].mxu0
        %v2816 = vpop.f32.mrb[0].mxu0
        %v2817 = vadd.f32 0.0, %v2816
        %v2818 = vpop.f32.mrb[0].mxu0
        %2819 = vmatprep.mubr.bf16.mxu0 %v1306
        %2820 = vmatmul.mubr.bf16.gmra.mrb[0].mxu0 %v1305
        %v2821 = vpop.f32.mrb[0].mxu0
        %v2822 = vadd.f32 0.0, %v2821
        %v2823 = vpop.f32.mrb[0].mxu0
        %v2824 = vpop.f32.mrb[0].mxu0
        %v2825 = vadd.f32 0.0, %v2824
        %v2826 = vpop.f32.mrb[0].mxu0
        %2827 = vmatprep.mubr.bf16.mxu0 %v1310
        %2828 = vmatmul.mubr.bf16.gmra.mrb[0].mxu0 %v1309
        %v2829 = vpop.f32.mrb[0].mxu0
        %v2830 = vadd.f32 0.0, %v2829
        %v2831 = vpop.f32.mrb[0].mxu0
        %v2832 = vpop.f32.mrb[0].mxu0
        %v2833 = vadd.f32 0.0, %v2832
        %v2834 = vpop.f32.mrb[0].mxu0
        %2835 = vmatprep.mubr.bf16.mxu0 %v1314
        %2836 = vmatmul.mubr.bf16.gmra.mrb[0].mxu0 %v1313
        %v2837 = vpop.f32.mrb[0].mxu0
        %v2838 = vadd.f32 0.0, %v2837
        %v2839 = vpop.f32.mrb[0].mxu0
        %v2840 = vpop.f32.mrb[0].mxu0
        %v2841 = vadd.f32 0.0, %v2840
        %v2842 = vpop.f32.mrb[0].mxu0
        %2843 = vmatprep.mubr.bf16.mxu0 %v1318
        %2844 = vmatmul.mubr.bf16.gmra.mrb[0].mxu0 %v1317
        %v2845 = vpop.f32.mrb[0].mxu0
        %v2846 = vadd.f32 0.0, %v2845
        %v2847 = vpop.f32.mrb[0].mxu0
        %v2848 = vpop.f32.mrb[0].mxu0
        %v2849 = vadd.f32 0.0, %v2848
        %v2850 = vpop.f32.mrb[0].mxu0
        %2851 = vmatprep.mubr.bf16.mxu0 %v1322
        %2852 = vmatmul.mubr.bf16.gmra.mrb[0].mxu0 %v1321
        %v2853 = vpop.f32.mrb[0].mxu0
        %v2854 = vadd.f32 0.0, %v2853
        %v2855 = vpop.f32.mrb[0].mxu0
        %v2856 = vpop.f32.mrb[0].mxu0
        %v2857 = vadd.f32 0.0, %v2856
        %v2858 = vpop.f32.mrb[0].mxu0
        %2859 = vmatprep.mubr.bf16.mxu0 %v1326
        %2860 = vmatmul.mubr.bf16.gmra.mrb[0].mxu0 %v1325
        %v2861 = vpop.f32.mrb[0].mxu0
        %v2862 = vadd.f32 0.0, %v2861
        %v2863 = vpop.f32.mrb[0].mxu0
        %v2864 = vpop.f32.mrb[0].mxu0
        %v2865 = vadd.f32 0.0, %v2864
        %v2866 = vpop.f32.mrb[0].mxu0
        %2867 = vmatprep.mubr.bf16.mxu0 %v1330
        %2868 = vmatmul.mubr.bf16.gmra.mrb[0].mxu0 %v1329
        %v2869 = vpop.f32.mrb[0].mxu0
        %v2870 = vadd.f32 0.0, %v2869
        %v2871 = vpop.f32.mrb[0].mxu0
        %v2872 = vpop.f32.mrb[0].mxu0
        %v2873 = vadd.f32 0.0, %v2872
        %v2874 = vpop.f32.mrb[0].mxu0
        %2875 = vmatprep.mubr.bf16.mxu0 %v1334
        %2876 = vmatmul.mubr.bf16.gmra.mrb[0].mxu0 %v1333
        %v2877 = vpop.f32.mrb[0].mxu0
        %v2878 = vadd.f32 0.0, %v2877
        %v2879 = vpop.f32.mrb[0].mxu0
        %v2880 = vpop.f32.mrb[0].mxu0
        %v2881 = vadd.f32 0.0, %v2880
        %v2882 = vpop.f32.mrb[0].mxu0
        %2883 = vmatprep.mubr.bf16.mxu0 %v1338
        %2884 = vmatmul.mubr.bf16.gmra.mrb[0].mxu0 %v1337
        %v2885 = vpop.f32.mrb[0].mxu0
        %v2886 = vadd.f32 0.0, %v2885
        %v2887 = vpop.f32.mrb[0].mxu0
        %v2888 = vpop.f32.mrb[0].mxu0
        %v2889 = vadd.f32 0.0, %v2888
        %v2890 = vpop.f32.mrb[0].mxu0
        %2891 = vmatprep.mubr.bf16.mxu0 %v1342
        %2892 = vmatmul.mubr.bf16.gmra.mrb[0].mxu0 %v1341
        %v2893 = vpop.f32.mrb[0].mxu0
        %v2894 = vadd.f32 0.0, %v2893
        %v2895 = vpop.f32.mrb[0].mxu0
        %v2896 = vpop.f32.mrb[0].mxu0
        %v2897 = vadd.f32 0.0, %v2896
        %v2898 = vpop.f32.mrb[0].mxu0
        %2899 = vmatprep.mubr.bf16.mxu0 %v1346
        %2900 = vmatmul.mubr.bf16.gmra.mrb[0].mxu0 %v1345
        %v2901 = vpop.f32.mrb[0].mxu0
        %v2902 = vadd.f32 0.0, %v2901
        %v2903 = vpop.f32.mrb[0].mxu0
        %v2904 = vpop.f32.mrb[0].mxu0
        %v2905 = vadd.f32 0.0, %v2904
        %v2906 = vpop.f32.mrb[0].mxu0
        %2907 = vmatprep.mubr.bf16.mxu0 %v1350
        %2908 = vmatmul.mubr.bf16.gmra.mrb[0].mxu0 %v1349
        %v2909 = vpop.f32.mrb[0].mxu0
        %v2910 = vadd.f32 0.0, %v2909
        %v2911 = vpop.f32.mrb[0].mxu0
        %v2912 = vpop.f32.mrb[0].mxu0
        %v2913 = vadd.f32 0.0, %v2912
        %v2914 = vpop.f32.mrb[0].mxu0
        %2915 = vmatprep.mubr.bf16.mxu0 %v1354
        %2916 = vmatmul.mubr.bf16.gmra.mrb[0].mxu0 %v1353
        %v2917 = vpop.f32.mrb[0].mxu0
        %v2918 = vadd.f32 0.0, %v2917
        %v2919 = vpop.f32.mrb[0].mxu0
        %v2920 = vpop.f32.mrb[0].mxu0
        %v2921 = vadd.f32 0.0, %v2920
        %v2922 = vpop.f32.mrb[0].mxu0
        %2923 = vmatprep.mubr.bf16.mxu0 %v1358
        %2924 = vmatmul.mubr.bf16.gmra.mrb[0].mxu0 %v1357
        %v2925 = vpop.f32.mrb[0].mxu0
        %v2926 = vadd.f32 0.0, %v2925
        %v2927 = vpop.f32.mrb[0].mxu0
        %v2928 = vpop.f32.mrb[0].mxu0
        %v2929 = vadd.f32 0.0, %v2928
        %v2930 = vpop.f32.mrb[0].mxu0
        %2931 = vmatprep.mubr.bf16.mxu0 %v1362
        %2932 = vmatmul.mubr.bf16.gmra.mrb[0].mxu0 %v1361
        %v2933 = vpop.f32.mrb[0].mxu0
        %v2934 = vadd.f32 0.0, %v2933
        %v2935 = vpop.f32.mrb[0].mxu0
        %v2936 = vpop.f32.mrb[0].mxu0
        %v2937 = vadd.f32 0.0, %v2936
        %v2938 = vpop.f32.mrb[0].mxu0
        %2939 = vmatprep.mubr.bf16.mxu0 %v1366
        %2940 = vmatmul.mubr.bf16.gmra.mrb[0].mxu0 %v1365
        %v2941 = vpop.f32.mrb[0].mxu0
        %v2942 = vadd.f32 0.0, %v2941
        %v2943 = vpop.f32.mrb[0].mxu0
        %v2944 = vpop.f32.mrb[0].mxu0
        %v2945 = vadd.f32 0.0, %v2944
        %v2946 = vpop.f32.mrb[0].mxu0
        %2947 = vmatprep.mubr.bf16.mxu0 %v1370
        %2948 = vmatmul.mubr.bf16.gmra.mrb[0].mxu0 %v1369
        %v2949 = vpop.f32.mrb[0].mxu0
        %v2950 = vadd.f32 0.0, %v2949
        %v2951 = vpop.f32.mrb[0].mxu0
        %v2952 = vpop.f32.mrb[0].mxu0
        %v2953 = vadd.f32 0.0, %v2952
        %v2954 = vpop.f32.mrb[0].mxu0
        %2955 = vmatprep.mubr.bf16.mxu0 %v1374
        %2956 = vmatmul.mubr.bf16.gmra.mrb[0].mxu0 %v1373
        %v2957 = vpop.f32.mrb[0].mxu0
        %v2958 = vadd.f32 0.0, %v2957
        %v2959 = vpop.f32.mrb[0].mxu0
        %v2960 = vpop.f32.mrb[0].mxu0
        %v2961 = vadd.f32 0.0, %v2960
        %v2962 = vpop.f32.mrb[0].mxu0
        %2963 = vmatprep.mubr.bf16.mxu0 %v1378
        %2964 = vmatmul.mubr.bf16.gmra.mrb[0].mxu0 %v1377
        %v2965 = vpop.f32.mrb[0].mxu0
        %v2966 = vadd.f32 0.0, %v2965
        %v2967 = vpop.f32.mrb[0].mxu0
        %v2968 = vpop.f32.mrb[0].mxu0
        %v2969 = vadd.f32 0.0, %v2968
        %v2970 = vpop.f32.mrb[0].mxu0
        %2971 = vmatprep.mubr.bf16.mxu0 %v1382
        %2972 = vmatmul.mubr.bf16.gmra.mrb[0].mxu0 %v1381
        %v2973 = vpop.f32.mrb[0].mxu0
        %v2974 = vadd.f32 0.0, %v2973
        %v2975 = vpop.f32.mrb[0].mxu0
        %v2976 = vpop.f32.mrb[0].mxu0
        %v2977 = vadd.f32 0.0, %v2976
        %v2978 = vpop.f32.mrb[0].mxu0
        %2979 = vmatprep.mubr.bf16.mxu0 %v1386
        %2980 = vmatmul.mubr.bf16.gmra.mrb[0].mxu0 %v1385
        %v2981 = vpop.f32.mrb[0].mxu0
        %v2982 = vadd.f32 0.0, %v2981
        %v2983 = vpop.f32.mrb[0].mxu0
        %v2984 = vpop.f32.mrb[0].mxu0
        %v2985 = vadd.f32 0.0, %v2984
        %v2986 = vpop.f32.mrb[0].mxu0
        %2987 = vmatprep.mubr.bf16.mxu0 %v1390
        %2988 = vmatmul.mubr.bf16.gmra.mrb[0].mxu0 %v1389
        %v2989 = vpop.f32.mrb[0].mxu0
        %v2990 = vadd.f32 0.0, %v2989
        %v2991 = vpop.f32.mrb[0].mxu0
        %v2992 = vpop.f32.mrb[0].mxu0
        %v2993 = vadd.f32 0.0, %v2992
        %v2994 = vpop.f32.mrb[0].mxu0
        %2995 = vmatprep.mubr.bf16.mxu0 %v1394
        %2996 = vmatmul.mubr.bf16.gmra.mrb[0].mxu0 %v1393
        %v2997 = vpop.f32.mrb[0].mxu0
        %v2998 = vadd.f32 0.0, %v2997
        %v2999 = vpop.f32.mrb[0].mxu0
        %v3000 = vpop.f32.mrb[0].mxu0
        %v3001 = vadd.f32 0.0, %v3000
        %v3002 = vpop.f32.mrb[0].mxu0
        %3003 = vmatprep.mubr.bf16.mxu0 %v1398
        %3004 = vmatmul.mubr.bf16.gmra.mrb[0].mxu0 %v1397
        %v3005 = vpop.f32.mrb[0].mxu0
        %v3006 = vadd.f32 0.0, %v3005
        %v3007 = vpop.f32.mrb[0].mxu0
        %v3008 = vpop.f32.mrb[0].mxu0
        %v3009 = vadd.f32 0.0, %v3008
        %v3010 = vpop.f32.mrb[0].mxu0
        %3011 = vmatprep.mubr.bf16.mxu0 %v1402
        %3012 = vmatmul.mubr.bf16.gmra.mrb[0].mxu0 %v1401
        %v3013 = vpop.f32.mrb[0].mxu0
        %v3014 = vadd.f32 0.0, %v3013
        %v3015 = vpop.f32.mrb[0].mxu0
        %v3016 = vpop.f32.mrb[0].mxu0
        %v3017 = vadd.f32 0.0, %v3016
        %v3018 = vpop.f32.mrb[0].mxu0
        %3019 = vmatprep.mubr.bf16.mxu0 %v1406
        %3020 = vmatmul.mubr.bf16.gmra.mrb[0].mxu0 %v1405
        %v3021 = vpop.f32.mrb[0].mxu0
        %v3022 = vadd.f32 0.0, %v3021
        %v3023 = vpop.f32.mrb[0].mxu0
        %v3024 = vpop.f32.mrb[0].mxu0
        %v3025 = vadd.f32 0.0, %v3024
        %v3026 = vpop.f32.mrb[0].mxu0
        %3027 = vmatprep.mubr.bf16.mxu0 %v1410
        %3028 = vmatmul.mubr.bf16.gmra.mrb[0].mxu0 %v1409
        %v3029 = vpop.f32.mrb[0].mxu0
        %v3030 = vadd.f32 0.0, %v3029
        %v3031 = vpop.f32.mrb[0].mxu0
        %v3032 = vpop.f32.mrb[0].mxu0
        %v3033 = vadd.f32 0.0, %v3032
        %v3034 = vpop.f32.mrb[0].mxu0
        %3035 = vmatprep.mubr.bf16.mxu0 %v1414
        %3036 = vmatmul.mubr.bf16.gmra.mrb[0].mxu0 %v1413
        %v3037 = vpop.f32.mrb[0].mxu0
        %v3038 = vadd.f32 0.0, %v3037
        %v3039 = vpop.f32.mrb[0].mxu0
        %v3040 = vpop.f32.mrb[0].mxu0
        %v3041 = vadd.f32 0.0, %v3040
        %v3042 = vpop.f32.mrb[0].mxu0
        %3043 = vmatprep.mubr.bf16.mxu0 %v1418
        %3044 = vmatmul.mubr.bf16.gmra.mrb[0].mxu0 %v1417
        %v3045 = vpop.f32.mrb[0].mxu0
        %v3046 = vadd.f32 0.0, %v3045
        %v3047 = vpop.f32.mrb[0].mxu0
        %v3048 = vpop.f32.mrb[0].mxu0
        %v3049 = vadd.f32 0.0, %v3048
        %v3050 = vpop.f32.mrb[0].mxu0
        %3051 = vmatprep.mubr.bf16.mxu0 %v1422
        %3052 = vmatmul.mubr.bf16.gmra.mrb[0].mxu0 %v1421
        %v3053 = vpop.f32.mrb[0].mxu0
        %v3054 = vadd.f32 0.0, %v3053
        %v3055 = vpop.f32.mrb[0].mxu0
        %v3056 = vpop.f32.mrb[0].mxu0
        %v3057 = vadd.f32 0.0, %v3056
        %v3058 = vpop.f32.mrb[0].mxu0
        %3059 = vdwg.mxu0
        %3060 = vmatprep.subr.bf16.mxu0 0
        %3061 = vmatpush1.bf16.msra.mxu0 %v1923
        %3062 = vmatprep.subr.bf16.mxu0 0
        %3063 = vmatpush1.bf16.msra.mxu0 %v1926
        %3064 = vmatprep.subr.bf16.mxu0 0
        %3065 = vmatpush1.bf16.msra.mxu0 %v1929
        %3066 = vmatprep.subr.bf16.mxu0 0
        %3067 = vmatpush1.bf16.msra.mxu0 %v1932
        %3068 = vmatprep.subr.bf16.mxu0 0
        %3069 = vmatpush1.bf16.msra.mxu0 %v1935
        %3070 = vmatprep.subr.bf16.mxu0 0
        %3071 = vmatpush1.bf16.msra.mxu0 %v1938
        %3072 = vmatprep.subr.bf16.mxu0 0
        %3073 = vmatpush1.bf16.msra.mxu0 %v1941
        %3074 = vmatprep.subr.bf16.mxu0 0
        %3075 = vmatpush1.bf16.msra.mxu0 %v1944
        %3076 = vmatprep.subr.bf16.mxu0 0
        %3077 = vmatpush1.bf16.msra.mxu0 %v1947
        %3078 = vmatprep.subr.bf16.mxu0 0
        %3079 = vmatpush1.bf16.msra.mxu0 %v1950
        %3080 = vmatprep.subr.bf16.mxu0 0
        %3081 = vmatpush1.bf16.msra.mxu0 %v1953
        %3082 = vmatprep.subr.bf16.mxu0 0
        %3083 = vmatpush1.bf16.msra.mxu0 %v1956
        %3084 = vmatprep.subr.bf16.mxu0 0
        %3085 = vmatpush1.bf16.msra.mxu0 %v1959
        %3086 = vmatprep.subr.bf16.mxu0 0
        %3087 = vmatpush1.bf16.msra.mxu0 %v1962
        %3088 = vmatprep.subr.bf16.mxu0 0
        %3089 = vmatpush1.bf16.msra.mxu0 %v1965
        %3090 = vmatprep.subr.bf16.mxu0 0
        %3091 = vmatpush1.bf16.msra.mxu0 %v1968
        %3092 = vmatprep.mubr.bf16.mxu0 %v1300
        %3093 = vmatmul.mubr.bf16.gmra.mrb[0].mxu0 %v1299
        %v3094 = vpop.f32.mrb[0].mxu0
        %v3095 = vadd.f32 %v2806, %v3094
        %v3096 = vpop.f32.mrb[0].mxu0
        %v3097 = vpop.f32.mrb[0].mxu0
        %v3098 = vadd.f32 %v2809, %v3097
        %v3099 = vpop.f32.mrb[0].mxu0
        %3100 = vmatprep.mubr.bf16.mxu0 %v1304
        %3101 = vmatmul.mubr.bf16.gmra.mrb[0].mxu0 %v1303
        %v3102 = vpop.f32.mrb[0].mxu0
        %v3103 = vadd.f32 %v2814, %v3102
        %v3104 = vpop.f32.mrb[0].mxu0
        %v3105 = vpop.f32.mrb[0].mxu0
        %v3106 = vadd.f32 %v2817, %v3105
        %v3107 = vpop.f32.mrb[0].mxu0
        %3108 = vmatprep.mubr.bf16.mxu0 %v1308
        %3109 = vmatmul.mubr.bf16.gmra.mrb[0].mxu0 %v1307
        %v3110 = vpop.f32.mrb[0].mxu0
        %v3111 = vadd.f32 %v2822, %v3110
        %v3112 = vpop.f32.mrb[0].mxu0
        %v3113 = vpop.f32.mrb[0].mxu0
        %v3114 = vadd.f32 %v2825, %v3113
        %v3115 = vpop.f32.mrb[0].mxu0
        %3116 = vmatprep.mubr.bf16.mxu0 %v1312
        %3117 = vmatmul.mubr.bf16.gmra.mrb[0].mxu0 %v1311
        %v3118 = vpop.f32.mrb[0].mxu0
        %v3119 = vadd.f32 %v2830, %v3118
        %v3120 = vpop.f32.mrb[0].mxu0
        %v3121 = vpop.f32.mrb[0].mxu0
        %v3122 = vadd.f32 %v2833, %v3121
        %v3123 = vpop.f32.mrb[0].mxu0
        %3124 = vmatprep.mubr.bf16.mxu0 %v1316
        %3125 = vmatmul.mubr.bf16.gmra.mrb[0].mxu0 %v1315
        %v3126 = vpop.f32.mrb[0].mxu0
        %v3127 = vadd.f32 %v2838, %v3126
        %v3128 = vpop.f32.mrb[0].mxu0
        %v3129 = vpop.f32.mrb[0].mxu0
        %v3130 = vadd.f32 %v2841, %v3129
        %v3131 = vpop.f32.mrb[0].mxu0
        %3132 = vmatprep.mubr.bf16.mxu0 %v1320
        %3133 = vmatmul.mubr.bf16.gmra.mrb[0].mxu0 %v1319
        %v3134 = vpop.f32.mrb[0].mxu0
        %v3135 = vadd.f32 %v2846, %v3134
        %v3136 = vpop.f32.mrb[0].mxu0
        %v3137 = vpop.f32.mrb[0].mxu0
        %v3138 = vadd.f32 %v2849, %v3137
        %v3139 = vpop.f32.mrb[0].mxu0
        %3140 = vmatprep.mubr.bf16.mxu0 %v1324
        %3141 = vmatmul.mubr.bf16.gmra.mrb[0].mxu0 %v1323
        %v3142 = vpop.f32.mrb[0].mxu0
        %v3143 = vadd.f32 %v2854, %v3142
        %v3144 = vpop.f32.mrb[0].mxu0
        %v3145 = vpop.f32.mrb[0].mxu0
        %v3146 = vadd.f32 %v2857, %v3145
        %v3147 = vpop.f32.mrb[0].mxu0
        %3148 = vmatprep.mubr.bf16.mxu0 %v1328
        %3149 = vmatmul.mubr.bf16.gmra.mrb[0].mxu0 %v1327
        %v3150 = vpop.f32.mrb[0].mxu0
        %v3151 = vadd.f32 %v2862, %v3150
        %v3152 = vpop.f32.mrb[0].mxu0
        %v3153 = vpop.f32.mrb[0].mxu0
        %v3154 = vadd.f32 %v2865, %v3153
        %v3155 = vpop.f32.mrb[0].mxu0
        %3156 = vmatprep.mubr.bf16.mxu0 %v1332
        %3157 = vmatmul.mubr.bf16.gmra.mrb[0].mxu0 %v1331
        %v3158 = vpop.f32.mrb[0].mxu0
        %v3159 = vadd.f32 %v2870, %v3158
        %v3160 = vpop.f32.mrb[0].mxu0
        %v3161 = vpop.f32.mrb[0].mxu0
        %v3162 = vadd.f32 %v2873, %v3161
        %v3163 = vpop.f32.mrb[0].mxu0
        %3164 = vmatprep.mubr.bf16.mxu0 %v1336
        %3165 = vmatmul.mubr.bf16.gmra.mrb[0].mxu0 %v1335
        %v3166 = vpop.f32.mrb[0].mxu0
        %v3167 = vadd.f32 %v2878, %v3166
        %v3168 = vpop.f32.mrb[0].mxu0
        %v3169 = vpop.f32.mrb[0].mxu0
        %v3170 = vadd.f32 %v2881, %v3169
        %v3171 = vpop.f32.mrb[0].mxu0
        %3172 = vmatprep.mubr.bf16.mxu0 %v1340
        %3173 = vmatmul.mubr.bf16.gmra.mrb[0].mxu0 %v1339
        %v3174 = vpop.f32.mrb[0].mxu0
        %v3175 = vadd.f32 %v2886, %v3174
        %v3176 = vpop.f32.mrb[0].mxu0
        %v3177 = vpop.f32.mrb[0].mxu0
        %v3178 = vadd.f32 %v2889, %v3177
        %v3179 = vpop.f32.mrb[0].mxu0
        %3180 = vmatprep.mubr.bf16.mxu0 %v1344
        %3181 = vmatmul.mubr.bf16.gmra.mrb[0].mxu0 %v1343
        %v3182 = vpop.f32.mrb[0].mxu0
        %v3183 = vadd.f32 %v2894, %v3182
        %v3184 = vpop.f32.mrb[0].mxu0
        %v3185 = vpop.f32.mrb[0].mxu0
        %v3186 = vadd.f32 %v2897, %v3185
        %v3187 = vpop.f32.mrb[0].mxu0
        %3188 = vmatprep.mubr.bf16.mxu0 %v1348
        %3189 = vmatmul.mubr.bf16.gmra.mrb[0].mxu0 %v1347
        %v3190 = vpop.f32.mrb[0].mxu0
        %v3191 = vadd.f32 %v2902, %v3190
        %v3192 = vpop.f32.mrb[0].mxu0
        %v3193 = vpop.f32.mrb[0].mxu0
        %v3194 = vadd.f32 %v2905, %v3193
        %v3195 = vpop.f32.mrb[0].mxu0
        %3196 = vmatprep.mubr.bf16.mxu0 %v1352
        %3197 = vmatmul.mubr.bf16.gmra.mrb[0].mxu0 %v1351
        %v3198 = vpop.f32.mrb[0].mxu0
        %v3199 = vadd.f32 %v2910, %v3198
        %v3200 = vpop.f32.mrb[0].mxu0
        %v3201 = vpop.f32.mrb[0].mxu0
        %v3202 = vadd.f32 %v2913, %v3201
        %v3203 = vpop.f32.mrb[0].mxu0
        %3204 = vmatprep.mubr.bf16.mxu0 %v1356
        %3205 = vmatmul.mubr.bf16.gmra.mrb[0].mxu0 %v1355
        %v3206 = vpop.f32.mrb[0].mxu0
        %v3207 = vadd.f32 %v2918, %v3206
        %v3208 = vpop.f32.mrb[0].mxu0
        %v3209 = vpop.f32.mrb[0].mxu0
        %v3210 = vadd.f32 %v2921, %v3209
        %v3211 = vpop.f32.mrb[0].mxu0
        %3212 = vmatprep.mubr.bf16.mxu0 %v1360
        %3213 = vmatmul.mubr.bf16.gmra.mrb[0].mxu0 %v1359
        %v3214 = vpop.f32.mrb[0].mxu0
        %v3215 = vadd.f32 %v2926, %v3214
        %v3216 = vpop.f32.mrb[0].mxu0
        %v3217 = vpop.f32.mrb[0].mxu0
        %v3218 = vadd.f32 %v2929, %v3217
        %v3219 = vpop.f32.mrb[0].mxu0
        %3220 = vmatprep.mubr.bf16.mxu0 %v1364
        %3221 = vmatmul.mubr.bf16.gmra.mrb[0].mxu0 %v1363
        %v3222 = vpop.f32.mrb[0].mxu0
        %v3223 = vadd.f32 %v2934, %v3222
        %v3224 = vpop.f32.mrb[0].mxu0
        %v3225 = vpop.f32.mrb[0].mxu0
        %v3226 = vadd.f32 %v2937, %v3225
        %v3227 = vpop.f32.mrb[0].mxu0
        %3228 = vmatprep.mubr.bf16.mxu0 %v1368
        %3229 = vmatmul.mubr.bf16.gmra.mrb[0].mxu0 %v1367
        %v3230 = vpop.f32.mrb[0].mxu0
        %v3231 = vadd.f32 %v2942, %v3230
        %v3232 = vpop.f32.mrb[0].mxu0
        %v3233 = vpop.f32.mrb[0].mxu0
        %v3234 = vadd.f32 %v2945, %v3233
        %v3235 = vpop.f32.mrb[0].mxu0
        %3236 = vmatprep.mubr.bf16.mxu0 %v1372
        %3237 = vmatmul.mubr.bf16.gmra.mrb[0].mxu0 %v1371
        %v3238 = vpop.f32.mrb[0].mxu0
        %v3239 = vadd.f32 %v2950, %v3238
        %v3240 = vpop.f32.mrb[0].mxu0
        %v3241 = vpop.f32.mrb[0].mxu0
        %v3242 = vadd.f32 %v2953, %v3241
        %v3243 = vpop.f32.mrb[0].mxu0
        %3244 = vmatprep.mubr.bf16.mxu0 %v1376
        %3245 = vmatmul.mubr.bf16.gmra.mrb[0].mxu0 %v1375
        %v3246 = vpop.f32.mrb[0].mxu0
        %v3247 = vadd.f32 %v2958, %v3246
        %v3248 = vpop.f32.mrb[0].mxu0
        %v3249 = vpop.f32.mrb[0].mxu0
        %v3250 = vadd.f32 %v2961, %v3249
        %v3251 = vpop.f32.mrb[0].mxu0
        %3252 = vmatprep.mubr.bf16.mxu0 %v1380
        %3253 = vmatmul.mubr.bf16.gmra.mrb[0].mxu0 %v1379
        %v3254 = vpop.f32.mrb[0].mxu0
        %v3255 = vadd.f32 %v2966, %v3254
        %v3256 = vpop.f32.mrb[0].mxu0
        %v3257 = vpop.f32.mrb[0].mxu0
        %v3258 = vadd.f32 %v2969, %v3257
        %v3259 = vpop.f32.mrb[0].mxu0
        %3260 = vmatprep.mubr.bf16.mxu0 %v1384
        %3261 = vmatmul.mubr.bf16.gmra.mrb[0].mxu0 %v1383
        %v3262 = vpop.f32.mrb[0].mxu0
        %v3263 = vadd.f32 %v2974, %v3262
        %v3264 = vpop.f32.mrb[0].mxu0
        %v3265 = vpop.f32.mrb[0].mxu0
        %v3266 = vadd.f32 %v2977, %v3265
        %v3267 = vpop.f32.mrb[0].mxu0
        %3268 = vmatprep.mubr.bf16.mxu0 %v1388
        %3269 = vmatmul.mubr.bf16.gmra.mrb[0].mxu0 %v1387
        %v3270 = vpop.f32.mrb[0].mxu0
        %v3271 = vadd.f32 %v2982, %v3270
        %v3272 = vpop.f32.mrb[0].mxu0
        %v3273 = vpop.f32.mrb[0].mxu0
        %v3274 = vadd.f32 %v2985, %v3273
        %v3275 = vpop.f32.mrb[0].mxu0
        %3276 = vmatprep.mubr.bf16.mxu0 %v1392
        %3277 = vmatmul.mubr.bf16.gmra.mrb[0].mxu0 %v1391
        %v3278 = vpop.f32.mrb[0].mxu0
        %v3279 = vadd.f32 %v2990, %v3278
        %v3280 = vpop.f32.mrb[0].mxu0
        %v3281 = vpop.f32.mrb[0].mxu0
        %v3282 = vadd.f32 %v2993, %v3281
        %v3283 = vpop.f32.mrb[0].mxu0
        %3284 = vmatprep.mubr.bf16.mxu0 %v1396
        %3285 = vmatmul.mubr.bf16.gmra.mrb[0].mxu0 %v1395
        %v3286 = vpop.f32.mrb[0].mxu0
        %v3287 = vadd.f32 %v2998, %v3286
        %v3288 = vpop.f32.mrb[0].mxu0
        %v3289 = vpop.f32.mrb[0].mxu0
        %v3290 = vadd.f32 %v3001, %v3289
        %v3291 = vpop.f32.mrb[0].mxu0
        %3292 = vmatprep.mubr.bf16.mxu0 %v1400
        %3293 = vmatmul.mubr.bf16.gmra.mrb[0].mxu0 %v1399
        %v3294 = vpop.f32.mrb[0].mxu0
        %v3295 = vadd.f32 %v3006, %v3294
        %v3296 = vpop.f32.mrb[0].mxu0
        %v3297 = vpop.f32.mrb[0].mxu0
        %v3298 = vadd.f32 %v3009, %v3297
        %v3299 = vpop.f32.mrb[0].mxu0
        %3300 = vmatprep.mubr.bf16.mxu0 %v1404
        %3301 = vmatmul.mubr.bf16.gmra.mrb[0].mxu0 %v1403
        %v3302 = vpop.f32.mrb[0].mxu0
        %v3303 = vadd.f32 %v3014, %v3302
        %v3304 = vpop.f32.mrb[0].mxu0
        %v3305 = vpop.f32.mrb[0].mxu0
        %v3306 = vadd.f32 %v3017, %v3305
        %v3307 = vpop.f32.mrb[0].mxu0
        %3308 = vmatprep.mubr.bf16.mxu0 %v1408
        %3309 = vmatmul.mubr.bf16.gmra.mrb[0].mxu0 %v1407
        %v3310 = vpop.f32.mrb[0].mxu0
        %v3311 = vadd.f32 %v3022, %v3310
        %v3312 = vpop.f32.mrb[0].mxu0
        %v3313 = vpop.f32.mrb[0].mxu0
        %v3314 = vadd.f32 %v3025, %v3313
        %v3315 = vpop.f32.mrb[0].mxu0
        %3316 = vmatprep.mubr.bf16.mxu0 %v1412
        %3317 = vmatmul.mubr.bf16.gmra.mrb[0].mxu0 %v1411
        %v3318 = vpop.f32.mrb[0].mxu0
        %v3319 = vadd.f32 %v3030, %v3318
        %v3320 = vpop.f32.mrb[0].mxu0
        %v3321 = vpop.f32.mrb[0].mxu0
        %v3322 = vadd.f32 %v3033, %v3321
        %v3323 = vpop.f32.mrb[0].mxu0
        %3324 = vmatprep.mubr.bf16.mxu0 %v1416
        %3325 = vmatmul.mubr.bf16.gmra.mrb[0].mxu0 %v1415
        %v3326 = vpop.f32.mrb[0].mxu0
        %v3327 = vadd.f32 %v3038, %v3326
        %v3328 = vpop.f32.mrb[0].mxu0
        %v3329 = vpop.f32.mrb[0].mxu0
        %v3330 = vadd.f32 %v3041, %v3329
        %v3331 = vpop.f32.mrb[0].mxu0
        %3332 = vmatprep.mubr.bf16.mxu0 %v1420
        %3333 = vmatmul.mubr.bf16.gmra.mrb[0].mxu0 %v1419
        %v3334 = vpop.f32.mrb[0].mxu0
        %v3335 = vadd.f32 %v3046, %v3334
        %v3336 = vpop.f32.mrb[0].mxu0
        %v3337 = vpop.f32.mrb[0].mxu0
        %v3338 = vadd.f32 %v3049, %v3337
        %v3339 = vpop.f32.mrb[0].mxu0
        %3340 = vmatprep.mubr.bf16.mxu0 %v1424
        %3341 = vmatmul.mubr.bf16.gmra.mrb[0].mxu0 %v1423
        %v3342 = vpop.f32.mrb[0].mxu0
        %v3343 = vadd.f32 %v3054, %v3342
        %v3344 = vpop.f32.mrb[0].mxu0
        %v3345 = vpop.f32.mrb[0].mxu0
        %v3346 = vadd.f32 %v3057, %v3345
        %v3347 = vpop.f32.mrb[0].mxu0
        %3348 = vdwg.mxu0
        %v3349 = vadd.f32 %v465, %v2453
        %v3350 = vadd.f32 %v466, %v2455
        %v3351 = vadd.f32 %v467, %v3095
        %v3352 = vadd.f32 %v468, %v2457
        %v3353 = vadd.f32 %v469, %v2459
        %v3354 = vadd.f32 %v470, %v3098
        %v3355 = vadd.f32 %v471, %v2463
        %v3356 = vadd.f32 %v472, %v2465
        %v3357 = vadd.f32 %v473, %v3103
        %v3358 = vadd.f32 %v474, %v2467
        %v3359 = vadd.f32 %v475, %v2469
        %v3360 = vadd.f32 %v476, %v3106
        %v3361 = vadd.f32 %v477, %v2473
        %v3362 = vadd.f32 %v478, %v2475
        %v3363 = vadd.f32 %v479, %v3111
        %v3364 = vadd.f32 %v480, %v2477
        %v3365 = vadd.f32 %v481, %v2479
        %v3366 = vadd.f32 %v482, %v3114
        %v3367 = vadd.f32 %v483, %v2483
        %v3368 = vadd.f32 %v484, %v2485
        %v3369 = vadd.f32 %v485, %v3119
        %v3370 = vadd.f32 %v486, %v2487
        %v3371 = vadd.f32 %v487, %v2489
        %v3372 = vadd.f32 %v488, %v3122
        %v3373 = vadd.f32 %v489, %v2493
        %v3374 = vadd.f32 %v490, %v2495
        %v3375 = vadd.f32 %v491, %v3127
        %v3376 = vadd.f32 %v492, %v2497
        %v3377 = vadd.f32 %v493, %v2499
        %v3378 = vadd.f32 %v494, %v3130
        %v3379 = vadd.f32 %v495, %v2503
        %v3380 = vadd.f32 %v496, %v2505
        %v3381 = vadd.f32 %v497, %v3135
        %v3382 = vadd.f32 %v498, %v2507
        %v3383 = vadd.f32 %v499, %v2509
        %v3384 = vadd.f32 %v500, %v3138
        %v3385 = vadd.f32 %v501, %v2513
        %v3386 = vadd.f32 %v502, %v2515
        %v3387 = vadd.f32 %v503, %v3143
        %v3388 = vadd.f32 %v504, %v2517
        %v3389 = vadd.f32 %v505, %v2519
        %v3390 = vadd.f32 %v506, %v3146
        %v3391 = vadd.f32 %v507, %v2523
        %v3392 = vadd.f32 %v508, %v2525
        %v3393 = vadd.f32 %v509, %v3151
        %v3394 = vadd.f32 %v510, %v2527
        %v3395 = vadd.f32 %v511, %v2529
        %v3396 = vadd.f32 %v512, %v3154
        %v3397 = vadd.f32 %v513, %v2533
        %v3398 = vadd.f32 %v514, %v2535
        %v3399 = vadd.f32 %v515, %v3159
        %v3400 = vadd.f32 %v516, %v2537
        %v3401 = vadd.f32 %v517, %v2539
        %v3402 = vadd.f32 %v518, %v3162
        %v3403 = vadd.f32 %v519, %v2543
        %v3404 = vadd.f32 %v520, %v2545
        %v3405 = vadd.f32 %v521, %v3167
        %v3406 = vadd.f32 %v522, %v2547
        %v3407 = vadd.f32 %v523, %v2549
        %v3408 = vadd.f32 %v524, %v3170
        %v3409 = vadd.f32 %v525, %v2553
        %v3410 = vadd.f32 %v526, %v2555
        %v3411 = vadd.f32 %v527, %v3175
        %v3412 = vadd.f32 %v528, %v2557
        %v3413 = vadd.f32 %v529, %v2559
        %v3414 = vadd.f32 %v530, %v3178
        %v3415 = vadd.f32 %v531, %v2563
        %v3416 = vadd.f32 %v532, %v2565
        %v3417 = vadd.f32 %v533, %v3183
        %v3418 = vadd.f32 %v534, %v2567
        %v3419 = vadd.f32 %v535, %v2569
        %v3420 = vadd.f32 %v536, %v3186
        %v3421 = vadd.f32 %v537, %v2573
        %v3422 = vadd.f32 %v538, %v2575
        %v3423 = vadd.f32 %v539, %v3191
        %v3424 = vadd.f32 %v540, %v2577
        %v3425 = vadd.f32 %v541, %v2579
        %v3426 = vadd.f32 %v542, %v3194
        %v3427 = vadd.f32 %v543, %v2583
        %v3428 = vadd.f32 %v544, %v2585
        %v3429 = vadd.f32 %v545, %v3199
        %v3430 = vadd.f32 %v546, %v2587
        %v3431 = vadd.f32 %v547, %v2589
        %v3432 = vadd.f32 %v548, %v3202
        %v3433 = vadd.f32 %v549, %v2593
        %v3434 = vadd.f32 %v550, %v2595
        %v3435 = vadd.f32 %v551, %v3207
        %v3436 = vadd.f32 %v552, %v2597
        %v3437 = vadd.f32 %v553, %v2599
        %v3438 = vadd.f32 %v554, %v3210
        %v3439 = vadd.f32 %v555, %v2603
        %v3440 = vadd.f32 %v556, %v2605
        %v3441 = vadd.f32 %v557, %v3215
        %v3442 = vadd.f32 %v558, %v2607
        %v3443 = vadd.f32 %v559, %v2609
        %v3444 = vadd.f32 %v560, %v3218
        %v3445 = vadd.f32 %v561, %v2613
        %v3446 = vadd.f32 %v562, %v2615
        %v3447 = vadd.f32 %v563, %v3223
        %v3448 = vadd.f32 %v564, %v2617
        %v3449 = vadd.f32 %v565, %v2619
        %v3450 = vadd.f32 %v566, %v3226
        %v3451 = vadd.f32 %v567, %v2623
        %v3452 = vadd.f32 %v568, %v2625
        %v3453 = vadd.f32 %v569, %v3231
        %v3454 = vadd.f32 %v570, %v2627
        %v3455 = vadd.f32 %v571, %v2629
        %v3456 = vadd.f32 %v572, %v3234
        %v3457 = vadd.f32 %v573, %v2633
        %v3458 = vadd.f32 %v574, %v2635
        %v3459 = vadd.f32 %v575, %v3239
        %v3460 = vadd.f32 %v576, %v2637
        %v3461 = vadd.f32 %v577, %v2639
        %v3462 = vadd.f32 %v578, %v3242
        %v3463 = vadd.f32 %v579, %v2643
        %v3464 = vadd.f32 %v580, %v2645
        %v3465 = vadd.f32 %v581, %v3247
        %v3466 = vadd.f32 %v582, %v2647
        %v3467 = vadd.f32 %v583, %v2649
        %v3468 = vadd.f32 %v584, %v3250
        %v3469 = vadd.f32 %v585, %v2653
        %v3470 = vadd.f32 %v586, %v2655
        %v3471 = vadd.f32 %v587, %v3255
        %v3472 = vadd.f32 %v588, %v2657
        %v3473 = vadd.f32 %v589, %v2659
        %v3474 = vadd.f32 %v590, %v3258
        %v3475 = vadd.f32 %v591, %v2663
        %v3476 = vadd.f32 %v592, %v2665
        %v3477 = vadd.f32 %v593, %v3263
        %v3478 = vadd.f32 %v594, %v2667
        %v3479 = vadd.f32 %v595, %v2669
        %v3480 = vadd.f32 %v596, %v3266
        %v3481 = vadd.f32 %v597, %v2673
        %v3482 = vadd.f32 %v598, %v2675
        %v3483 = vadd.f32 %v599, %v3271
        %v3484 = vadd.f32 %v600, %v2677
        %v3485 = vadd.f32 %v601, %v2679
        %v3486 = vadd.f32 %v602, %v3274
        %v3487 = vadd.f32 %v603, %v2683
        %v3488 = vadd.f32 %v604, %v2685
        %v3489 = vadd.f32 %v605, %v3279
        %v3490 = vadd.f32 %v606, %v2687
        %v3491 = vadd.f32 %v607, %v2689
        %v3492 = vadd.f32 %v608, %v3282
        %v3493 = vadd.f32 %v609, %v2693
        %v3494 = vadd.f32 %v610, %v2695
        %v3495 = vadd.f32 %v611, %v3287
        %v3496 = vadd.f32 %v612, %v2697
        %v3497 = vadd.f32 %v613, %v2699
        %v3498 = vadd.f32 %v614, %v3290
        %v3499 = vadd.f32 %v615, %v2703
        %v3500 = vadd.f32 %v616, %v2705
        %v3501 = vadd.f32 %v617, %v3295
        %v3502 = vadd.f32 %v618, %v2707
        %v3503 = vadd.f32 %v619, %v2709
        %v3504 = vadd.f32 %v620, %v3298
        %v3505 = vadd.f32 %v621, %v2713
        %v3506 = vadd.f32 %v622, %v2715
        %v3507 = vadd.f32 %v623, %v3303
        %v3508 = vadd.f32 %v624, %v2717
        %v3509 = vadd.f32 %v625, %v2719
        %v3510 = vadd.f32 %v626, %v3306
        %v3511 = vadd.f32 %v627, %v2723
        %v3512 = vadd.f32 %v628, %v2725
        %v3513 = vadd.f32 %v629, %v3311
        %v3514 = vadd.f32 %v630, %v2727
        %v3515 = vadd.f32 %v631, %v2729
        %v3516 = vadd.f32 %v632, %v3314
        %v3517 = vadd.f32 %v633, %v2733
        %v3518 = vadd.f32 %v634, %v2735
        %v3519 = vadd.f32 %v635, %v3319
        %v3520 = vadd.f32 %v636, %v2737
        %v3521 = vadd.f32 %v637, %v2739
        %v3522 = vadd.f32 %v638, %v3322
        %v3523 = vadd.f32 %v639, %v2743
        %v3524 = vadd.f32 %v640, %v2745
        %v3525 = vadd.f32 %v641, %v3327
        %v3526 = vadd.f32 %v642, %v2747
        %v3527 = vadd.f32 %v643, %v2749
        %v3528 = vadd.f32 %v644, %v3330
        %v3529 = vadd.f32 %v645, %v2753
        %v3530 = vadd.f32 %v646, %v2755
        %v3531 = vadd.f32 %v647, %v3335
        %v3532 = vadd.f32 %v648, %v2757
        %v3533 = vadd.f32 %v649, %v2759
        %v3534 = vadd.f32 %v650, %v3338
        %v3535 = vadd.f32 %v651, %v2763
        %v3536 = vadd.f32 %v652, %v2765
        %v3537 = vadd.f32 %v653, %v3343
        %v3538 = vadd.f32 %v654, %v2767
        %v3539 = vadd.f32 %v655, %v2769
        %v3540 = vadd.f32 %v656, %v3346
        %3541 = vst [vmem:[#allocation2] sm:$0xff] %v3349
        %3542 = vst [vmem:[#allocation2 + $0x8] sm:$0xff] %v3350
        %3543 = vst [vmem:[#allocation2 + $0x10] sm:$0xff] %v3351
        %3544 = vst [vmem:[#allocation2 + $0x18] sm:$0xff] %v3352
        %3545 = vst [vmem:[#allocation2 + $0x20] sm:$0xff] %v3353
        %3546 = vst [vmem:[#allocation2 + $0x28] sm:$0xff] %v3354
        %3547 = vst [vmem:[#allocation2 + $0x30] sm:$0xff] %v3355
        %3548 = vst [vmem:[#allocation2 + $0x38] sm:$0xff] %v3356
        %3549 = vst [vmem:[#allocation2 + $0x40] sm:$0xff] %v3357
        %3550 = vst [vmem:[#allocation2 + $0x48] sm:$0xff] %v3358
        %3551 = vst [vmem:[#allocation2 + $0x50] sm:$0xff] %v3359
        %3552 = vst [vmem:[#allocation2 + $0x58] sm:$0xff] %v3360
        %3553 = vst [vmem:[#allocation2 + $0x60] sm:$0xff] %v3361
        %3554 = vst [vmem:[#allocation2 + $0x68] sm:$0xff] %v3362
        %3555 = vst [vmem:[#allocation2 + $0x70] sm:$0xff] %v3363
        %3556 = vst [vmem:[#allocation2 + $0x78] sm:$0xff] %v3364
        %3557 = vst [vmem:[#allocation2 + $0x80] sm:$0xff] %v3365
        %3558 = vst [vmem:[#allocation2 + $0x88] sm:$0xff] %v3366
        %3559 = vst [vmem:[#allocation2 + $0x90] sm:$0xff] %v3367
        %3560 = vst [vmem:[#allocation2 + $0x98] sm:$0xff] %v3368
        %3561 = vst [vmem:[#allocation2 + $0xa0] sm:$0xff] %v3369
        %3562 = vst [vmem:[#allocation2 + $0xa8] sm:$0xff] %v3370
        %3563 = vst [vmem:[#allocation2 + $0xb0] sm:$0xff] %v3371
        %3564 = vst [vmem:[#allocation2 + $0xb8] sm:$0xff] %v3372
        %3565 = vst [vmem:[#allocation2 + $0xc0] sm:$0xff] %v3373
        %3566 = vst [vmem:[#allocation2 + $0xc8] sm:$0xff] %v3374
        %3567 = vst [vmem:[#allocation2 + $0xd0] sm:$0xff] %v3375
        %3568 = vst [vmem:[#allocation2 + $0xd8] sm:$0xff] %v3376
        %3569 = vst [vmem:[#allocation2 + $0xe0] sm:$0xff] %v3377
        %3570 = vst [vmem:[#allocation2 + $0xe8] sm:$0xff] %v3378
        %3571 = vst [vmem:[#allocation2 + $0xf0] sm:$0xff] %v3379
        %3572 = vst [vmem:[#allocation2 + $0xf8] sm:$0xff] %v3380
        %3573 = vst [vmem:[#allocation2 + $0x100] sm:$0xff] %v3381
        %3574 = vst [vmem:[#allocation2 + $0x108] sm:$0xff] %v3382
        %3575 = vst [vmem:[#allocation2 + $0x110] sm:$0xff] %v3383
        %3576 = vst [vmem:[#allocation2 + $0x118] sm:$0xff] %v3384
        %3577 = vst [vmem:[#allocation2 + $0x120] sm:$0xff] %v3385
        %3578 = vst [vmem:[#allocation2 + $0x128] sm:$0xff] %v3386
        %3579 = vst [vmem:[#allocation2 + $0x130] sm:$0xff] %v3387
        %3580 = vst [vmem:[#allocation2 + $0x138] sm:$0xff] %v3388
        %3581 = vst [vmem:[#allocation2 + $0x140] sm:$0xff] %v3389
        %3582 = vst [vmem:[#allocation2 + $0x148] sm:$0xff] %v3390
        %3583 = vst [vmem:[#allocation2 + $0x150] sm:$0xff] %v3391
        %3584 = vst [vmem:[#allocation2 + $0x158] sm:$0xff] %v3392
        %3585 = vst [vmem:[#allocation2 + $0x160] sm:$0xff] %v3393
        %3586 = vst [vmem:[#allocation2 + $0x168] sm:$0xff] %v3394
        %3587 = vst [vmem:[#allocation2 + $0x170] sm:$0xff] %v3395
        %3588 = vst [vmem:[#allocation2 + $0x178] sm:$0xff] %v3396
        %3589 = vst [vmem:[#allocation2 + $0x180] sm:$0xff] %v3397
        %3590 = vst [vmem:[#allocation2 + $0x188] sm:$0xff] %v3398
        %3591 = vst [vmem:[#allocation2 + $0x190] sm:$0xff] %v3399
        %3592 = vst [vmem:[#allocation2 + $0x198] sm:$0xff] %v3400
        %3593 = vst [vmem:[#allocation2 + $0x1a0] sm:$0xff] %v3401
        %3594 = vst [vmem:[#allocation2 + $0x1a8] sm:$0xff] %v3402
        %3595 = vst [vmem:[#allocation2 + $0x1b0] sm:$0xff] %v3403
        %3596 = vst [vmem:[#allocation2 + $0x1b8] sm:$0xff] %v3404
        %3597 = vst [vmem:[#allocation2 + $0x1c0] sm:$0xff] %v3405
        %3598 = vst [vmem:[#allocation2 + $0x1c8] sm:$0xff] %v3406
        %3599 = vst [vmem:[#allocation2 + $0x1d0] sm:$0xff] %v3407
        %3600 = vst [vmem:[#allocation2 + $0x1d8] sm:$0xff] %v3408
        %3601 = vst [vmem:[#allocation2 + $0x1e0] sm:$0xff] %v3409
        %3602 = vst [vmem:[#allocation2 + $0x1e8] sm:$0xff] %v3410
        %3603 = vst [vmem:[#allocation2 + $0x1f0] sm:$0xff] %v3411
        %3604 = vst [vmem:[#allocation2 + $0x1f8] sm:$0xff] %v3412
        %3605 = vst [vmem:[#allocation2 + $0x200] sm:$0xff] %v3413
        %3606 = vst [vmem:[#allocation2 + $0x208] sm:$0xff] %v3414
        %3607 = vst [vmem:[#allocation2 + $0x210] sm:$0xff] %v3415
        %3608 = vst [vmem:[#allocation2 + $0x218] sm:$0xff] %v3416
        %3609 = vst [vmem:[#allocation2 + $0x220] sm:$0xff] %v3417
        %3610 = vst [vmem:[#allocation2 + $0x228] sm:$0xff] %v3418
        %3611 = vst [vmem:[#allocation2 + $0x230] sm:$0xff] %v3419
        %3612 = vst [vmem:[#allocation2 + $0x238] sm:$0xff] %v3420
        %3613 = vst [vmem:[#allocation2 + $0x240] sm:$0xff] %v3421
        %3614 = vst [vmem:[#allocation2 + $0x248] sm:$0xff] %v3422
        %3615 = vst [vmem:[#allocation2 + $0x250] sm:$0xff] %v3423
        %3616 = vst [vmem:[#allocation2 + $0x258] sm:$0xff] %v3424
        %3617 = vst [vmem:[#allocation2 + $0x260] sm:$0xff] %v3425
        %3618 = vst [vmem:[#allocation2 + $0x268] sm:$0xff] %v3426
        %3619 = vst [vmem:[#allocation2 + $0x270] sm:$0xff] %v3427
        %3620 = vst [vmem:[#allocation2 + $0x278] sm:$0xff] %v3428
        %3621 = vst [vmem:[#allocation2 + $0x280] sm:$0xff] %v3429
        %3622 = vst [vmem:[#allocation2 + $0x288] sm:$0xff] %v3430
        %3623 = vst [vmem:[#allocation2 + $0x290] sm:$0xff] %v3431
        %3624 = vst [vmem:[#allocation2 + $0x298] sm:$0xff] %v3432
        %3625 = vst [vmem:[#allocation2 + $0x2a0] sm:$0xff] %v3433
        %3626 = vst [vmem:[#allocation2 + $0x2a8] sm:$0xff] %v3434
        %3627 = vst [vmem:[#allocation2 + $0x2b0] sm:$0xff] %v3435
        %3628 = vst [vmem:[#allocation2 + $0x2b8] sm:$0xff] %v3436
        %3629 = vst [vmem:[#allocation2 + $0x2c0] sm:$0xff] %v3437
        %3630 = vst [vmem:[#allocation2 + $0x2c8] sm:$0xff] %v3438
        %3631 = vst [vmem:[#allocation2 + $0x2d0] sm:$0xff] %v3439
        %3632 = vst [vmem:[#allocation2 + $0x2d8] sm:$0xff] %v3440
        %3633 = vst [vmem:[#allocation2 + $0x2e0] sm:$0xff] %v3441
        %3634 = vst [vmem:[#allocation2 + $0x2e8] sm:$0xff] %v3442
        %3635 = vst [vmem:[#allocation2 + $0x2f0] sm:$0xff] %v3443
        %3636 = vst [vmem:[#allocation2 + $0x2f8] sm:$0xff] %v3444
        %3637 = vst [vmem:[#allocation2 + $0x300] sm:$0xff] %v3445
        %3638 = vst [vmem:[#allocation2 + $0x308] sm:$0xff] %v3446
        %3639 = vst [vmem:[#allocation2 + $0x310] sm:$0xff] %v3447
        %3640 = vst [vmem:[#allocation2 + $0x318] sm:$0xff] %v3448
        %3641 = vst [vmem:[#allocation2 + $0x320] sm:$0xff] %v3449
        %3642 = vst [vmem:[#allocation2 + $0x328] sm:$0xff] %v3450
        %3643 = vst [vmem:[#allocation2 + $0x330] sm:$0xff] %v3451
        %3644 = vst [vmem:[#allocation2 + $0x338] sm:$0xff] %v3452
        %3645 = vst [vmem:[#allocation2 + $0x340] sm:$0xff] %v3453
        %3646 = vst [vmem:[#allocation2 + $0x348] sm:$0xff] %v3454
        %3647 = vst [vmem:[#allocation2 + $0x350] sm:$0xff] %v3455
        %3648 = vst [vmem:[#allocation2 + $0x358] sm:$0xff] %v3456
        %3649 = vst [vmem:[#allocation2 + $0x360] sm:$0xff] %v3457
        %3650 = vst [vmem:[#allocation2 + $0x368] sm:$0xff] %v3458
        %3651 = vst [vmem:[#allocation2 + $0x370] sm:$0xff] %v3459
        %3652 = vst [vmem:[#allocation2 + $0x378] sm:$0xff] %v3460
        %3653 = vst [vmem:[#allocation2 + $0x380] sm:$0xff] %v3461
        %3654 = vst [vmem:[#allocation2 + $0x388] sm:$0xff] %v3462
        %3655 = vst [vmem:[#allocation2 + $0x390] sm:$0xff] %v3463
        %3656 = vst [vmem:[#allocation2 + $0x398] sm:$0xff] %v3464
        %3657 = vst [vmem:[#allocation2 + $0x3a0] sm:$0xff] %v3465
        %3658 = vst [vmem:[#allocation2 + $0x3a8] sm:$0xff] %v3466
        %3659 = vst [vmem:[#allocation2 + $0x3b0] sm:$0xff] %v3467
        %3660 = vst [vmem:[#allocation2 + $0x3b8] sm:$0xff] %v3468
        %3661 = vst [vmem:[#allocation2 + $0x3c0] sm:$0xff] %v3469
        %3662 = vst [vmem:[#allocation2 + $0x3c8] sm:$0xff] %v3470
        %3663 = vst [vmem:[#allocation2 + $0x3d0] sm:$0xff] %v3471
        %3664 = vst [vmem:[#allocation2 + $0x3d8] sm:$0xff] %v3472
        %3665 = vst [vmem:[#allocation2 + $0x3e0] sm:$0xff] %v3473
        %3666 = vst [vmem:[#allocation2 + $0x3e8] sm:$0xff] %v3474
        %3667 = vst [vmem:[#allocation2 + $0x3f0] sm:$0xff] %v3475
        %3668 = vst [vmem:[#allocation2 + $0x3f8] sm:$0xff] %v3476
        %3669 = vst [vmem:[#allocation2 + $0x400] sm:$0xff] %v3477
        %3670 = vst [vmem:[#allocation2 + $0x408] sm:$0xff] %v3478
        %3671 = vst [vmem:[#allocation2 + $0x410] sm:$0xff] %v3479
        %3672 = vst [vmem:[#allocation2 + $0x418] sm:$0xff] %v3480
        %3673 = vst [vmem:[#allocation2 + $0x420] sm:$0xff] %v3481
        %3674 = vst [vmem:[#allocation2 + $0x428] sm:$0xff] %v3482
        %3675 = vst [vmem:[#allocation2 + $0x430] sm:$0xff] %v3483
        %3676 = vst [vmem:[#allocation2 + $0x438] sm:$0xff] %v3484
        %3677 = vst [vmem:[#allocation2 + $0x440] sm:$0xff] %v3485
        %3678 = vst [vmem:[#allocation2 + $0x448] sm:$0xff] %v3486
        %3679 = vst [vmem:[#allocation2 + $0x450] sm:$0xff] %v3487
        %3680 = vst [vmem:[#allocation2 + $0x458] sm:$0xff] %v3488
        %3681 = vst [vmem:[#allocation2 + $0x460] sm:$0xff] %v3489
        %3682 = vst [vmem:[#allocation2 + $0x468] sm:$0xff] %v3490
        %3683 = vst [vmem:[#allocation2 + $0x470] sm:$0xff] %v3491
        %3684 = vst [vmem:[#allocation2 + $0x478] sm:$0xff] %v3492
        %3685 = vst [vmem:[#allocation2 + $0x480] sm:$0xff] %v3493
        %3686 = vst [vmem:[#allocation2 + $0x488] sm:$0xff] %v3494
        %3687 = vst [vmem:[#allocation2 + $0x490] sm:$0xff] %v3495
        %3688 = vst [vmem:[#allocation2 + $0x498] sm:$0xff] %v3496
        %3689 = vst [vmem:[#allocation2 + $0x4a0] sm:$0xff] %v3497
        %3690 = vst [vmem:[#allocation2 + $0x4a8] sm:$0xff] %v3498
        %3691 = vst [vmem:[#allocation2 + $0x4b0] sm:$0xff] %v3499
        %3692 = vst [vmem:[#allocation2 + $0x4b8] sm:$0xff] %v3500
        %3693 = vst [vmem:[#allocation2 + $0x4c0] sm:$0xff] %v3501
        %3694 = vst [vmem:[#allocation2 + $0x4c8] sm:$0xff] %v3502
        %3695 = vst [vmem:[#allocation2 + $0x4d0] sm:$0xff] %v3503
        %3696 = vst [vmem:[#allocation2 + $0x4d8] sm:$0xff] %v3504
        %3697 = vst [vmem:[#allocation2 + $0x4e0] sm:$0xff] %v3505
        %3698 = vst [vmem:[#allocation2 + $0x4e8] sm:$0xff] %v3506
        %3699 = vst [vmem:[#allocation2 + $0x4f0] sm:$0xff] %v3507
        %3700 = vst [vmem:[#allocation2 + $0x4f8] sm:$0xff] %v3508
        %3701 = vst [vmem:[#allocation2 + $0x500] sm:$0xff] %v3509
        %3702 = vst [vmem:[#allocation2 + $0x508] sm:$0xff] %v3510
        %3703 = vst [vmem:[#allocation2 + $0x510] sm:$0xff] %v3511
        %3704 = vst [vmem:[#allocation2 + $0x518] sm:$0xff] %v3512
        %3705 = vst [vmem:[#allocation2 + $0x520] sm:$0xff] %v3513
        %3706 = vst [vmem:[#allocation2 + $0x528] sm:$0xff] %v3514
        %3707 = vst [vmem:[#allocation2 + $0x530] sm:$0xff] %v3515
        %3708 = vst [vmem:[#allocation2 + $0x538] sm:$0xff] %v3516
        %3709 = vst [vmem:[#allocation2 + $0x540] sm:$0xff] %v3517
        %3710 = vst [vmem:[#allocation2 + $0x548] sm:$0xff] %v3518
        %3711 = vst [vmem:[#allocation2 + $0x550] sm:$0xff] %v3519
        %3712 = vst [vmem:[#allocation2 + $0x558] sm:$0xff] %v3520
        %3713 = vst [vmem:[#allocation2 + $0x560] sm:$0xff] %v3521
        %3714 = vst [vmem:[#allocation2 + $0x568] sm:$0xff] %v3522
        %3715 = vst [vmem:[#allocation2 + $0x570] sm:$0xff] %v3523
        %3716 = vst [vmem:[#allocation2 + $0x578] sm:$0xff] %v3524
        %3717 = vst [vmem:[#allocation2 + $0x580] sm:$0xff] %v3525
        %3718 = vst [vmem:[#allocation2 + $0x588] sm:$0xff] %v3526
        %3719 = vst [vmem:[#allocation2 + $0x590] sm:$0xff] %v3527
        %3720 = vst [vmem:[#allocation2 + $0x598] sm:$0xff] %v3528
        %3721 = vst [vmem:[#allocation2 + $0x5a0] sm:$0xff] %v3529
        %3722 = vst [vmem:[#allocation2 + $0x5a8] sm:$0xff] %v3530
        %3723 = vst [vmem:[#allocation2 + $0x5b0] sm:$0xff] %v3531
        %3724 = vst [vmem:[#allocation2 + $0x5b8] sm:$0xff] %v3532
        %3725 = vst [vmem:[#allocation2 + $0x5c0] sm:$0xff] %v3533
        %3726 = vst [vmem:[#allocation2 + $0x5c8] sm:$0xff] %v3534
        %3727 = vst [vmem:[#allocation2 + $0x5d0] sm:$0xff] %v3535
        %3728 = vst [vmem:[#allocation2 + $0x5d8] sm:$0xff] %v3536
        %3729 = vst [vmem:[#allocation2 + $0x5e0] sm:$0xff] %v3537
        %3730 = vst [vmem:[#allocation2 + $0x5e8] sm:$0xff] %v3538
        %3731 = vst [vmem:[#allocation2 + $0x5f0] sm:$0xff] %v3539
        %3732 = vst [vmem:[#allocation2 + $0x5f8] sm:$0xff] %v3540
        // Predicated region
        $region45: #{tpu_custom_call.1} parent=31 // pred_check
          %p3733 = pneg %p269
        $region46: #{tpu_custom_call.1} parent=31 // pred_check_branch
          %3735 = sbr.rel (%p3733) target = $region48
        $region47: #{tpu_custom_call.1} parent=31 // pred_region
          %v3736 = vld [vmem:[#allocation2] sm:$0xff]
          %v3737 = vld [vmem:[#allocation2 + $0x8] sm:$0xff]
          %v3738 = vld [vmem:[#allocation2 + $0x10] sm:$0xff]
          %v3739 = vld [vmem:[#allocation2 + $0x18] sm:$0xff]
          %v3740 = vld [vmem:[#allocation2 + $0x20] sm:$0xff]
          %v3741 = vld [vmem:[#allocation2 + $0x28] sm:$0xff]
          %v3742 = vld [vmem:[#allocation2 + $0x30] sm:$0xff]
          %v3743 = vld [vmem:[#allocation2 + $0x38] sm:$0xff]
          %v3744 = vld [vmem:[#allocation2 + $0x40] sm:$0xff]
          %v3745 = vld [vmem:[#allocation2 + $0x48] sm:$0xff]
          %v3746 = vld [vmem:[#allocation2 + $0x50] sm:$0xff]
          %v3747 = vld [vmem:[#allocation2 + $0x58] sm:$0xff]
          %v3748 = vld [vmem:[#allocation2 + $0x60] sm:$0xff]
          %v3749 = vld [vmem:[#allocation2 + $0x68] sm:$0xff]
          %v3750 = vld [vmem:[#allocation2 + $0x70] sm:$0xff]
          %v3751 = vld [vmem:[#allocation2 + $0x78] sm:$0xff]
          %v3752 = vld [vmem:[#allocation2 + $0x80] sm:$0xff]
          %v3753 = vld [vmem:[#allocation2 + $0x88] sm:$0xff]
          %v3754 = vld [vmem:[#allocation2 + $0x90] sm:$0xff]
          %v3755 = vld [vmem:[#allocation2 + $0x98] sm:$0xff]
          %v3756 = vld [vmem:[#allocation2 + $0xa0] sm:$0xff]
          %v3757 = vld [vmem:[#allocation2 + $0xa8] sm:$0xff]
          %v3758 = vld [vmem:[#allocation2 + $0xb0] sm:$0xff]
          %v3759 = vld [vmem:[#allocation2 + $0xb8] sm:$0xff]
          %v3760 = vld [vmem:[#allocation2 + $0xc0] sm:$0xff]
          %v3761 = vld [vmem:[#allocation2 + $0xc8] sm:$0xff]
          %v3762 = vld [vmem:[#allocation2 + $0xd0] sm:$0xff]
          %v3763 = vld [vmem:[#allocation2 + $0xd8] sm:$0xff]
          %v3764 = vld [vmem:[#allocation2 + $0xe0] sm:$0xff]
          %v3765 = vld [vmem:[#allocation2 + $0xe8] sm:$0xff]
          %v3766 = vld [vmem:[#allocation2 + $0xf0] sm:$0xff]
          %v3767 = vld [vmem:[#allocation2 + $0xf8] sm:$0xff]
          %v3768 = vld [vmem:[#allocation2 + $0x100] sm:$0xff]
          %v3769 = vld [vmem:[#allocation2 + $0x108] sm:$0xff]
          %v3770 = vld [vmem:[#allocation2 + $0x110] sm:$0xff]
          %v3771 = vld [vmem:[#allocation2 + $0x118] sm:$0xff]
          %v3772 = vld [vmem:[#allocation2 + $0x120] sm:$0xff]
          %v3773 = vld [vmem:[#allocation2 + $0x128] sm:$0xff]
          %v3774 = vld [vmem:[#allocation2 + $0x130] sm:$0xff]
          %v3775 = vld [vmem:[#allocation2 + $0x138] sm:$0xff]
          %v3776 = vld [vmem:[#allocation2 + $0x140] sm:$0xff]
          %v3777 = vld [vmem:[#allocation2 + $0x148] sm:$0xff]
          %v3778 = vld [vmem:[#allocation2 + $0x150] sm:$0xff]
          %v3779 = vld [vmem:[#allocation2 + $0x158] sm:$0xff]
          %v3780 = vld [vmem:[#allocation2 + $0x160] sm:$0xff]
          %v3781 = vld [vmem:[#allocation2 + $0x168] sm:$0xff]
          %v3782 = vld [vmem:[#allocation2 + $0x170] sm:$0xff]
          %v3783 = vld [vmem:[#allocation2 + $0x178] sm:$0xff]
          %v3784 = vld [vmem:[#allocation2 + $0x180] sm:$0xff]
          %v3785 = vld [vmem:[#allocation2 + $0x188] sm:$0xff]
          %v3786 = vld [vmem:[#allocation2 + $0x190] sm:$0xff]
          %v3787 = vld [vmem:[#allocation2 + $0x198] sm:$0xff]
          %v3788 = vld [vmem:[#allocation2 + $0x1a0] sm:$0xff]
          %v3789 = vld [vmem:[#allocation2 + $0x1a8] sm:$0xff]
          %v3790 = vld [vmem:[#allocation2 + $0x1b0] sm:$0xff]
          %v3791 = vld [vmem:[#allocation2 + $0x1b8] sm:$0xff]
          %v3792 = vld [vmem:[#allocation2 + $0x1c0] sm:$0xff]
          %v3793 = vld [vmem:[#allocation2 + $0x1c8] sm:$0xff]
          %v3794 = vld [vmem:[#allocation2 + $0x1d0] sm:$0xff]
          %v3795 = vld [vmem:[#allocation2 + $0x1d8] sm:$0xff]
          %v3796 = vld [vmem:[#allocation2 + $0x1e0] sm:$0xff]
          %v3797 = vld [vmem:[#allocation2 + $0x1e8] sm:$0xff]
          %v3798 = vld [vmem:[#allocation2 + $0x1f0] sm:$0xff]
          %v3799 = vld [vmem:[#allocation2 + $0x1f8] sm:$0xff]
          %v3800 = vld [vmem:[#allocation2 + $0x200] sm:$0xff]
          %v3801 = vld [vmem:[#allocation2 + $0x208] sm:$0xff]
          %v3802 = vld [vmem:[#allocation2 + $0x210] sm:$0xff]
          %v3803 = vld [vmem:[#allocation2 + $0x218] sm:$0xff]
          %v3804 = vld [vmem:[#allocation2 + $0x220] sm:$0xff]
          %v3805 = vld [vmem:[#allocation2 + $0x228] sm:$0xff]
          %v3806 = vld [vmem:[#allocation2 + $0x230] sm:$0xff]
          %v3807 = vld [vmem:[#allocation2 + $0x238] sm:$0xff]
          %v3808 = vld [vmem:[#allocation2 + $0x240] sm:$0xff]
          %v3809 = vld [vmem:[#allocation2 + $0x248] sm:$0xff]
          %v3810 = vld [vmem:[#allocation2 + $0x250] sm:$0xff]
          %v3811 = vld [vmem:[#allocation2 + $0x258] sm:$0xff]
          %v3812 = vld [vmem:[#allocation2 + $0x260] sm:$0xff]
          %v3813 = vld [vmem:[#allocation2 + $0x268] sm:$0xff]
          %v3814 = vld [vmem:[#allocation2 + $0x270] sm:$0xff]
          %v3815 = vld [vmem:[#allocation2 + $0x278] sm:$0xff]
          %v3816 = vld [vmem:[#allocation2 + $0x280] sm:$0xff]
          %v3817 = vld [vmem:[#allocation2 + $0x288] sm:$0xff]
          %v3818 = vld [vmem:[#allocation2 + $0x290] sm:$0xff]
          %v3819 = vld [vmem:[#allocation2 + $0x298] sm:$0xff]
          %v3820 = vld [vmem:[#allocation2 + $0x2a0] sm:$0xff]
          %v3821 = vld [vmem:[#allocation2 + $0x2a8] sm:$0xff]
          %v3822 = vld [vmem:[#allocation2 + $0x2b0] sm:$0xff]
          %v3823 = vld [vmem:[#allocation2 + $0x2b8] sm:$0xff]
          %v3824 = vld [vmem:[#allocation2 + $0x2c0] sm:$0xff]
          %v3825 = vld [vmem:[#allocation2 + $0x2c8] sm:$0xff]
          %v3826 = vld [vmem:[#allocation2 + $0x2d0] sm:$0xff]
          %v3827 = vld [vmem:[#allocation2 + $0x2d8] sm:$0xff]
          %v3828 = vld [vmem:[#allocation2 + $0x2e0] sm:$0xff]
          %v3829 = vld [vmem:[#allocation2 + $0x2e8] sm:$0xff]
          %v3830 = vld [vmem:[#allocation2 + $0x2f0] sm:$0xff]
          %v3831 = vld [vmem:[#allocation2 + $0x2f8] sm:$0xff]
          %v3832 = vld [vmem:[#allocation2 + $0x300] sm:$0xff]
          %v3833 = vld [vmem:[#allocation2 + $0x308] sm:$0xff]
          %v3834 = vld [vmem:[#allocation2 + $0x310] sm:$0xff]
          %v3835 = vld [vmem:[#allocation2 + $0x318] sm:$0xff]
          %v3836 = vld [vmem:[#allocation2 + $0x320] sm:$0xff]
          %v3837 = vld [vmem:[#allocation2 + $0x328] sm:$0xff]
          %v3838 = vld [vmem:[#allocation2 + $0x330] sm:$0xff]
          %v3839 = vld [vmem:[#allocation2 + $0x338] sm:$0xff]
          %v3840 = vld [vmem:[#allocation2 + $0x340] sm:$0xff]
          %v3841 = vld [vmem:[#allocation2 + $0x348] sm:$0xff]
          %v3842 = vld [vmem:[#allocation2 + $0x350] sm:$0xff]
          %v3843 = vld [vmem:[#allocation2 + $0x358] sm:$0xff]
          %v3844 = vld [vmem:[#allocation2 + $0x360] sm:$0xff]
          %v3845 = vld [vmem:[#allocation2 + $0x368] sm:$0xff]
          %v3846 = vld [vmem:[#allocation2 + $0x370] sm:$0xff]
          %v3847 = vld [vmem:[#allocation2 + $0x378] sm:$0xff]
          %v3848 = vld [vmem:[#allocation2 + $0x380] sm:$0xff]
          %v3849 = vld [vmem:[#allocation2 + $0x388] sm:$0xff]
          %v3850 = vld [vmem:[#allocation2 + $0x390] sm:$0xff]
          %v3851 = vld [vmem:[#allocation2 + $0x398] sm:$0xff]
          %v3852 = vld [vmem:[#allocation2 + $0x3a0] sm:$0xff]
          %v3853 = vld [vmem:[#allocation2 + $0x3a8] sm:$0xff]
          %v3854 = vld [vmem:[#allocation2 + $0x3b0] sm:$0xff]
          %v3855 = vld [vmem:[#allocation2 + $0x3b8] sm:$0xff]
          %v3856 = vld [vmem:[#allocation2 + $0x3c0] sm:$0xff]
          %v3857 = vld [vmem:[#allocation2 + $0x3c8] sm:$0xff]
          %v3858 = vld [vmem:[#allocation2 + $0x3d0] sm:$0xff]
          %v3859 = vld [vmem:[#allocation2 + $0x3d8] sm:$0xff]
          %v3860 = vld [vmem:[#allocation2 + $0x3e0] sm:$0xff]
          %v3861 = vld [vmem:[#allocation2 + $0x3e8] sm:$0xff]
          %v3862 = vld [vmem:[#allocation2 + $0x3f0] sm:$0xff]
          %v3863 = vld [vmem:[#allocation2 + $0x3f8] sm:$0xff]
          %v3864 = vld [vmem:[#allocation2 + $0x400] sm:$0xff]
          %v3865 = vld [vmem:[#allocation2 + $0x408] sm:$0xff]
          %v3866 = vld [vmem:[#allocation2 + $0x410] sm:$0xff]
          %v3867 = vld [vmem:[#allocation2 + $0x418] sm:$0xff]
          %v3868 = vld [vmem:[#allocation2 + $0x420] sm:$0xff]
          %v3869 = vld [vmem:[#allocation2 + $0x428] sm:$0xff]
          %v3870 = vld [vmem:[#allocation2 + $0x430] sm:$0xff]
          %v3871 = vld [vmem:[#allocation2 + $0x438] sm:$0xff]
          %v3872 = vld [vmem:[#allocation2 + $0x440] sm:$0xff]
          %v3873 = vld [vmem:[#allocation2 + $0x448] sm:$0xff]
          %v3874 = vld [vmem:[#allocation2 + $0x450] sm:$0xff]
          %v3875 = vld [vmem:[#allocation2 + $0x458] sm:$0xff]
          %v3876 = vld [vmem:[#allocation2 + $0x460] sm:$0xff]
          %v3877 = vld [vmem:[#allocation2 + $0x468] sm:$0xff]
          %v3878 = vld [vmem:[#allocation2 + $0x470] sm:$0xff]
          %v3879 = vld [vmem:[#allocation2 + $0x478] sm:$0xff]
          %v3880 = vld [vmem:[#allocation2 + $0x480] sm:$0xff]
          %v3881 = vld [vmem:[#allocation2 + $0x488] sm:$0xff]
          %v3882 = vld [vmem:[#allocation2 + $0x490] sm:$0xff]
          %v3883 = vld [vmem:[#allocation2 + $0x498] sm:$0xff]
          %v3884 = vld [vmem:[#allocation2 + $0x4a0] sm:$0xff]
          %v3885 = vld [vmem:[#allocation2 + $0x4a8] sm:$0xff]
          %v3886 = vld [vmem:[#allocation2 + $0x4b0] sm:$0xff]
          %v3887 = vld [vmem:[#allocation2 + $0x4b8] sm:$0xff]
          %v3888 = vld [vmem:[#allocation2 + $0x4c0] sm:$0xff]
          %v3889 = vld [vmem:[#allocation2 + $0x4c8] sm:$0xff]
          %v3890 = vld [vmem:[#allocation2 + $0x4d0] sm:$0xff]
          %v3891 = vld [vmem:[#allocation2 + $0x4d8] sm:$0xff]
          %v3892 = vld [vmem:[#allocation2 + $0x4e0] sm:$0xff]
          %v3893 = vld [vmem:[#allocation2 + $0x4e8] sm:$0xff]
          %v3894 = vld [vmem:[#allocation2 + $0x4f0] sm:$0xff]
          %v3895 = vld [vmem:[#allocation2 + $0x4f8] sm:$0xff]
          %v3896 = vld [vmem:[#allocation2 + $0x500] sm:$0xff]
          %v3897 = vld [vmem:[#allocation2 + $0x508] sm:$0xff]
          %v3898 = vld [vmem:[#allocation2 + $0x510] sm:$0xff]
          %v3899 = vld [vmem:[#allocation2 + $0x518] sm:$0xff]
          %v3900 = vld [vmem:[#allocation2 + $0x520] sm:$0xff]
          %v3901 = vld [vmem:[#allocation2 + $0x528] sm:$0xff]
          %v3902 = vld [vmem:[#allocation2 + $0x530] sm:$0xff]
          %v3903 = vld [vmem:[#allocation2 + $0x538] sm:$0xff]
          %v3904 = vld [vmem:[#allocation2 + $0x540] sm:$0xff]
          %v3905 = vld [vmem:[#allocation2 + $0x548] sm:$0xff]
          %v3906 = vld [vmem:[#allocation2 + $0x550] sm:$0xff]
          %v3907 = vld [vmem:[#allocation2 + $0x558] sm:$0xff]
          %v3908 = vld [vmem:[#allocation2 + $0x560] sm:$0xff]
          %v3909 = vld [vmem:[#allocation2 + $0x568] sm:$0xff]
          %v3910 = vld [vmem:[#allocation2 + $0x570] sm:$0xff]
          %v3911 = vld [vmem:[#allocation2 + $0x578] sm:$0xff]
          %v3912 = vld [vmem:[#allocation2 + $0x580] sm:$0xff]
          %v3913 = vld [vmem:[#allocation2 + $0x588] sm:$0xff]
          %v3914 = vld [vmem:[#allocation2 + $0x590] sm:$0xff]
          %v3915 = vld [vmem:[#allocation2 + $0x598] sm:$0xff]
          %v3916 = vld [vmem:[#allocation2 + $0x5a0] sm:$0xff]
          %v3917 = vld [vmem:[#allocation2 + $0x5a8] sm:$0xff]
          %v3918 = vld [vmem:[#allocation2 + $0x5b0] sm:$0xff]
          %v3919 = vld [vmem:[#allocation2 + $0x5b8] sm:$0xff]
          %v3920 = vld [vmem:[#allocation2 + $0x5c0] sm:$0xff]
          %v3921 = vld [vmem:[#allocation2 + $0x5c8] sm:$0xff]
          %v3922 = vld [vmem:[#allocation2 + $0x5d0] sm:$0xff]
          %v3923 = vld [vmem:[#allocation2 + $0x5d8] sm:$0xff]
          %v3924 = vld [vmem:[#allocation2 + $0x5e0] sm:$0xff]
          %v3925 = vld [vmem:[#allocation2 + $0x5e8] sm:$0xff]
          %v3926 = vld [vmem:[#allocation2 + $0x5f0] sm:$0xff]
          %v3927 = vld [vmem:[#allocation2 + $0x5f8] sm:$0xff]
          %v3928 = vld [vmem:[%s264] sm:$0x7]
          %v3929 = vunpack.c.l.bf16 %v3928
          %v3931 = vlaneseq
          %v3932 = vshrl.u32 %v3931, 7
          %v3933 = vsub.s32 0, %v3932
          %v3934 = vrot.slane %v3929, %v3933
          %v3935 = vlaneseq
          %v3936 = vshrl.u32 %v3935, 7
          %v3937 = vsub.s32 2, %v3936
          %v3938 = vrot.slane %v3929, %v3937
          %v3939 = vlaneseq
          %v3940 = vshrl.u32 %v3939, 7
          %v3941 = vsub.s32 4, %v3940
          %v3942 = vrot.slane %v3929, %v3941
          %v3946 = vlaneseq
          %v3947 = vshrl.u32 %v3946, 7
          %v3948 = vsub.s32 0, %v3947
          %v3949 = vrot.slane %v3934, %v3948
          %v3950 = vlaneseq
          %v3951 = vshrl.u32 %v3950, 7
          %v3952 = vsub.s32 0, %v3951
          %v3953 = vrot.slane %v3938, %v3952
          %v3954 = vlaneseq
          %v3955 = vshrl.u32 %v3954, 7
          %v3956 = vsub.s32 0, %v3955
          %v3957 = vrot.slane %v3942, %v3956
          %v3958 = vadd.f32 %v3736, %v3949
          %v3959 = vadd.f32 %v3737, %v3953
          %v3960 = vadd.f32 %v3738, %v3957
          %v3961 = vadd.f32 %v3739, %v3949
          %v3962 = vadd.f32 %v3740, %v3953
          %v3963 = vadd.f32 %v3741, %v3957
          %v3964 = vadd.f32 %v3742, %v3949
          %v3965 = vadd.f32 %v3743, %v3953
          %v3966 = vadd.f32 %v3744, %v3957
          %v3967 = vadd.f32 %v3745, %v3949
          %v3968 = vadd.f32 %v3746, %v3953
          %v3969 = vadd.f32 %v3747, %v3957
          %v3970 = vadd.f32 %v3748, %v3949
          %v3971 = vadd.f32 %v3749, %v3953
          %v3972 = vadd.f32 %v3750, %v3957
          %v3973 = vadd.f32 %v3751, %v3949
          %v3974 = vadd.f32 %v3752, %v3953
          %v3975 = vadd.f32 %v3753, %v3957
          %v3976 = vadd.f32 %v3754, %v3949
          %v3977 = vadd.f32 %v3755, %v3953
          %v3978 = vadd.f32 %v3756, %v3957
          %v3979 = vadd.f32 %v3757, %v3949
          %v3980 = vadd.f32 %v3758, %v3953
          %v3981 = vadd.f32 %v3759, %v3957
          %v3982 = vadd.f32 %v3760, %v3949
          %v3983 = vadd.f32 %v3761, %v3953
          %v3984 = vadd.f32 %v3762, %v3957
          %v3985 = vadd.f32 %v3763, %v3949
          %v3986 = vadd.f32 %v3764, %v3953
          %v3987 = vadd.f32 %v3765, %v3957
          %v3988 = vadd.f32 %v3766, %v3949
          %v3989 = vadd.f32 %v3767, %v3953
          %v3990 = vadd.f32 %v3768, %v3957
          %v3991 = vadd.f32 %v3769, %v3949
          %v3992 = vadd.f32 %v3770, %v3953
          %v3993 = vadd.f32 %v3771, %v3957
          %v3994 = vadd.f32 %v3772, %v3949
          %v3995 = vadd.f32 %v3773, %v3953
          %v3996 = vadd.f32 %v3774, %v3957
          %v3997 = vadd.f32 %v3775, %v3949
          %v3998 = vadd.f32 %v3776, %v3953
          %v3999 = vadd.f32 %v3777, %v3957
          %v4000 = vadd.f32 %v3778, %v3949
          %v4001 = vadd.f32 %v3779, %v3953
          %v4002 = vadd.f32 %v3780, %v3957
          %v4003 = vadd.f32 %v3781, %v3949
          %v4004 = vadd.f32 %v3782, %v3953
          %v4005 = vadd.f32 %v3783, %v3957
          %v4006 = vadd.f32 %v3784, %v3949
          %v4007 = vadd.f32 %v3785, %v3953
          %v4008 = vadd.f32 %v3786, %v3957
          %v4009 = vadd.f32 %v3787, %v3949
          %v4010 = vadd.f32 %v3788, %v3953
          %v4011 = vadd.f32 %v3789, %v3957
          %v4012 = vadd.f32 %v3790, %v3949
          %v4013 = vadd.f32 %v3791, %v3953
          %v4014 = vadd.f32 %v3792, %v3957
          %v4015 = vadd.f32 %v3793, %v3949
          %v4016 = vadd.f32 %v3794, %v3953
          %v4017 = vadd.f32 %v3795, %v3957
          %v4018 = vadd.f32 %v3796, %v3949
          %v4019 = vadd.f32 %v3797, %v3953
          %v4020 = vadd.f32 %v3798, %v3957
          %v4021 = vadd.f32 %v3799, %v3949
          %v4022 = vadd.f32 %v3800, %v3953
          %v4023 = vadd.f32 %v3801, %v3957
          %v4024 = vadd.f32 %v3802, %v3949
          %v4025 = vadd.f32 %v3803, %v3953
          %v4026 = vadd.f32 %v3804, %v3957
          %v4027 = vadd.f32 %v3805, %v3949
          %v4028 = vadd.f32 %v3806, %v3953
          %v4029 = vadd.f32 %v3807, %v3957
          %v4030 = vadd.f32 %v3808, %v3949
          %v4031 = vadd.f32 %v3809, %v3953
          %v4032 = vadd.f32 %v3810, %v3957
          %v4033 = vadd.f32 %v3811, %v3949
          %v4034 = vadd.f32 %v3812, %v3953
          %v4035 = vadd.f32 %v3813, %v3957
          %v4036 = vadd.f32 %v3814, %v3949
          %v4037 = vadd.f32 %v3815, %v3953
          %v4038 = vadd.f32 %v3816, %v3957
          %v4039 = vadd.f32 %v3817, %v3949
          %v4040 = vadd.f32 %v3818, %v3953
          %v4041 = vadd.f32 %v3819, %v3957
          %v4042 = vadd.f32 %v3820, %v3949
          %v4043 = vadd.f32 %v3821, %v3953
          %v4044 = vadd.f32 %v3822, %v3957
          %v4045 = vadd.f32 %v3823, %v3949
          %v4046 = vadd.f32 %v3824, %v3953
          %v4047 = vadd.f32 %v3825, %v3957
          %v4048 = vadd.f32 %v3826, %v3949
          %v4049 = vadd.f32 %v3827, %v3953
          %v4050 = vadd.f32 %v3828, %v3957
          %v4051 = vadd.f32 %v3829, %v3949
          %v4052 = vadd.f32 %v3830, %v3953
          %v4053 = vadd.f32 %v3831, %v3957
          %v4054 = vadd.f32 %v3832, %v3949
          %v4055 = vadd.f32 %v3833, %v3953
          %v4056 = vadd.f32 %v3834, %v3957
          %v4057 = vadd.f32 %v3835, %v3949
          %v4058 = vadd.f32 %v3836, %v3953
          %v4059 = vadd.f32 %v3837, %v3957
          %v4060 = vadd.f32 %v3838, %v3949
          %v4061 = vadd.f32 %v3839, %v3953
          %v4062 = vadd.f32 %v3840, %v3957
          %v4063 = vadd.f32 %v3841, %v3949
          %v4064 = vadd.f32 %v3842, %v3953
          %v4065 = vadd.f32 %v3843, %v3957
          %v4066 = vadd.f32 %v3844, %v3949
          %v4067 = vadd.f32 %v3845, %v3953
          %v4068 = vadd.f32 %v3846, %v3957
          %v4069 = vadd.f32 %v3847, %v3949
          %v4070 = vadd.f32 %v3848, %v3953
          %v4071 = vadd.f32 %v3849, %v3957
          %v4072 = vadd.f32 %v3850, %v3949
          %v4073 = vadd.f32 %v3851, %v3953
          %v4074 = vadd.f32 %v3852, %v3957
          %v4075 = vadd.f32 %v3853, %v3949
          %v4076 = vadd.f32 %v3854, %v3953
          %v4077 = vadd.f32 %v3855, %v3957
          %v4078 = vadd.f32 %v3856, %v3949
          %v4079 = vadd.f32 %v3857, %v3953
          %v4080 = vadd.f32 %v3858, %v3957
          %v4081 = vadd.f32 %v3859, %v3949
          %v4082 = vadd.f32 %v3860, %v3953
          %v4083 = vadd.f32 %v3861, %v3957
          %v4084 = vadd.f32 %v3862, %v3949
          %v4085 = vadd.f32 %v3863, %v3953
          %v4086 = vadd.f32 %v3864, %v3957
          %v4087 = vadd.f32 %v3865, %v3949
          %v4088 = vadd.f32 %v3866, %v3953
          %v4089 = vadd.f32 %v3867, %v3957
          %v4090 = vadd.f32 %v3868, %v3949
          %v4091 = vadd.f32 %v3869, %v3953
          %v4092 = vadd.f32 %v3870, %v3957
          %v4093 = vadd.f32 %v3871, %v3949
          %v4094 = vadd.f32 %v3872, %v3953
          %v4095 = vadd.f32 %v3873, %v3957
          %v4096 = vadd.f32 %v3874, %v3949
          %v4097 = vadd.f32 %v3875, %v3953
          %v4098 = vadd.f32 %v3876, %v3957
          %v4099 = vadd.f32 %v3877, %v3949
          %v4100 = vadd.f32 %v3878, %v3953
          %v4101 = vadd.f32 %v3879, %v3957
          %v4102 = vadd.f32 %v3880, %v3949
          %v4103 = vadd.f32 %v3881, %v3953
          %v4104 = vadd.f32 %v3882, %v3957
          %v4105 = vadd.f32 %v3883, %v3949
          %v4106 = vadd.f32 %v3884, %v3953
          %v4107 = vadd.f32 %v3885, %v3957
          %v4108 = vadd.f32 %v3886, %v3949
          %v4109 = vadd.f32 %v3887, %v3953
          %v4110 = vadd.f32 %v3888, %v3957
          %v4111 = vadd.f32 %v3889, %v3949
          %v4112 = vadd.f32 %v3890, %v3953
          %v4113 = vadd.f32 %v3891, %v3957
          %v4114 = vadd.f32 %v3892, %v3949
          %v4115 = vadd.f32 %v3893, %v3953
          %v4116 = vadd.f32 %v3894, %v3957
          %v4117 = vadd.f32 %v3895, %v3949
          %v4118 = vadd.f32 %v3896, %v3953
          %v4119 = vadd.f32 %v3897, %v3957
          %v4120 = vadd.f32 %v3898, %v3949
          %v4121 = vadd.f32 %v3899, %v3953
          %v4122 = vadd.f32 %v3900, %v3957
          %v4123 = vadd.f32 %v3901, %v3949
          %v4124 = vadd.f32 %v3902, %v3953
          %v4125 = vadd.f32 %v3903, %v3957
          %v4126 = vadd.f32 %v3904, %v3949
          %v4127 = vadd.f32 %v3905, %v3953
          %v4128 = vadd.f32 %v3906, %v3957
          %v4129 = vadd.f32 %v3907, %v3949
          %v4130 = vadd.f32 %v3908, %v3953
          %v4131 = vadd.f32 %v3909, %v3957
          %v4132 = vadd.f32 %v3910, %v3949
          %v4133 = vadd.f32 %v3911, %v3953
          %v4134 = vadd.f32 %v3912, %v3957
          %v4135 = vadd.f32 %v3913, %v3949
          %v4136 = vadd.f32 %v3914, %v3953
          %v4137 = vadd.f32 %v3915, %v3957
          %v4138 = vadd.f32 %v3916, %v3949
          %v4139 = vadd.f32 %v3917, %v3953
          %v4140 = vadd.f32 %v3918, %v3957
          %v4141 = vadd.f32 %v3919, %v3949
          %v4142 = vadd.f32 %v3920, %v3953
          %v4143 = vadd.f32 %v3921, %v3957
          %v4144 = vadd.f32 %v3922, %v3949
          %v4145 = vadd.f32 %v3923, %v3953
          %v4146 = vadd.f32 %v3924, %v3957
          %v4147 = vadd.f32 %v3925, %v3949
          %v4148 = vadd.f32 %v3926, %v3953
          %v4149 = vadd.f32 %v3927, %v3957
          %v4150 = vpack.c.bf16 %v3961, %v3958
          %v4151 = vpack.c.bf16 %v3962, %v3959
          %v4152 = vpack.c.bf16 %v3963, %v3960
          %v4153 = vpack.c.bf16 %v3967, %v3964
          %v4154 = vpack.c.bf16 %v3968, %v3965
          %v4155 = vpack.c.bf16 %v3969, %v3966
          %v4156 = vpack.c.bf16 %v3973, %v3970
          %v4157 = vpack.c.bf16 %v3974, %v3971
          %v4158 = vpack.c.bf16 %v3975, %v3972
          %v4159 = vpack.c.bf16 %v3979, %v3976
          %v4160 = vpack.c.bf16 %v3980, %v3977
          %v4161 = vpack.c.bf16 %v3981, %v3978
          %v4162 = vpack.c.bf16 %v3985, %v3982
          %v4163 = vpack.c.bf16 %v3986, %v3983
          %v4164 = vpack.c.bf16 %v3987, %v3984
          %v4165 = vpack.c.bf16 %v3991, %v3988
          %v4166 = vpack.c.bf16 %v3992, %v3989
          %v4167 = vpack.c.bf16 %v3993, %v3990
          %v4168 = vpack.c.bf16 %v3997, %v3994
          %v4169 = vpack.c.bf16 %v3998, %v3995
          %v4170 = vpack.c.bf16 %v3999, %v3996
          %v4171 = vpack.c.bf16 %v4003, %v4000
          %v4172 = vpack.c.bf16 %v4004, %v4001
          %v4173 = vpack.c.bf16 %v4005, %v4002
          %v4174 = vpack.c.bf16 %v4009, %v4006
          %v4175 = vpack.c.bf16 %v4010, %v4007
          %v4176 = vpack.c.bf16 %v4011, %v4008
          %v4177 = vpack.c.bf16 %v4015, %v4012
          %v4178 = vpack.c.bf16 %v4016, %v4013
          %v4179 = vpack.c.bf16 %v4017, %v4014
          %v4180 = vpack.c.bf16 %v4021, %v4018
          %v4181 = vpack.c.bf16 %v4022, %v4019
          %v4182 = vpack.c.bf16 %v4023, %v4020
          %v4183 = vpack.c.bf16 %v4027, %v4024
          %v4184 = vpack.c.bf16 %v4028, %v4025
          %v4185 = vpack.c.bf16 %v4029, %v4026
          %v4186 = vpack.c.bf16 %v4033, %v4030
          %v4187 = vpack.c.bf16 %v4034, %v4031
          %v4188 = vpack.c.bf16 %v4035, %v4032
          %v4189 = vpack.c.bf16 %v4039, %v4036
          %v4190 = vpack.c.bf16 %v4040, %v4037
          %v4191 = vpack.c.bf16 %v4041, %v4038
          %v4192 = vpack.c.bf16 %v4045, %v4042
          %v4193 = vpack.c.bf16 %v4046, %v4043
          %v4194 = vpack.c.bf16 %v4047, %v4044
          %v4195 = vpack.c.bf16 %v4051, %v4048
          %v4196 = vpack.c.bf16 %v4052, %v4049
          %v4197 = vpack.c.bf16 %v4053, %v4050
          %v4198 = vpack.c.bf16 %v4057, %v4054
          %v4199 = vpack.c.bf16 %v4058, %v4055
          %v4200 = vpack.c.bf16 %v4059, %v4056
          %v4201 = vpack.c.bf16 %v4063, %v4060
          %v4202 = vpack.c.bf16 %v4064, %v4061
          %v4203 = vpack.c.bf16 %v4065, %v4062
          %v4204 = vpack.c.bf16 %v4069, %v4066
          %v4205 = vpack.c.bf16 %v4070, %v4067
          %v4206 = vpack.c.bf16 %v4071, %v4068
          %v4207 = vpack.c.bf16 %v4075, %v4072
          %v4208 = vpack.c.bf16 %v4076, %v4073
          %v4209 = vpack.c.bf16 %v4077, %v4074
          %v4210 = vpack.c.bf16 %v4081, %v4078
          %v4211 = vpack.c.bf16 %v4082, %v4079
          %v4212 = vpack.c.bf16 %v4083, %v4080
          %v4213 = vpack.c.bf16 %v4087, %v4084
          %v4214 = vpack.c.bf16 %v4088, %v4085
          %v4215 = vpack.c.bf16 %v4089, %v4086
          %v4216 = vpack.c.bf16 %v4093, %v4090
          %v4217 = vpack.c.bf16 %v4094, %v4091
          %v4218 = vpack.c.bf16 %v4095, %v4092
          %v4219 = vpack.c.bf16 %v4099, %v4096
          %v4220 = vpack.c.bf16 %v4100, %v4097
          %v4221 = vpack.c.bf16 %v4101, %v4098
          %v4222 = vpack.c.bf16 %v4105, %v4102
          %v4223 = vpack.c.bf16 %v4106, %v4103
          %v4224 = vpack.c.bf16 %v4107, %v4104
          %v4225 = vpack.c.bf16 %v4111, %v4108
          %v4226 = vpack.c.bf16 %v4112, %v4109
          %v4227 = vpack.c.bf16 %v4113, %v4110
          %v4228 = vpack.c.bf16 %v4117, %v4114
          %v4229 = vpack.c.bf16 %v4118, %v4115
          %v4230 = vpack.c.bf16 %v4119, %v4116
          %v4231 = vpack.c.bf16 %v4123, %v4120
          %v4232 = vpack.c.bf16 %v4124, %v4121
          %v4233 = vpack.c.bf16 %v4125, %v4122
          %v4234 = vpack.c.bf16 %v4129, %v4126
          %v4235 = vpack.c.bf16 %v4130, %v4127
          %v4236 = vpack.c.bf16 %v4131, %v4128
          %v4237 = vpack.c.bf16 %v4135, %v4132
          %v4238 = vpack.c.bf16 %v4136, %v4133
          %v4239 = vpack.c.bf16 %v4137, %v4134
          %v4240 = vpack.c.bf16 %v4141, %v4138
          %v4241 = vpack.c.bf16 %v4142, %v4139
          %v4242 = vpack.c.bf16 %v4143, %v4140
          %v4243 = vpack.c.bf16 %v4147, %v4144
          %v4244 = vpack.c.bf16 %v4148, %v4145
          %v4245 = vpack.c.bf16 %v4149, %v4146
          %v4342 = vunpack.c.l.b16 %v4150
          %v4343 = vunpack.c.l.b16 %v4151
          %v4344 = vunpack.c.l.b16 %v4152
          %v4345 = vunpack.c.h.b16 %v4150
          %v4346 = vunpack.c.h.b16 %v4151
          %v4347 = vunpack.c.h.b16 %v4152
          %v4348 = vunpack.c.l.b16 %v4153
          %v4349 = vunpack.c.l.b16 %v4154
          %v4350 = vunpack.c.l.b16 %v4155
          %v4351 = vunpack.c.h.b16 %v4153
          %v4352 = vunpack.c.h.b16 %v4154
          %v4353 = vunpack.c.h.b16 %v4155
          %v4354 = vunpack.c.l.b16 %v4156
          %v4355 = vunpack.c.l.b16 %v4157
          %v4356 = vunpack.c.l.b16 %v4158
          %v4357 = vunpack.c.h.b16 %v4156
          %v4358 = vunpack.c.h.b16 %v4157
          %v4359 = vunpack.c.h.b16 %v4158
          %v4360 = vunpack.c.l.b16 %v4159
          %v4361 = vunpack.c.l.b16 %v4160
          %v4362 = vunpack.c.l.b16 %v4161
          %v4363 = vunpack.c.h.b16 %v4159
          %v4364 = vunpack.c.h.b16 %v4160
          %v4365 = vunpack.c.h.b16 %v4161
          %v4366 = vunpack.c.l.b16 %v4162
          %v4367 = vunpack.c.l.b16 %v4163
          %v4368 = vunpack.c.l.b16 %v4164
          %v4369 = vunpack.c.h.b16 %v4162
          %v4370 = vunpack.c.h.b16 %v4163
          %v4371 = vunpack.c.h.b16 %v4164
          %v4372 = vunpack.c.l.b16 %v4165
          %v4373 = vunpack.c.l.b16 %v4166
          %v4374 = vunpack.c.l.b16 %v4167
          %v4375 = vunpack.c.h.b16 %v4165
          %v4376 = vunpack.c.h.b16 %v4166
          %v4377 = vunpack.c.h.b16 %v4167
          %v4378 = vunpack.c.l.b16 %v4168
          %v4379 = vunpack.c.l.b16 %v4169
          %v4380 = vunpack.c.l.b16 %v4170
          %v4381 = vunpack.c.h.b16 %v4168
          %v4382 = vunpack.c.h.b16 %v4169
          %v4383 = vunpack.c.h.b16 %v4170
          %v4384 = vunpack.c.l.b16 %v4171
          %v4385 = vunpack.c.l.b16 %v4172
          %v4386 = vunpack.c.l.b16 %v4173
          %v4387 = vunpack.c.h.b16 %v4171
          %v4388 = vunpack.c.h.b16 %v4172
          %v4389 = vunpack.c.h.b16 %v4173
          %v4390 = vunpack.c.l.b16 %v4174
          %v4391 = vunpack.c.l.b16 %v4175
          %v4392 = vunpack.c.l.b16 %v4176
          %v4393 = vunpack.c.h.b16 %v4174
          %v4394 = vunpack.c.h.b16 %v4175
          %v4395 = vunpack.c.h.b16 %v4176
          %v4396 = vunpack.c.l.b16 %v4177
          %v4397 = vunpack.c.l.b16 %v4178
          %v4398 = vunpack.c.l.b16 %v4179
          %v4399 = vunpack.c.h.b16 %v4177
          %v4400 = vunpack.c.h.b16 %v4178
          %v4401 = vunpack.c.h.b16 %v4179
          %v4402 = vunpack.c.l.b16 %v4180
          %v4403 = vunpack.c.l.b16 %v4181
          %v4404 = vunpack.c.l.b16 %v4182
          %v4405 = vunpack.c.h.b16 %v4180
          %v4406 = vunpack.c.h.b16 %v4181
          %v4407 = vunpack.c.h.b16 %v4182
          %v4408 = vunpack.c.l.b16 %v4183
          %v4409 = vunpack.c.l.b16 %v4184
          %v4410 = vunpack.c.l.b16 %v4185
          %v4411 = vunpack.c.h.b16 %v4183
          %v4412 = vunpack.c.h.b16 %v4184
          %v4413 = vunpack.c.h.b16 %v4185
          %v4414 = vunpack.c.l.b16 %v4186
          %v4415 = vunpack.c.l.b16 %v4187
          %v4416 = vunpack.c.l.b16 %v4188
          %v4417 = vunpack.c.h.b16 %v4186
          %v4418 = vunpack.c.h.b16 %v4187
          %v4419 = vunpack.c.h.b16 %v4188
          %v4420 = vunpack.c.l.b16 %v4189
          %v4421 = vunpack.c.l.b16 %v4190
          %v4422 = vunpack.c.l.b16 %v4191
          %v4423 = vunpack.c.h.b16 %v4189
          %v4424 = vunpack.c.h.b16 %v4190
          %v4425 = vunpack.c.h.b16 %v4191
          %v4426 = vunpack.c.l.b16 %v4192
          %v4427 = vunpack.c.l.b16 %v4193
          %v4428 = vunpack.c.l.b16 %v4194
          %v4429 = vunpack.c.h.b16 %v4192
          %v4430 = vunpack.c.h.b16 %v4193
          %v4431 = vunpack.c.h.b16 %v4194
          %v4432 = vunpack.c.l.b16 %v4195
          %v4433 = vunpack.c.l.b16 %v4196
          %v4434 = vunpack.c.l.b16 %v4197
          %v4435 = vunpack.c.h.b16 %v4195
          %v4436 = vunpack.c.h.b16 %v4196
          %v4437 = vunpack.c.h.b16 %v4197
          %v4438 = vunpack.c.l.b16 %v4198
          %v4439 = vunpack.c.l.b16 %v4199
          %v4440 = vunpack.c.l.b16 %v4200
          %v4441 = vunpack.c.h.b16 %v4198
          %v4442 = vunpack.c.h.b16 %v4199
          %v4443 = vunpack.c.h.b16 %v4200
          %v4444 = vunpack.c.l.b16 %v4201
          %v4445 = vunpack.c.l.b16 %v4202
          %v4446 = vunpack.c.l.b16 %v4203
          %v4447 = vunpack.c.h.b16 %v4201
          %v4448 = vunpack.c.h.b16 %v4202
          %v4449 = vunpack.c.h.b16 %v4203
          %v4450 = vunpack.c.l.b16 %v4204
          %v4451 = vunpack.c.l.b16 %v4205
          %v4452 = vunpack.c.l.b16 %v4206
          %v4453 = vunpack.c.h.b16 %v4204
          %v4454 = vunpack.c.h.b16 %v4205
          %v4455 = vunpack.c.h.b16 %v4206
          %v4456 = vunpack.c.l.b16 %v4207
          %v4457 = vunpack.c.l.b16 %v4208
          %v4458 = vunpack.c.l.b16 %v4209
          %v4459 = vunpack.c.h.b16 %v4207
          %v4460 = vunpack.c.h.b16 %v4208
          %v4461 = vunpack.c.h.b16 %v4209
          %v4462 = vunpack.c.l.b16 %v4210
          %v4463 = vunpack.c.l.b16 %v4211
          %v4464 = vunpack.c.l.b16 %v4212
          %v4465 = vunpack.c.h.b16 %v4210
          %v4466 = vunpack.c.h.b16 %v4211
          %v4467 = vunpack.c.h.b16 %v4212
          %v4468 = vunpack.c.l.b16 %v4213
          %v4469 = vunpack.c.l.b16 %v4214
          %v4470 = vunpack.c.l.b16 %v4215
          %v4471 = vunpack.c.h.b16 %v4213
          %v4472 = vunpack.c.h.b16 %v4214
          %v4473 = vunpack.c.h.b16 %v4215
          %v4474 = vunpack.c.l.b16 %v4216
          %v4475 = vunpack.c.l.b16 %v4217
          %v4476 = vunpack.c.l.b16 %v4218
          %v4477 = vunpack.c.h.b16 %v4216
          %v4478 = vunpack.c.h.b16 %v4217
          %v4479 = vunpack.c.h.b16 %v4218
          %v4480 = vunpack.c.l.b16 %v4219
          %v4481 = vunpack.c.l.b16 %v4220
          %v4482 = vunpack.c.l.b16 %v4221
          %v4483 = vunpack.c.h.b16 %v4219
          %v4484 = vunpack.c.h.b16 %v4220
          %v4485 = vunpack.c.h.b16 %v4221
          %v4486 = vunpack.c.l.b16 %v4222
          %v4487 = vunpack.c.l.b16 %v4223
          %v4488 = vunpack.c.l.b16 %v4224
          %v4489 = vunpack.c.h.b16 %v4222
          %v4490 = vunpack.c.h.b16 %v4223
          %v4491 = vunpack.c.h.b16 %v4224
          %v4492 = vunpack.c.l.b16 %v4225
          %v4493 = vunpack.c.l.b16 %v4226
          %v4494 = vunpack.c.l.b16 %v4227
          %v4495 = vunpack.c.h.b16 %v4225
          %v4496 = vunpack.c.h.b16 %v4226
          %v4497 = vunpack.c.h.b16 %v4227
          %v4498 = vunpack.c.l.b16 %v4228
          %v4499 = vunpack.c.l.b16 %v4229
          %v4500 = vunpack.c.l.b16 %v4230
          %v4501 = vunpack.c.h.b16 %v4228
          %v4502 = vunpack.c.h.b16 %v4229
          %v4503 = vunpack.c.h.b16 %v4230
          %v4504 = vunpack.c.l.b16 %v4231
          %v4505 = vunpack.c.l.b16 %v4232
          %v4506 = vunpack.c.l.b16 %v4233
          %v4507 = vunpack.c.h.b16 %v4231
          %v4508 = vunpack.c.h.b16 %v4232
          %v4509 = vunpack.c.h.b16 %v4233
          %v4510 = vunpack.c.l.b16 %v4234
          %v4511 = vunpack.c.l.b16 %v4235
          %v4512 = vunpack.c.l.b16 %v4236
          %v4513 = vunpack.c.h.b16 %v4234
          %v4514 = vunpack.c.h.b16 %v4235
          %v4515 = vunpack.c.h.b16 %v4236
          %v4516 = vunpack.c.l.b16 %v4237
          %v4517 = vunpack.c.l.b16 %v4238
          %v4518 = vunpack.c.l.b16 %v4239
          %v4519 = vunpack.c.h.b16 %v4237
          %v4520 = vunpack.c.h.b16 %v4238
          %v4521 = vunpack.c.h.b16 %v4239
          %v4522 = vunpack.c.l.b16 %v4240
          %v4523 = vunpack.c.l.b16 %v4241
          %v4524 = vunpack.c.l.b16 %v4242
          %v4525 = vunpack.c.h.b16 %v4240
          %v4526 = vunpack.c.h.b16 %v4241
          %v4527 = vunpack.c.h.b16 %v4242
          %v4528 = vunpack.c.l.b16 %v4243
          %v4529 = vunpack.c.l.b16 %v4244
          %v4530 = vunpack.c.l.b16 %v4245
          %v4531 = vunpack.c.h.b16 %v4243
          %v4532 = vunpack.c.h.b16 %v4244
          %v4533 = vunpack.c.h.b16 %v4245
          %v4534 = vpack.c.b16 %v4343, %v4342
          %v4535 = vpack.c.b16 %v4344, %v4344
          %v4536 = vpack.c.b16 %v4346, %v4345
          %v4537 = vpack.c.b16 %v4347, %v4347
          %v4538 = vpack.c.b16 %v4349, %v4348
          %v4539 = vpack.c.b16 %v4350, %v4350
          %v4540 = vpack.c.b16 %v4352, %v4351
          %v4541 = vpack.c.b16 %v4353, %v4353
          %v4542 = vpack.c.b16 %v4355, %v4354
          %v4543 = vpack.c.b16 %v4356, %v4356
          %v4544 = vpack.c.b16 %v4358, %v4357
          %v4545 = vpack.c.b16 %v4359, %v4359
          %v4546 = vpack.c.b16 %v4361, %v4360
          %v4547 = vpack.c.b16 %v4362, %v4362
          %v4548 = vpack.c.b16 %v4364, %v4363
          %v4549 = vpack.c.b16 %v4365, %v4365
          %v4550 = vpack.c.b16 %v4367, %v4366
          %v4551 = vpack.c.b16 %v4368, %v4368
          %v4552 = vpack.c.b16 %v4370, %v4369
          %v4553 = vpack.c.b16 %v4371, %v4371
          %v4554 = vpack.c.b16 %v4373, %v4372
          %v4555 = vpack.c.b16 %v4374, %v4374
          %v4556 = vpack.c.b16 %v4376, %v4375
          %v4557 = vpack.c.b16 %v4377, %v4377
          %v4558 = vpack.c.b16 %v4379, %v4378
          %v4559 = vpack.c.b16 %v4380, %v4380
          %v4560 = vpack.c.b16 %v4382, %v4381
          %v4561 = vpack.c.b16 %v4383, %v4383
          %v4562 = vpack.c.b16 %v4385, %v4384
          %v4563 = vpack.c.b16 %v4386, %v4386
          %v4564 = vpack.c.b16 %v4388, %v4387
          %v4565 = vpack.c.b16 %v4389, %v4389
          %v4566 = vpack.c.b16 %v4391, %v4390
          %v4567 = vpack.c.b16 %v4392, %v4392
          %v4568 = vpack.c.b16 %v4394, %v4393
          %v4569 = vpack.c.b16 %v4395, %v4395
          %v4570 = vpack.c.b16 %v4397, %v4396
          %v4571 = vpack.c.b16 %v4398, %v4398
          %v4572 = vpack.c.b16 %v4400, %v4399
          %v4573 = vpack.c.b16 %v4401, %v4401
          %v4574 = vpack.c.b16 %v4403, %v4402
          %v4575 = vpack.c.b16 %v4404, %v4404
          %v4576 = vpack.c.b16 %v4406, %v4405
          %v4577 = vpack.c.b16 %v4407, %v4407
          %v4578 = vpack.c.b16 %v4409, %v4408
          %v4579 = vpack.c.b16 %v4410, %v4410
          %v4580 = vpack.c.b16 %v4412, %v4411
          %v4581 = vpack.c.b16 %v4413, %v4413
          %v4582 = vpack.c.b16 %v4415, %v4414
          %v4583 = vpack.c.b16 %v4416, %v4416
          %v4584 = vpack.c.b16 %v4418, %v4417
          %v4585 = vpack.c.b16 %v4419, %v4419
          %v4586 = vpack.c.b16 %v4421, %v4420
          %v4587 = vpack.c.b16 %v4422, %v4422
          %v4588 = vpack.c.b16 %v4424, %v4423
          %v4589 = vpack.c.b16 %v4425, %v4425
          %v4590 = vpack.c.b16 %v4427, %v4426
          %v4591 = vpack.c.b16 %v4428, %v4428
          %v4592 = vpack.c.b16 %v4430, %v4429
          %v4593 = vpack.c.b16 %v4431, %v4431
          %v4594 = vpack.c.b16 %v4433, %v4432
          %v4595 = vpack.c.b16 %v4434, %v4434
          %v4596 = vpack.c.b16 %v4436, %v4435
          %v4597 = vpack.c.b16 %v4437, %v4437
          %v4598 = vpack.c.b16 %v4439, %v4438
          %v4599 = vpack.c.b16 %v4440, %v4440
          %v4600 = vpack.c.b16 %v4442, %v4441
          %v4601 = vpack.c.b16 %v4443, %v4443
          %v4602 = vpack.c.b16 %v4445, %v4444
          %v4603 = vpack.c.b16 %v4446, %v4446
          %v4604 = vpack.c.b16 %v4448, %v4447
          %v4605 = vpack.c.b16 %v4449, %v4449
          %v4606 = vpack.c.b16 %v4451, %v4450
          %v4607 = vpack.c.b16 %v4452, %v4452
          %v4608 = vpack.c.b16 %v4454, %v4453
          %v4609 = vpack.c.b16 %v4455, %v4455
          %v4610 = vpack.c.b16 %v4457, %v4456
          %v4611 = vpack.c.b16 %v4458, %v4458
          %v4612 = vpack.c.b16 %v4460, %v4459
          %v4613 = vpack.c.b16 %v4461, %v4461
          %v4614 = vpack.c.b16 %v4463, %v4462
          %v4615 = vpack.c.b16 %v4464, %v4464
          %v4616 = vpack.c.b16 %v4466, %v4465
          %v4617 = vpack.c.b16 %v4467, %v4467
          %v4618 = vpack.c.b16 %v4469, %v4468
          %v4619 = vpack.c.b16 %v4470, %v4470
          %v4620 = vpack.c.b16 %v4472, %v4471
          %v4621 = vpack.c.b16 %v4473, %v4473
          %v4622 = vpack.c.b16 %v4475, %v4474
          %v4623 = vpack.c.b16 %v4476, %v4476
          %v4624 = vpack.c.b16 %v4478, %v4477
          %v4625 = vpack.c.b16 %v4479, %v4479
          %v4626 = vpack.c.b16 %v4481, %v4480
          %v4627 = vpack.c.b16 %v4482, %v4482
          %v4628 = vpack.c.b16 %v4484, %v4483
          %v4629 = vpack.c.b16 %v4485, %v4485
          %v4630 = vpack.c.b16 %v4487, %v4486
          %v4631 = vpack.c.b16 %v4488, %v4488
          %v4632 = vpack.c.b16 %v4490, %v4489
          %v4633 = vpack.c.b16 %v4491, %v4491
          %v4634 = vpack.c.b16 %v4493, %v4492
          %v4635 = vpack.c.b16 %v4494, %v4494
          %v4636 = vpack.c.b16 %v4496, %v4495
          %v4637 = vpack.c.b16 %v4497, %v4497
          %v4638 = vpack.c.b16 %v4499, %v4498
          %v4639 = vpack.c.b16 %v4500, %v4500
          %v4640 = vpack.c.b16 %v4502, %v4501
          %v4641 = vpack.c.b16 %v4503, %v4503
          %v4642 = vpack.c.b16 %v4505, %v4504
          %v4643 = vpack.c.b16 %v4506, %v4506
          %v4644 = vpack.c.b16 %v4508, %v4507
          %v4645 = vpack.c.b16 %v4509, %v4509
          %v4646 = vpack.c.b16 %v4511, %v4510
          %v4647 = vpack.c.b16 %v4512, %v4512
          %v4648 = vpack.c.b16 %v4514, %v4513
          %v4649 = vpack.c.b16 %v4515, %v4515
          %v4650 = vpack.c.b16 %v4517, %v4516
          %v4651 = vpack.c.b16 %v4518, %v4518
          %v4652 = vpack.c.b16 %v4520, %v4519
          %v4653 = vpack.c.b16 %v4521, %v4521
          %v4654 = vpack.c.b16 %v4523, %v4522
          %v4655 = vpack.c.b16 %v4524, %v4524
          %v4656 = vpack.c.b16 %v4526, %v4525
          %v4657 = vpack.c.b16 %v4527, %v4527
          %v4658 = vpack.c.b16 %v4529, %v4528
          %v4659 = vpack.c.b16 %v4530, %v4530
          %v4660 = vpack.c.b16 %v4532, %v4531
          %v4661 = vpack.c.b16 %v4533, %v4533
          %4790 = vst [vmem:[%s256] sm:$0xff] %v4534
          %4791 = vst [vmem:[%s256 + $0x8] sm:$0xf] %v4535
          %4792 = vst [vmem:[%s256 + $0xc] sm:$0xff] %v4536
          %4793 = vst [vmem:[%s256 + $0x14] sm:$0xf] %v4537
          %4794 = vst [vmem:[%s256 + $0x18] sm:$0xff] %v4538
          %4795 = vst [vmem:[%s256 + $0x20] sm:$0xf] %v4539
          %4796 = vst [vmem:[%s256 + $0x24] sm:$0xff] %v4540
          %4797 = vst [vmem:[%s256 + $0x2c] sm:$0xf] %v4541
          %4798 = vst [vmem:[%s256 + $0x30] sm:$0xff] %v4542
          %4799 = vst [vmem:[%s256 + $0x38] sm:$0xf] %v4543
          %4800 = vst [vmem:[%s256 + $0x3c] sm:$0xff] %v4544
          %4801 = vst [vmem:[%s256 + $0x44] sm:$0xf] %v4545
          %4802 = vst [vmem:[%s256 + $0x48] sm:$0xff] %v4546
          %4803 = vst [vmem:[%s256 + $0x50] sm:$0xf] %v4547
          %4804 = vst [vmem:[%s256 + $0x54] sm:$0xff] %v4548
          %4805 = vst [vmem:[%s256 + $0x5c] sm:$0xf] %v4549
          %4806 = vst [vmem:[%s256 + $0x60] sm:$0xff] %v4550
          %4807 = vst [vmem:[%s256 + $0x68] sm:$0xf] %v4551
          %4808 = vst [vmem:[%s256 + $0x6c] sm:$0xff] %v4552
          %4809 = vst [vmem:[%s256 + $0x74] sm:$0xf] %v4553
          %4810 = vst [vmem:[%s256 + $0x78] sm:$0xff] %v4554
          %4811 = vst [vmem:[%s256 + $0x80] sm:$0xf] %v4555
          %4812 = vst [vmem:[%s256 + $0x84] sm:$0xff] %v4556
          %4813 = vst [vmem:[%s256 + $0x8c] sm:$0xf] %v4557
          %4814 = vst [vmem:[%s256 + $0x90] sm:$0xff] %v4558
          %4815 = vst [vmem:[%s256 + $0x98] sm:$0xf] %v4559
          %4816 = vst [vmem:[%s256 + $0x9c] sm:$0xff] %v4560
          %4817 = vst [vmem:[%s256 + $0xa4] sm:$0xf] %v4561
          %4818 = vst [vmem:[%s256 + $0xa8] sm:$0xff] %v4562
          %4819 = vst [vmem:[%s256 + $0xb0] sm:$0xf] %v4563
          %4820 = vst [vmem:[%s256 + $0xb4] sm:$0xff] %v4564
          %4821 = vst [vmem:[%s256 + $0xbc] sm:$0xf] %v4565
          %4822 = vst [vmem:[%s256 + $0xc0] sm:$0xff] %v4566
          %4823 = vst [vmem:[%s256 + $0xc8] sm:$0xf] %v4567
          %4824 = vst [vmem:[%s256 + $0xcc] sm:$0xff] %v4568
          %4825 = vst [vmem:[%s256 + $0xd4] sm:$0xf] %v4569
          %4826 = vst [vmem:[%s256 + $0xd8] sm:$0xff] %v4570
          %4827 = vst [vmem:[%s256 + $0xe0] sm:$0xf] %v4571
          %4828 = vst [vmem:[%s256 + $0xe4] sm:$0xff] %v4572
          %4829 = vst [vmem:[%s256 + $0xec] sm:$0xf] %v4573
          %4830 = vst [vmem:[%s256 + $0xf0] sm:$0xff] %v4574
          %4831 = vst [vmem:[%s256 + $0xf8] sm:$0xf] %v4575
          %4832 = vst [vmem:[%s256 + $0xfc] sm:$0xff] %v4576
          %4833 = vst [vmem:[%s256 + $0x104] sm:$0xf] %v4577
          %4834 = vst [vmem:[%s256 + $0x108] sm:$0xff] %v4578
          %4835 = vst [vmem:[%s256 + $0x110] sm:$0xf] %v4579
          %4836 = vst [vmem:[%s256 + $0x114] sm:$0xff] %v4580
          %4837 = vst [vmem:[%s256 + $0x11c] sm:$0xf] %v4581
          %4838 = vst [vmem:[%s256 + $0x120] sm:$0xff] %v4582
          %4839 = vst [vmem:[%s256 + $0x128] sm:$0xf] %v4583
          %4840 = vst [vmem:[%s256 + $0x12c] sm:$0xff] %v4584
          %4841 = vst [vmem:[%s256 + $0x134] sm:$0xf] %v4585
          %4842 = vst [vmem:[%s256 + $0x138] sm:$0xff] %v4586
          %4843 = vst [vmem:[%s256 + $0x140] sm:$0xf] %v4587
          %4844 = vst [vmem:[%s256 + $0x144] sm:$0xff] %v4588
          %4845 = vst [vmem:[%s256 + $0x14c] sm:$0xf] %v4589
          %4846 = vst [vmem:[%s256 + $0x150] sm:$0xff] %v4590
          %4847 = vst [vmem:[%s256 + $0x158] sm:$0xf] %v4591
          %4848 = vst [vmem:[%s256 + $0x15c] sm:$0xff] %v4592
          %4849 = vst [vmem:[%s256 + $0x164] sm:$0xf] %v4593
          %4850 = vst [vmem:[%s256 + $0x168] sm:$0xff] %v4594
          %4851 = vst [vmem:[%s256 + $0x170] sm:$0xf] %v4595
          %4852 = vst [vmem:[%s256 + $0x174] sm:$0xff] %v4596
          %4853 = vst [vmem:[%s256 + $0x17c] sm:$0xf] %v4597
          %4854 = vst [vmem:[%s256 + $0x180] sm:$0xff] %v4598
          %4855 = vst [vmem:[%s256 + $0x188] sm:$0xf] %v4599
          %4856 = vst [vmem:[%s256 + $0x18c] sm:$0xff] %v4600
          %4857 = vst [vmem:[%s256 + $0x194] sm:$0xf] %v4601
          %4858 = vst [vmem:[%s256 + $0x198] sm:$0xff] %v4602
          %4859 = vst [vmem:[%s256 + $0x1a0] sm:$0xf] %v4603
          %4860 = vst [vmem:[%s256 + $0x1a4] sm:$0xff] %v4604
          %4861 = vst [vmem:[%s256 + $0x1ac] sm:$0xf] %v4605
          %4862 = vst [vmem:[%s256 + $0x1b0] sm:$0xff] %v4606
          %4863 = vst [vmem:[%s256 + $0x1b8] sm:$0xf] %v4607
          %4864 = vst [vmem:[%s256 + $0x1bc] sm:$0xff] %v4608
          %4865 = vst [vmem:[%s256 + $0x1c4] sm:$0xf] %v4609
          %4866 = vst [vmem:[%s256 + $0x1c8] sm:$0xff] %v4610
          %4867 = vst [vmem:[%s256 + $0x1d0] sm:$0xf] %v4611
          %4868 = vst [vmem:[%s256 + $0x1d4] sm:$0xff] %v4612
          %4869 = vst [vmem:[%s256 + $0x1dc] sm:$0xf] %v4613
          %4870 = vst [vmem:[%s256 + $0x1e0] sm:$0xff] %v4614
          %4871 = vst [vmem:[%s256 + $0x1e8] sm:$0xf] %v4615
          %4872 = vst [vmem:[%s256 + $0x1ec] sm:$0xff] %v4616
          %4873 = vst [vmem:[%s256 + $0x1f4] sm:$0xf] %v4617
          %4874 = vst [vmem:[%s256 + $0x1f8] sm:$0xff] %v4618
          %4875 = vst [vmem:[%s256 + $0x200] sm:$0xf] %v4619
          %4876 = vst [vmem:[%s256 + $0x204] sm:$0xff] %v4620
          %4877 = vst [vmem:[%s256 + $0x20c] sm:$0xf] %v4621
          %4878 = vst [vmem:[%s256 + $0x210] sm:$0xff] %v4622
          %4879 = vst [vmem:[%s256 + $0x218] sm:$0xf] %v4623
          %4880 = vst [vmem:[%s256 + $0x21c] sm:$0xff] %v4624
          %4881 = vst [vmem:[%s256 + $0x224] sm:$0xf] %v4625
          %4882 = vst [vmem:[%s256 + $0x228] sm:$0xff] %v4626
          %4883 = vst [vmem:[%s256 + $0x230] sm:$0xf] %v4627
          %4884 = vst [vmem:[%s256 + $0x234] sm:$0xff] %v4628
          %4885 = vst [vmem:[%s256 + $0x23c] sm:$0xf] %v4629
          %4886 = vst [vmem:[%s256 + $0x240] sm:$0xff] %v4630
          %4887 = vst [vmem:[%s256 + $0x248] sm:$0xf] %v4631
          %4888 = vst [vmem:[%s256 + $0x24c] sm:$0xff] %v4632
          %4889 = vst [vmem:[%s256 + $0x254] sm:$0xf] %v4633
          %4890 = vst [vmem:[%s256 + $0x258] sm:$0xff] %v4634
          %4891 = vst [vmem:[%s256 + $0x260] sm:$0xf] %v4635
          %4892 = vst [vmem:[%s256 + $0x264] sm:$0xff] %v4636
          %4893 = vst [vmem:[%s256 + $0x26c] sm:$0xf] %v4637
          %4894 = vst [vmem:[%s256 + $0x270] sm:$0xff] %v4638
          %4895 = vst [vmem:[%s256 + $0x278] sm:$0xf] %v4639
          %4896 = vst [vmem:[%s256 + $0x27c] sm:$0xff] %v4640
          %4897 = vst [vmem:[%s256 + $0x284] sm:$0xf] %v4641
          %4898 = vst [vmem:[%s256 + $0x288] sm:$0xff] %v4642
          %4899 = vst [vmem:[%s256 + $0x290] sm:$0xf] %v4643
          %4900 = vst [vmem:[%s256 + $0x294] sm:$0xff] %v4644
          %4901 = vst [vmem:[%s256 + $0x29c] sm:$0xf] %v4645
          %4902 = vst [vmem:[%s256 + $0x2a0] sm:$0xff] %v4646
          %4903 = vst [vmem:[%s256 + $0x2a8] sm:$0xf] %v4647
          %4904 = vst [vmem:[%s256 + $0x2ac] sm:$0xff] %v4648
          %4905 = vst [vmem:[%s256 + $0x2b4] sm:$0xf] %v4649
          %4906 = vst [vmem:[%s256 + $0x2b8] sm:$0xff] %v4650
          %4907 = vst [vmem:[%s256 + $0x2c0] sm:$0xf] %v4651
          %4908 = vst [vmem:[%s256 + $0x2c4] sm:$0xff] %v4652
          %4909 = vst [vmem:[%s256 + $0x2cc] sm:$0xf] %v4653
          %4910 = vst [vmem:[%s256 + $0x2d0] sm:$0xff] %v4654
          %4911 = vst [vmem:[%s256 + $0x2d8] sm:$0xf] %v4655
          %4912 = vst [vmem:[%s256 + $0x2dc] sm:$0xff] %v4656
          %4913 = vst [vmem:[%s256 + $0x2e4] sm:$0xf] %v4657
          %4914 = vst [vmem:[%s256 + $0x2e8] sm:$0xff] %v4658
          %4915 = vst [vmem:[%s256 + $0x2f0] sm:$0xf] %v4659
          %4916 = vst [vmem:[%s256 + $0x2f4] sm:$0xff] %v4660
          %4917 = vst [vmem:[%s256 + $0x2fc] sm:$0xf] %v4661
        $region48: #{tpu_custom_call.1} parent=31 // pred_fallthru
          _
        %s4918 = sand.u32 %s132, 1
        %s4919 = scalar_lea.sflag [#allocation5], %s4918
        %s4920 = sand.u32 %s132, 1
        %s4921 = smul.addr %s4920, 768
        %s4922 = scalar_lea.vmem [#allocation8], %s4921
        // Predicated region
        $region49: #{tpu_custom_call.1} parent=31 // pred_check
          %p4923 = pneg %p142
        $region50: #{tpu_custom_call.1} parent=31 // pred_check_branch
          %4925 = sbr.rel (%p4923) target = $region52
        $region51: #{tpu_custom_call.1} parent=31 // pred_region
          %s4926 = smul.u32 64, %s26
          %s4927 = smul.u32 3, %s27
          %s4929 = ssub.s32 12288, 12288
          %4930 = vsyncadd %s4919, %s4929
          %s4931 = smul.addr %s4926, 6
          %s4932 = sadd.s32 %s4927, %s4931
          %s4933 = smul.addr %s4932, 64
          %s4934 = scalar_lea.hbm %s3, %s4933
          %s4935 = sshll.u32 %s4922, 4
          %s4936 = int_to_ptr.vmem [resolvable:$true] %s4935
          %4941 = dma.vmem_to_hbm [thread:$0]  %s4936, 12288, %s4934, %s4919, 192, 384, 12
        $region52: #{tpu_custom_call.1} parent=31 // pred_fallthru
          _
      $region32: #{tpu_custom_call.1} parent=5 // pred_fallthru
        _
      %p4942 = scmp.le.s32.totalorder 2, %s16
      // Predicated region
      $region53: #{tpu_custom_call.1} parent=5 // pred_check
        %p4943 = pneg %p4942
      $region54: #{tpu_custom_call.1} parent=5 // pred_check_branch
        %4945 = sbr.rel (%p4943) target = $region56
      $region55: #{tpu_custom_call.1} parent=5 // pred_region
        %s4946 = ssub.s32 %s16, 2
        // Predicated region
        $region57: #{tpu_custom_call.1} parent=55 // pred_check
          %p4947 = pneg %p148
        $region58: #{tpu_custom_call.1} parent=55 // pred_check_branch
          %4949 = sbr.rel (%p4947) target = $region60
        $region59: #{tpu_custom_call.1} parent=55 // pred_region
          %s4950 = sand.u32 %s133, 1
          %s4951 = scalar_lea.sflag [#allocation5], %s4950
          %s4952 = sand.u32 %s133, 1
          %s4953 = smul.addr %s4952, 768
          %s4954 = scalar_lea.vmem [#allocation8], %s4953
          %4955 = dma.done %s4951, 12288
        $region60: #{tpu_custom_call.1} parent=55 // pred_fallthru
          _
      $region56: #{tpu_custom_call.1} parent=5 // pred_fallthru
        _
    $region6: #{tpu_custom_call.1} parent=1 // loop_footer
      %s20 = sadd.s32 1, %s16
    $region7: #{tpu_custom_call.1} parent=1 // loop_footer_branch
      %15 = sbr.rel target = $region3
    $region8: #{tpu_custom_call.1} parent=1 // loop_exit
      _
    %4956 = vsyncpa [#allocation4], 1
    %s4957 = scalar_lea.sflag [#allocation4], 1
    %4958 = vsyncpa %s4957, 1
    %4959 = vsyncpa [#allocation7], 1
    %s4960 = scalar_lea.sflag [#allocation7], 1
    %4961 = vsyncpa %s4960, 1
    %4962 = vsyncpa [#allocation5], 1
    %s4963 = scalar_lea.sflag [#allocation5], 1
    %4964 = vsyncpa %s4963, 1

</llo_original>
